<compile_context>
chip_gen: v5e
topology: v5e:2x2
jax: 0.10.0
libtpu: 0.0.40
codegen_flags: <defaults>
</compile_context>

<pallas_src>
import functools
import math

import jax
import jax.numpy as jnp
from jax.experimental import pallas as pl
from jax.experimental.pallas import tpu as pltpu


# ----------------------------------------------------------------------------
# hardware-aware sizing helpers
# ----------------------------------------------------------------------------
@functools.lru_cache(maxsize=None)
def _vmem_limit_bytes():
    """Scoped-VMEM budget per pallas_call: ~3/4 of physical VMEM, capped."""
    cap = 64 * 1024 * 1024                      # conservative fallback (v7x-sized)
    try:
        info = pltpu.get_tpu_info()
        c = getattr(info, "vmem_capacity_bytes", None)
        if c:
            cap = int(c)
    except Exception:
        pass
    return int(min(cap * 3 // 4, 96 * 1024 * 1024))


def _pick_tile(dim, target, align):
    """Largest block <= target that evenly tiles `dim` with TPU alignment.

    Falls back to the full extent (always a legal block) for small or
    awkward dims; callers assert the resulting VMEM footprint.
    """
    if dim <= target:
        return dim
    t = (target // align) * align
    while t >= align:
        if dim % t == 0:
            return t
        t -= align
    return dim


def _gelu(x):
    # tanh-based approximation: one EUP tanh instead of an erf polynomial.
    c = math.sqrt(2.0 / math.pi)
    return 0.5 * x * (1.0 + jnp.tanh(c * (x + 0.044715 * x * x * x)))


def _apply_act(y, act):
    if act == "tanh":
        return jnp.tanh(y)
    if act == "gelu":
        return _gelu(y)
    return y


# ----------------------------------------------------------------------------
# tiled linear:  y = act(x @ w + b)   (bf16 in/out, f32 accumulate)
# ----------------------------------------------------------------------------
def _linear_bias_kernel(x_ref, w_ref, b_ref, o_ref, acc_ref, *, act):
    @pl.when(pl.program_id(2) == 0)
    def _():
        acc_ref[...] = jnp.zeros_like(acc_ref)

    acc_ref[...] += jnp.dot(
        x_ref[...].astype(jnp.bfloat16),
        w_ref[...].astype(jnp.bfloat16),
        preferred_element_type=jnp.float32,
    )

    @pl.when(pl.program_id(2) == pl.num_programs(2) - 1)
    def _():
        o_ref[...] = _apply_act(acc_ref[...] + b_ref[...], act).astype(o_ref.dtype)


def _linear_nobias_kernel(x_ref, w_ref, o_ref, acc_ref, *, act):
    @pl.when(pl.program_id(2) == 0)
    def _():
        acc_ref[...] = jnp.zeros_like(acc_ref)

    acc_ref[...] += jnp.dot(
        x_ref[...].astype(jnp.bfloat16),
        w_ref[...].astype(jnp.bfloat16),
        preferred_element_type=jnp.float32,
    )

    @pl.when(pl.program_id(2) == pl.num_programs(2) - 1)
    def _():
        o_ref[...] = _apply_act(acc_ref[...], act).astype(o_ref.dtype)


def linear(x, w, b=None, act=None, *, out_dtype=jnp.bfloat16,
           tm=512, tn=512, tk=1024):
    """y = act(x @ w + b); x:(M,K), w:(K,N), b:(N,) or None."""
    M, K = x.shape
    Kw, N = w.shape
    assert K == Kw
    tm = _pick_tile(M, tm, 8)
    tn = _pick_tile(N, tn, 128)
    tk = _pick_tile(K, tk, 128)

    vmem_limit = _vmem_limit_bytes()
    xb = jnp.dtype(x.dtype).itemsize
    wb = jnp.dtype(w.dtype).itemsize
    ob = jnp.dtype(out_dtype).itemsize
    # double-buffered x/w/out tiles + f32 accumulator scratch
    footprint = 2 * (tm * tk * xb + tk * tn * wb + tm * tn * ob) + tm * tn * 4
    assert footprint <= vmem_limit, (
        f"linear tile footprint {footprint}B exceeds VMEM budget {vmem_limit}B "
        f"for (M,N,K)=({M},{N},{K}); pad M or lower tile targets")

    grid = (M // tm, N // tn, K // tk)
    x_spec = pl.BlockSpec((tm, tk), lambda i, j, k: (i, k))
    # TODO(synk): sweep pipeline_mode=pl.Buffered(3) on w_spec for long-K matmuls
    # (FF2 / vocab projection) if the bundle shows exposed DMA.
    w_spec = pl.BlockSpec((tk, tn), lambda i, j, k: (k, j))
    o_spec = pl.BlockSpec((tm, tn), lambda i, j, k: (i, j))
    cparams = pltpu.CompilerParams(
        dimension_semantics=("parallel", "parallel", "arbitrary"),
        vmem_limit_bytes=vmem_limit)
    scratch = [pltpu.VMEM((tm, tn), jnp.float32)]
    out_shape = jax.ShapeDtypeStruct((M, N), out_dtype)

    if b is None:
        return pl.pallas_call(
            functools.partial(_linear_nobias_kernel, act=act),
            out_shape=out_shape, grid=grid,
            in_specs=[x_spec, w_spec], out_specs=o_spec,
            scratch_shapes=scratch, compiler_params=cparams,
        )(x, w)

    b_spec = pl.BlockSpec((1, tn), lambda i, j, k: (0, j))
    return pl.pallas_call(
        functools.partial(_linear_bias_kernel, act=act),
        out_shape=out_shape, grid=grid,
        in_specs=[x_spec, w_spec, b_spec], out_specs=o_spec,
        scratch_shapes=scratch, compiler_params=cparams,
    )(x, w, b.reshape(1, N))


# ----------------------------------------------------------------------------
# LayerNorm (optionally fused residual/extra add), row-tiled, bf16 in/out
# ----------------------------------------------------------------------------
def _layernorm_kernel(x_ref, g_ref, b_ref, o_ref, *, eps):
    x = x_ref[...].astype(jnp.float32)
    u = jnp.mean(x, axis=-1, keepdims=True)
    s = jnp.mean(jnp.square(x - u), axis=-1, keepdims=True)
    o_ref[...] = ((x - u) * jax.lax.rsqrt(s + eps) * g_ref[...] + b_ref[...]
                  ).astype(o_ref.dtype)


def _add_layernorm_kernel(x_ref, r_ref, g_ref, b_ref, o_ref, *, eps):
    # fused add (residual or pos+seg embedding) saves an HBM round trip
    x = x_ref[...].astype(jnp.float32) + r_ref[...].astype(jnp.float32)
    u = jnp.mean(x, axis=-1, keepdims=True)
    s = jnp.mean(jnp.square(x - u), axis=-1, keepdims=True)
    o_ref[...] = ((x - u) * jax.lax.rsqrt(s + eps) * g_ref[...] + b_ref[...]
                  ).astype(o_ref.dtype)


def layernorm(x, gamma, beta, residual=None, *, eps=1e-12,
              out_dtype=jnp.bfloat16, tm=512):
    M, H = x.shape
    tm = _pick_tile(M, tm, 8)
    grid = (M // tm,)
    row_spec = pl.BlockSpec((tm, H), lambda i: (i, 0))
    par_spec = pl.BlockSpec((1, H), lambda i: (0, 0))
    cparams = pltpu.CompilerParams(dimension_semantics=("parallel",),
                                   vmem_limit_bytes=_vmem_limit_bytes())
    out_shape = jax.ShapeDtypeStruct((M, H), out_dtype)
    if residual is None:
        return pl.pallas_call(
            functools.partial(_layernorm_kernel, eps=eps),
            out_shape=out_shape, grid=grid,
            in_specs=[row_spec, par_spec, par_spec],
            out_specs=row_spec, compiler_params=cparams,
        )(x, gamma.reshape(1, H), beta.reshape(1, H))
    return pl.pallas_call(
        functools.partial(_add_layernorm_kernel, eps=eps),
        out_shape=out_shape, grid=grid,
        in_specs=[row_spec, row_spec, par_spec, par_spec],
        out_specs=row_spec, compiler_params=cparams,
    )(x, residual, gamma.reshape(1, H), beta.reshape(1, H))


# ----------------------------------------------------------------------------
# fused multi-head attention + output projection
#   - reads the fused (B,S,3H) bf16 QKV slab directly (no HBM transpose)
#   - per-head context parked head-minor in an (S,H) bf16 VMEM scratch
#   - single full-K (S,H)@(H,H) output projection; context never hits HBM
# ----------------------------------------------------------------------------
def _attn_kernel(qkv_ref, m_ref, wp_ref, bp_ref, o_ref, ctx_ref,
                 *, n_heads, d_head, scale):
    H = n_heads * d_head
    bias = -10000.0 * (1.0 - m_ref[0].astype(jnp.float32))       # (1, S)
    # TODO(synk): for S >= 1024 convert to a flash-style online softmax with a
    # KV grid axis so the per-head (S,S) f32 scores stay within VMEM on v7x.
    for h in range(n_heads):
        q = qkv_ref[0, :, h * d_head:(h + 1) * d_head].astype(jnp.bfloat16)
        k = qkv_ref[0, :, H + h * d_head:H + (h + 1) * d_head].astype(jnp.bfloat16)
        v = qkv_ref[0, :, 2 * H + h * d_head:2 * H + (h + 1) * d_head].astype(jnp.bfloat16)
        s = jax.lax.dot_general(q, k, (((1,), (1,)), ((), ())),
                                preferred_element_type=jnp.float32) * scale
        s = s + bias
        s = s - jnp.max(s, axis=-1, keepdims=True)
        p = jnp.exp(s)
        p = p * pl.reciprocal(jnp.sum(p, axis=-1, keepdims=True), approx=True)
        ctx = jnp.dot(p.astype(jnp.bfloat16), v,
                      preferred_element_type=jnp.float32)          # (S, Dk)
        ctx_ref[:, h * d_head:(h + 1) * d_head] = ctx.astype(ctx_ref.dtype)
    out = jnp.dot(ctx_ref[...], wp_ref[...].astype(jnp.bfloat16),
                  preferred_element_type=jnp.float32)              # (S, H)
    o_ref[0] = (out + bp_ref[...]).astype(o_ref.dtype)


def attention_proj(qkv, mask, wp, bp, n_heads):
    """qkv: (B, S, 3H) bf16; mask: (B, 1, S) f32; wp: (H, H); bp: (H,)."""
    B, S, threeH = qkv.shape
    H = threeH // 3
    d_head = H // n_heads
    scale = 1.0 / math.sqrt(d_head)
    return pl.pallas_call(
        functools.partial(_attn_kernel, n_heads=n_heads, d_head=d_head, scale=scale),
        out_shape=jax.ShapeDtypeStruct((B, S, H), jnp.bfloat16),
        grid=(B,),
        in_specs=[pl.BlockSpec((1, S, threeH), lambda b: (b, 0, 0)),
                  pl.BlockSpec((1, 1, S), lambda b: (b, 0, 0)),
                  pl.BlockSpec((H, H), lambda b: (0, 0)),
                  pl.BlockSpec((1, H), lambda b: (0, 0))],
        out_specs=pl.BlockSpec((1, S, H), lambda b: (b, 0, 0)),
        scratch_shapes=[pltpu.VMEM((S, H), jnp.bfloat16)],
        compiler_params=pltpu.CompilerParams(
            dimension_semantics=("parallel",),
            vmem_limit_bytes=_vmem_limit_bytes()),
    )(qkv, mask, wp, bp.reshape(1, H))


# ----------------------------------------------------------------------------
# model (plain-JAX glue around the Pallas kernels)
# ----------------------------------------------------------------------------
def transformer_forward(params, input_ids, segment_ids, input_mask, cfg):
    B, S = input_ids.shape
    H, nH = cfg["hidden"], cfg["n_heads"]

    # --- embeddings: tok_embed2(tok_embed1(x)) + pos + seg, then LayerNorm ---
    e = jnp.take(params["tok_embed1"], input_ids, axis=0).astype(jnp.bfloat16)  # gather (glue)
    e = linear(e.reshape(B * S, -1), params["tok_embed2_w"],
               params["tok_embed2_b"])                                          # (B*S,H) bf16
    pos_seg = (params["pos_embed"][:S][None, :, :]
               + jnp.take(params["seg_embed"], segment_ids, axis=0))            # (B,S,H) glue
    pos_seg = pos_seg.astype(jnp.bfloat16).reshape(B * S, H)
    # pos+seg add fused into the embedding LayerNorm via its residual input
    h = layernorm(e, params["embed_norm_g"], params["embed_norm_b"], residual=pos_seg)
    # (dropout is identity in eval mode)

    mask = input_mask.astype(jnp.float32).reshape(B, 1, S)

    for blk in params["blocks"]:
        # fused QKV projection: one pass over activations, lane-dense 3H output,
        # consumed directly by the attention kernel (no HBM transpose).
        qkv = linear(h, blk["qkv_w"], blk["qkv_b"])                 # (B*S, 3H) bf16
        attn = attention_proj(qkv.reshape(B, S, 3 * H), mask,
                              blk["proj_w"], blk["proj_b"], nH)     # (B,S,H) bf16
        h1 = layernorm(attn.reshape(B * S, H), blk["norm1_g"], blk["norm1_b"],
                       residual=h)
        ff = linear(h1, blk["ff1_w"], blk["ff1_b"], act="gelu")
        ff = linear(ff, blk["ff2_w"], blk["ff2_b"])
        h = layernorm(ff, blk["norm2_g"], blk["norm2_b"], residual=h1)
    return h.reshape(B, S, H)


def generator_forward(params, input_ids, segment_ids, input_mask, masked_pos, cfg):
    B, S = input_ids.shape
    H, V = cfg["hidden"], cfg["vocab_size"]

    h = transformer_forward(params, input_ids, segment_ids, input_mask, cfg)  # (B,S,H) bf16

    # pooled_h = tanh(fc(h[:, 0]))
    pooled = linear(h[:, 0, :], params["fc_w"], params["fc_b"], act="tanh")   # (B,H) bf16

    # gather masked positions (torch.gather along dim 1) — glue
    n_pred = masked_pos.shape[1]
    h_masked = jnp.take_along_axis(h, masked_pos[:, :, None].astype(jnp.int32), axis=1)
    hm = h_masked.reshape(B * n_pred, H)

    # h_masked = norm(gelu(linear(h_masked)))
    hm = linear(hm, params["lin_w"], params["lin_b"], act="gelu")
    hm = layernorm(hm, params["norm_g"], params["norm_b"])

    # logits_lm = decoder2(decoder1(h_masked)) + decoder_bias   (tied weights)
    d1 = linear(hm, params["dec1_w"])                                         # no bias, bf16
    logits_lm = linear(d1, params["dec2_w"], params["decoder_bias"],
                       out_dtype=jnp.float32)
    logits_lm = logits_lm.reshape(B, n_pred, V)

    # logits_clsf = classifier(pooled_h)
    logits_clsf = linear(pooled, params["clsf_w"], params["clsf_b"],
                         out_dtype=jnp.float32)                               # (B,2)
    return logits_lm, logits_clsf


# ----------------------------------------------------------------------------
# deterministic parameter init (synthetic, mirrors the nn.Module shapes)
# ----------------------------------------------------------------------------
def init_params(cfg, key):
    keys = iter(jax.random.split(key, 128))
    H, E, V, F = cfg["hidden"], cfg["embedding"], cfg["vocab_size"], cfg["hidden_ff"]

    def nrm(shape, scale=0.02):
        return scale * jax.random.normal(next(keys), shape, jnp.float32)

    bf16 = lambda a: a.astype(jnp.bfloat16)   # matmul weights streamed in bf16

    tok_embed1 = nrm((V, E))                  # nn.Embedding(vocab, embedding) — f32 gather table
    tok_embed2_w = nrm((E, H))                # nn.Linear(embedding, hidden), stored (in, out)

    params = {
        "tok_embed1": tok_embed1,
        "tok_embed2_w": bf16(tok_embed2_w),
        "tok_embed2_b": jnp.zeros((H,), jnp.float32),
        "pos_embed": nrm((cfg["max_len"], H)),
        "seg_embed": nrm((cfg["n_segments"], H)),
        "embed_norm_g": jnp.ones((H,), jnp.float32),
        "embed_norm_b": jnp.zeros((H,), jnp.float32),
        "blocks": [],
        "fc_w": bf16(nrm((H, H))), "fc_b": jnp.zeros((H,), jnp.float32),
        "lin_w": bf16(nrm((H, H))), "lin_b": jnp.zeros((H,), jnp.float32),
        "norm_g": jnp.ones((H,), jnp.float32), "norm_b": jnp.zeros((H,), jnp.float32),
        "clsf_w": bf16(nrm((H, 2))), "clsf_b": jnp.zeros((2,), jnp.float32),
    }
    for _ in range(cfg["n_layers"]):
        qkv_w = jnp.concatenate([nrm((H, H)), nrm((H, H)), nrm((H, H))], axis=1)  # (H,3H)
        params["blocks"].append({
            "qkv_w": bf16(qkv_w),
            "qkv_b": jnp.zeros((3 * H,), jnp.float32),
            "proj_w": bf16(nrm((H, H))),       # full (H,H) for fused full-K attn projection
            "proj_b": jnp.zeros((H,), jnp.float32),
            "norm1_g": jnp.ones((H,), jnp.float32), "norm1_b": jnp.zeros((H,), jnp.float32),
            "ff1_w": bf16(nrm((H, F))), "ff1_b": jnp.zeros((F,), jnp.float32),
            "ff2_w": bf16(nrm((F, H))), "ff2_b": jnp.zeros((H,), jnp.float32),
            "norm2_g": jnp.ones((H,), jnp.float32), "norm2_b": jnp.zeros((H,), jnp.float32),
        })
    # weight tying: decoder1.weight = tok_embed2.weight.T ; decoder2.weight = tok_embed1
    params["dec1_w"] = params["tok_embed2_w"].T          # (H, E), bf16
    params["dec2_w"] = bf16(tok_embed1.T)                # (E, V)
    params["decoder_bias"] = jnp.zeros((V,), jnp.float32)
    return params


# ----------------------------------------------------------------------------
if __name__ == "__main__":
    cfg = dict(vocab_size=64, embedding=24, hidden=32, n_heads=4,
               hidden_ff=64, n_layers=2, max_len=16, n_segments=2)
    B, S, n_pred = 2, 8, 3

    key = jax.random.PRNGKey(0)
    k_param, k_ids, k_seg, k_pos = jax.random.split(key, 4)

    params = init_params(cfg, k_param)

    input_ids = jax.random.randint(k_ids, (B, S), 0, cfg["vocab_size"], dtype=jnp.int32)
    segment_ids = jax.random.randint(k_seg, (B, S), 0, cfg["n_segments"], dtype=jnp.int32)
    input_mask = jnp.ones((B, S), jnp.float32).at[1, -2:].set(0.0)   # pad last 2 tokens of sample 1
    masked_pos = jax.random.randint(k_pos, (B, n_pred), 0, S, dtype=jnp.int32)

    fwd = jax.jit(lambda ids, seg, msk, mpos:
                  generator_forward(params, ids, seg, msk, mpos, cfg))

    logits_lm, logits_clsf = fwd(input_ids, segment_ids, input_mask, masked_pos)
    jax.block_until_ready((logits_lm, logits_clsf))

    assert logits_lm.shape == (B, n_pred, cfg["vocab_size"])
    assert logits_clsf.shape == (B, 2)
    assert bool(jnp.all(jnp.isfinite(logits_lm))) and bool(jnp.all(jnp.isfinite(logits_clsf)))
    print("KERNEL_OK")
</pallas_src>

<mosaic_0001>
module attributes {stable_mosaic.version = 11 : i64} {
  func.func @_linear_bias_kernel(%arg0: i32, %arg1: i32, %arg2: i32, %arg3: memref<16x24xbf16, #tpu.memory_space<vmem>>, %arg4: memref<24x32xbf16, #tpu.memory_space<vmem>>, %arg5: memref<1x32xf32, #tpu.memory_space<vmem>>, %arg6: memref<16x32xbf16, #tpu.memory_space<vmem>>, %arg7: memref<16x32xf32, #tpu.memory_space<vmem>>) attributes {dimension_semantics = [#tpu.dimension_semantics<parallel>, #tpu.dimension_semantics<parallel>, #tpu.dimension_semantics<arbitrary>], iteration_bounds = array<i64: 1, 1, 1>, scalar_prefetch = 0 : i64, scratch_operands = 1 : i64, tpu.core_type = #tpu.core_type<tc>, window_params = [{transform_indices = @transform_0, window_bounds = array<i64: 16, 24>}, {transform_indices = @transform_1, window_bounds = array<i64: 24, 32>}, {transform_indices = @transform_2, window_bounds = array<i64: 1, 32>}, {transform_indices = @transform_3, window_bounds = array<i64: 16, 32>}]} {
    %c0_i32 = arith.constant 0 : i32
    %0 = arith.cmpi eq, %arg2, %c0_i32 : i32
    %1 = arith.extui %0 : i1 to i32
    %c0_i32_0 = arith.constant 0 : i32
    %2 = arith.cmpi ne, %1, %c0_i32_0 : i32
    scf.if %2 {
      %cst_10 = arith.constant 0.000000e+00 : f32
      %12 = vector.broadcast %cst_10 : f32 to vector<16x32xf32>
      %c0_11 = arith.constant 0 : index
      %c0_12 = arith.constant 0 : index
      %13 = vector.load %arg7[%c0_11, %c0_12] : memref<16x32xf32, #tpu.memory_space<vmem>>, vector<16x32xf32>
      tpu.vector_store %arg7[%c0_11, %c0_12], %12 {strides = array<i32>} : memref<16x32xf32, #tpu.memory_space<vmem>>, vector<16x32xf32>,
    } else {
    }
    %c0 = arith.constant 0 : index
    %c0_1 = arith.constant 0 : index
    %3 = vector.load %arg7[%c0, %c0_1] : memref<16x32xf32, #tpu.memory_space<vmem>>, vector<16x32xf32>
    %c0_2 = arith.constant 0 : index
    %c0_3 = arith.constant 0 : index
    %4 = vector.load %arg3[%c0_2, %c0_3] : memref<16x24xbf16, #tpu.memory_space<vmem>>, vector<16x24xbf16>
    %c0_4 = arith.constant 0 : index
    %c0_5 = arith.constant 0 : index
    %5 = vector.load %arg4[%c0_4, %c0_5] : memref<24x32xbf16, #tpu.memory_space<vmem>>, vector<24x32xbf16>
    %cst = arith.constant dense<0.000000e+00> : vector<16x32xf32>
    %6 = tpu.matmul %4, %5, %cst {dimension_numbers = #tpu.dot_dimension_numbers<[1], [0], [0], [1], [0, 0, 1, 1], [], []>} : vector<16x24xbf16>, vector<24x32xbf16>, vector<16x32xf32> -> vector<16x32xf32>
    %7 = arith.addf %3, %6 : vector<16x32xf32>
    %c0_6 = arith.constant 0 : index
    %c0_7 = arith.constant 0 : index
    %8 = vector.load %arg7[%c0_6, %c0_7] : memref<16x32xf32, #tpu.memory_space<vmem>>, vector<16x32xf32>
    tpu.vector_store %arg7[%c0_6, %c0_7], %7 {strides = array<i32>} : memref<16x32xf32, #tpu.memory_space<vmem>>, vector<16x32xf32>,
    %c0_i32_8 = arith.constant 0 : i32
    %9 = arith.cmpi eq, %arg2, %c0_i32_8 : i32
    %10 = arith.extui %9 : i1 to i32
    %c0_i32_9 = arith.constant 0 : i32
    %11 = arith.cmpi ne, %10, %c0_i32_9 : i32
    scf.if %11 {
      %c0_10 = arith.constant 0 : index
      %c0_11 = arith.constant 0 : index
      %12 = vector.load %arg7[%c0_10, %c0_11] : memref<16x32xf32, #tpu.memory_space<vmem>>, vector<16x32xf32>
      %c0_12 = arith.constant 0 : index
      %c0_13 = arith.constant 0 : index
      %13 = vector.load %arg5[%c0_12, %c0_13] : memref<1x32xf32, #tpu.memory_space<vmem>>, vector<1x32xf32>
      %14 = vector.broadcast %13 : vector<1x32xf32> to vector<16x32xf32>
      %15 = arith.addf %12, %14 : vector<16x32xf32>
      %16 = arith.truncf %15 : vector<16x32xf32> to vector<16x32xbf16>
      %c0_14 = arith.constant 0 : index
      %c0_15 = arith.constant 0 : index
      %17 = vector.load %arg6[%c0_14, %c0_15] : memref<16x32xbf16, #tpu.memory_space<vmem>>, vector<16x32xbf16>
      tpu.vector_store %arg6[%c0_14, %c0_15], %16 {strides = array<i32>} : memref<16x32xbf16, #tpu.memory_space<vmem>>, vector<16x32xbf16>,
    } else {
    }
    return
  }
  func.func @transform_0(%arg0: i32, %arg1: i32, %arg2: i32) -> (i32, i32) {
    %c0_i32 = arith.constant 0 : i32
    return %arg0, %arg2 : i32, i32
  }
  func.func @transform_1(%arg0: i32, %arg1: i32, %arg2: i32) -> (i32, i32) {
    %c0_i32 = arith.constant 0 : i32
    return %arg2, %arg1 : i32, i32
  }
  func.func @transform_2(%arg0: i32, %arg1: i32, %arg2: i32) -> (i32, i32) {
    %c0_i32 = arith.constant 0 : i32
    %c0_i32_0 = arith.constant 0 : i32
    return %c0_i32, %arg1 : i32, i32
  }
  func.func @transform_3(%arg0: i32, %arg1: i32, %arg2: i32) -> (i32, i32) {
    %c0_i32 = arith.constant 0 : i32
    return %arg0, %arg1 : i32, i32
  }
}

module attributes {stable_mosaic.version = 11 : i64} {
  func.func @_add_layernorm_kernel(%arg0: i32, %arg1: memref<16x32xbf16, #tpu.memory_space<vmem>>, %arg2: memref<16x32xbf16, #tpu.memory_space<vmem>>, %arg3: memref<1x32xf32, #tpu.memory_space<vmem>>, %arg4: memref<1x32xf32, #tpu.memory_space<vmem>>, %arg5: memref<16x32xbf16, #tpu.memory_space<vmem>>) attributes {dimension_semantics = [#tpu.dimension_semantics<parallel>], iteration_bounds = array<i64: 1>, scalar_prefetch = 0 : i64, scratch_operands = 0 : i64, tpu.core_type = #tpu.core_type<tc>, window_params = [{transform_indices = @transform_0, window_bounds = array<i64: 16, 32>}, {transform_indices = @transform_1, window_bounds = array<i64: 16, 32>}, {pipeline_mode = #tpu.pipeline_mode<synchronous>, transform_indices = @transform_2, window_bounds = array<i64: 1, 32>}, {pipeline_mode = #tpu.pipeline_mode<synchronous>, transform_indices = @transform_3, window_bounds = array<i64: 1, 32>}, {transform_indices = @transform_4, window_bounds = array<i64: 16, 32>}]} {
    %c0 = arith.constant 0 : index
    %c0_0 = arith.constant 0 : index
    %0 = vector.load %arg1[%c0, %c0_0] : memref<16x32xbf16, #tpu.memory_space<vmem>>, vector<16x32xbf16>
    %1 = arith.extf %0 : vector<16x32xbf16> to vector<16x32xf32>
    %c0_1 = arith.constant 0 : index
    %c0_2 = arith.constant 0 : index
    %2 = vector.load %arg2[%c0_1, %c0_2] : memref<16x32xbf16, #tpu.memory_space<vmem>>, vector<16x32xbf16>
    %3 = arith.extf %2 : vector<16x32xbf16> to vector<16x32xf32>
    %4 = arith.addf %1, %3 : vector<16x32xf32>
    %cst = arith.constant dense<0.000000e+00> : vector<16xf32>
    %5 = vector.multi_reduction <add>, %4, %cst [1] : vector<16x32xf32> to vector<16xf32>
    %6 = vector.shape_cast %5 : vector<16xf32> to vector<16x1xf32>
    %cst_3 = arith.constant 3.200000e+01 : f32
    %7 = vector.broadcast %cst_3 : f32 to vector<16x1xf32>
    %8 = arith.divf %6, %7 : vector<16x1xf32>
    %9 = vector.broadcast %8 : vector<16x1xf32> to vector<16x32xf32>
    %10 = arith.subf %4, %9 : vector<16x32xf32>
    %11 = arith.mulf %10, %10 : vector<16x32xf32>
    %cst_4 = arith.constant dense<0.000000e+00> : vector<16xf32>
    %12 = vector.multi_reduction <add>, %11, %cst_4 [1] : vector<16x32xf32> to vector<16xf32>
    %13 = vector.shape_cast %12 : vector<16xf32> to vector<16x1xf32>
    %cst_5 = arith.constant 3.200000e+01 : f32
    %14 = vector.broadcast %cst_5 : f32 to vector<16x1xf32>
    %15 = arith.divf %13, %14 : vector<16x1xf32>
    %16 = vector.broadcast %8 : vector<16x1xf32> to vector<16x32xf32>
    %17 = arith.subf %4, %16 : vector<16x32xf32>
    %cst_6 = arith.constant 9.99999996E-13 : f32
    %18 = vector.broadcast %cst_6 : f32 to vector<16x1xf32>
    %19 = arith.addf %15, %18 : vector<16x1xf32>
    %20 = math.rsqrt %19 : vector<16x1xf32>
    %21 = vector.broadcast %20 : vector<16x1xf32> to vector<16x32xf32>
    %22 = arith.mulf %17, %21 : vector<16x32xf32>
    %c0_7 = arith.constant 0 : index
    %c0_8 = arith.constant 0 : index
    %23 = vector.load %arg3[%c0_7, %c0_8] : memref<1x32xf32, #tpu.memory_space<vmem>>, vector<1x32xf32>
    %24 = vector.broadcast %23 : vector<1x32xf32> to vector<16x32xf32>
    %25 = arith.mulf %22, %24 : vector<16x32xf32>
    %c0_9 = arith.constant 0 : index
    %c0_10 = arith.constant 0 : index
    %26 = vector.load %arg4[%c0_9, %c0_10] : memref<1x32xf32, #tpu.memory_space<vmem>>, vector<1x32xf32>
    %27 = vector.broadcast %26 : vector<1x32xf32> to vector<16x32xf32>
    %28 = arith.addf %25, %27 : vector<16x32xf32>
    %29 = arith.truncf %28 : vector<16x32xf32> to vector<16x32xbf16>
    %c0_11 = arith.constant 0 : index
    %c0_12 = arith.constant 0 : index
    %30 = vector.load %arg5[%c0_11, %c0_12] : memref<16x32xbf16, #tpu.memory_space<vmem>>, vector<16x32xbf16>
    tpu.vector_store %arg5[%c0_11, %c0_12], %29 {strides = array<i32>} : memref<16x32xbf16, #tpu.memory_space<vmem>>, vector<16x32xbf16>,
    return
  }
  func.func @transform_0(%arg0: i32) -> (i32, i32) {
    %c0_i32 = arith.constant 0 : i32
    %c0_i32_0 = arith.constant 0 : i32
    return %arg0, %c0_i32 : i32, i32
  }
  func.func @transform_1(%arg0: i32) -> (i32, i32) {
    %c0_i32 = arith.constant 0 : i32
    %c0_i32_0 = arith.constant 0 : i32
    return %arg0, %c0_i32 : i32, i32
  }
  func.func @transform_2(%arg0: i32) -> (i32, i32) {
    %c0_i32 = arith.constant 0 : i32
    %c0_i32_0 = arith.constant 0 : i32
    %c0_i32_1 = arith.constant 0 : i32
    return %c0_i32, %c0_i32_0 : i32, i32
  }
  func.func @transform_3(%arg0: i32) -> (i32, i32) {
    %c0_i32 = arith.constant 0 : i32
    %c0_i32_0 = arith.constant 0 : i32
    %c0_i32_1 = arith.constant 0 : i32
    return %c0_i32, %c0_i32_0 : i32, i32
  }
  func.func @transform_4(%arg0: i32) -> (i32, i32) {
    %c0_i32 = arith.constant 0 : i32
    %c0_i32_0 = arith.constant 0 : i32
    return %arg0, %c0_i32 : i32, i32
  }
}

module attributes {stable_mosaic.version = 11 : i64} {
  func.func @_linear_bias_kernel(%arg0: i32, %arg1: i32, %arg2: i32, %arg3: memref<16x32xbf16, #tpu.memory_space<vmem>>, %arg4: memref<32x96xbf16, #tpu.memory_space<vmem>>, %arg5: memref<1x96xf32, #tpu.memory_space<vmem>>, %arg6: memref<16x96xbf16, #tpu.memory_space<vmem>>, %arg7: memref<16x96xf32, #tpu.memory_space<vmem>>) attributes {dimension_semantics = [#tpu.dimension_semantics<parallel>, #tpu.dimension_semantics<parallel>, #tpu.dimension_semantics<arbitrary>], iteration_bounds = array<i64: 1, 1, 1>, scalar_prefetch = 0 : i64, scratch_operands = 1 : i64, tpu.core_type = #tpu.core_type<tc>, window_params = [{transform_indices = @transform_0, window_bounds = array<i64: 16, 32>}, {transform_indices = @transform_1, window_bounds = array<i64: 32, 96>}, {transform_indices = @transform_2, window_bounds = array<i64: 1, 96>}, {transform_indices = @transform_3, window_bounds = array<i64: 16, 96>}]} {
    %c0_i32 = arith.constant 0 : i32
    %0 = arith.cmpi eq, %arg2, %c0_i32 : i32
    %1 = arith.extui %0 : i1 to i32
    %c0_i32_0 = arith.constant 0 : i32
    %2 = arith.cmpi ne, %1, %c0_i32_0 : i32
    scf.if %2 {
      %cst_10 = arith.constant 0.000000e+00 : f32
      %12 = vector.broadcast %cst_10 : f32 to vector<16x96xf32>
      %c0_11 = arith.constant 0 : index
      %c0_12 = arith.constant 0 : index
      %13 = vector.load %arg7[%c0_11, %c0_12] : memref<16x96xf32, #tpu.memory_space<vmem>>, vector<16x96xf32>
      tpu.vector_store %arg7[%c0_11, %c0_12], %12 {strides = array<i32>} : memref<16x96xf32, #tpu.memory_space<vmem>>, vector<16x96xf32>,
    } else {
    }
    %c0 = arith.constant 0 : index
    %c0_1 = arith.constant 0 : index
    %3 = vector.load %arg7[%c0, %c0_1] : memref<16x96xf32, #tpu.memory_space<vmem>>, vector<16x96xf32>
    %c0_2 = arith.constant 0 : index
    %c0_3 = arith.constant 0 : index
    %4 = vector.load %arg3[%c0_2, %c0_3] : memref<16x32xbf16, #tpu.memory_space<vmem>>, vector<16x32xbf16>
    %c0_4 = arith.constant 0 : index
    %c0_5 = arith.constant 0 : index
    %5 = vector.load %arg4[%c0_4, %c0_5] : memref<32x96xbf16, #tpu.memory_space<vmem>>, vector<32x96xbf16>
    %cst = arith.constant dense<0.000000e+00> : vector<16x96xf32>
    %6 = tpu.matmul %4, %5, %cst {dimension_numbers = #tpu.dot_dimension_numbers<[1], [0], [0], [1], [0, 0, 1, 1], [], []>} : vector<16x32xbf16>, vector<32x96xbf16>, vector<16x96xf32> -> vector<16x96xf32>
    %7 = arith.addf %3, %6 : vector<16x96xf32>
    %c0_6 = arith.constant 0 : index
    %c0_7 = arith.constant 0 : index
    %8 = vector.load %arg7[%c0_6, %c0_7] : memref<16x96xf32, #tpu.memory_space<vmem>>, vector<16x96xf32>
    tpu.vector_store %arg7[%c0_6, %c0_7], %7 {strides = array<i32>} : memref<16x96xf32, #tpu.memory_space<vmem>>, vector<16x96xf32>,
    %c0_i32_8 = arith.constant 0 : i32
    %9 = arith.cmpi eq, %arg2, %c0_i32_8 : i32
    %10 = arith.extui %9 : i1 to i32
    %c0_i32_9 = arith.constant 0 : i32
    %11 = arith.cmpi ne, %10, %c0_i32_9 : i32
    scf.if %11 {
      %c0_10 = arith.constant 0 : index
      %c0_11 = arith.constant 0 : index
      %12 = vector.load %arg7[%c0_10, %c0_11] : memref<16x96xf32, #tpu.memory_space<vmem>>, vector<16x96xf32>
      %c0_12 = arith.constant 0 : index
      %c0_13 = arith.constant 0 : index
      %13 = vector.load %arg5[%c0_12, %c0_13] : memref<1x96xf32, #tpu.memory_space<vmem>>, vector<1x96xf32>
      %14 = vector.broadcast %13 : vector<1x96xf32> to vector<16x96xf32>
      %15 = arith.addf %12, %14 : vector<16x96xf32>
      %16 = arith.truncf %15 : vector<16x96xf32> to vector<16x96xbf16>
      %c0_14 = arith.constant 0 : index
      %c0_15 = arith.constant 0 : index
      %17 = vector.load %arg6[%c0_14, %c0_15] : memref<16x96xbf16, #tpu.memory_space<vmem>>, vector<16x96xbf16>
      tpu.vector_store %arg6[%c0_14, %c0_15], %16 {strides = array<i32>} : memref<16x96xbf16, #tpu.memory_space<vmem>>, vector<16x96xbf16>,
    } else {
    }
    return
  }
  func.func @transform_0(%arg0: i32, %arg1: i32, %arg2: i32) -> (i32, i32) {
    %c0_i32 = arith.constant 0 : i32
    return %arg0, %arg2 : i32, i32
  }
  func.func @transform_1(%arg0: i32, %arg1: i32, %arg2: i32) -> (i32, i32) {
    %c0_i32 = arith.constant 0 : i32
    return %arg2, %arg1 : i32, i32
  }
  func.func @transform_2(%arg0: i32, %arg1: i32, %arg2: i32) -> (i32, i32) {
    %c0_i32 = arith.constant 0 : i32
    %c0_i32_0 = arith.constant 0 : i32
    return %c0_i32, %arg1 : i32, i32
  }
  func.func @transform_3(%arg0: i32, %arg1: i32, %arg2: i32) -> (i32, i32) {
    %c0_i32 = arith.constant 0 : i32
    return %arg0, %arg1 : i32, i32
  }
}

module attributes {stable_mosaic.version = 11 : i64} {
  func.func @_attn_kernel(%arg0: i32, %arg1: memref<1x8x96xbf16, #tpu.memory_space<vmem>>, %arg2: memref<1x1x8xf32, #tpu.memory_space<vmem>>, %arg3: memref<32x32xbf16, #tpu.memory_space<vmem>>, %arg4: memref<1x32xf32, #tpu.memory_space<vmem>>, %arg5: memref<1x8x32xbf16, #tpu.memory_space<vmem>>, %arg6: memref<8x32xbf16, #tpu.memory_space<vmem>>) attributes {dimension_semantics = [#tpu.dimension_semantics<parallel>], iteration_bounds = array<i64: 2>, scalar_prefetch = 0 : i64, scratch_operands = 1 : i64, tpu.core_type = #tpu.core_type<tc>, window_params = [{transform_indices = @transform_0, window_bounds = array<i64: 1, 8, 96>}, {transform_indices = @transform_1, window_bounds = array<i64: 1, 1, 8>}, {pipeline_mode = #tpu.pipeline_mode<synchronous>, transform_indices = @transform_2, window_bounds = array<i64: 32, 32>}, {pipeline_mode = #tpu.pipeline_mode<synchronous>, transform_indices = @transform_3, window_bounds = array<i64: 1, 32>}, {transform_indices = @transform_4, window_bounds = array<i64: 1, 8, 32>}]} {
    %c0 = arith.constant 0 : index
    %c0_0 = arith.constant 0 : index
    %c0_1 = arith.constant 0 : index
    %0 = vector.load %arg2[%c0, %c0_0, %c0_1] : memref<1x1x8xf32, #tpu.memory_space<vmem>>, vector<1x1x8xf32>
    %1 = vector.shape_cast %0 : vector<1x1x8xf32> to vector<1x8xf32>
    %cst = arith.constant 1.000000e+00 : f32
    %2 = vector.broadcast %cst : f32 to vector<1x8xf32>
    %3 = arith.subf %2, %1 : vector<1x8xf32>
    %cst_2 = arith.constant -1.000000e+04 : f32
    %4 = vector.broadcast %cst_2 : f32 to vector<1x8xf32>
    %5 = arith.mulf %4, %3 : vector<1x8xf32>
    %c0_3 = arith.constant 0 : index
    %c0_4 = arith.constant 0 : index
    %c0_5 = arith.constant 0 : index
    %6 = vector.load %arg1[%c0_3, %c0_4, %c0_5] : memref<1x8x96xbf16, #tpu.memory_space<vmem>>, vector<1x8x8xbf16>
    %7 = vector.shape_cast %6 : vector<1x8x8xbf16> to vector<8x8xbf16>
    %c0_6 = arith.constant 0 : index
    %c0_7 = arith.constant 0 : index
    %c32 = arith.constant 32 : index
    %8 = vector.load %arg1[%c0_6, %c0_7, %c32] : memref<1x8x96xbf16, #tpu.memory_space<vmem>>, vector<1x8x8xbf16>
    %9 = vector.shape_cast %8 : vector<1x8x8xbf16> to vector<8x8xbf16>
    %c0_8 = arith.constant 0 : index
    %c0_9 = arith.constant 0 : index
    %c64 = arith.constant 64 : index
    %10 = vector.load %arg1[%c0_8, %c0_9, %c64] : memref<1x8x96xbf16, #tpu.memory_space<vmem>>, vector<1x8x8xbf16>
    %11 = vector.shape_cast %10 : vector<1x8x8xbf16> to vector<8x8xbf16>
    %cst_10 = arith.constant dense<0.000000e+00> : vector<8x8xf32>
    %12 = tpu.matmul %7, %9, %cst_10 {dimension_numbers = #tpu.dot_dimension_numbers<[1], [1], [0], [0], [0, 0, 1, 0], [], []>} : vector<8x8xbf16>, vector<8x8xbf16>, vector<8x8xf32> -> vector<8x8xf32>
    %cst_11 = arith.constant 0.353553385 : f32
    %13 = vector.broadcast %cst_11 : f32 to vector<8x8xf32>
    %14 = arith.mulf %12, %13 : vector<8x8xf32>
    %15 = vector.broadcast %5 : vector<1x8xf32> to vector<8x8xf32>
    %16 = arith.addf %14, %15 : vector<8x8xf32>
    %cst_12 = arith.constant dense<0xFF800000> : vector<8xf32>
    %17 = vector.multi_reduction <maximumf>, %16, %cst_12 [1] : vector<8x8xf32> to vector<8xf32>
    %18 = vector.shape_cast %17 : vector<8xf32> to vector<8x1xf32>
    %19 = vector.broadcast %18 : vector<8x1xf32> to vector<8x8xf32>
    %20 = arith.subf %16, %19 : vector<8x8xf32>
    %21 = math.exp %20 : vector<8x8xf32>
    %cst_13 = arith.constant dense<0.000000e+00> : vector<8xf32>
    %22 = vector.multi_reduction <add>, %21, %cst_13 [1] : vector<8x8xf32> to vector<8xf32>
    %23 = vector.shape_cast %22 : vector<8xf32> to vector<8x1xf32>
    %24 = tpu.reciprocal %23 {approx = true} : vector<8x1xf32> -> vector<8x1xf32>
    %25 = vector.broadcast %24 : vector<8x1xf32> to vector<8x8xf32>
    %26 = arith.mulf %21, %25 : vector<8x8xf32>
    %27 = arith.truncf %26 : vector<8x8xf32> to vector<8x8xbf16>
    %cst_14 = arith.constant dense<0.000000e+00> : vector<8x8xf32>
    %28 = tpu.matmul %27, %11, %cst_14 {dimension_numbers = #tpu.dot_dimension_numbers<[1], [0], [0], [1], [0, 0, 1, 1], [], []>} : vector<8x8xbf16>, vector<8x8xbf16>, vector<8x8xf32> -> vector<8x8xf32>
    %29 = arith.truncf %28 : vector<8x8xf32> to vector<8x8xbf16>
    %c0_15 = arith.constant 0 : index
    %c0_16 = arith.constant 0 : index
    %30 = vector.load %arg6[%c0_15, %c0_16] : memref<8x32xbf16, #tpu.memory_space<vmem>>, vector<8x8xbf16>
    tpu.vector_store %arg6[%c0_15, %c0_16], %29 {strides = array<i32>} : memref<8x32xbf16, #tpu.memory_space<vmem>>, vector<8x8xbf16>,
    %c0_17 = arith.constant 0 : index
    %c0_18 = arith.constant 0 : index
    %c8 = arith.constant 8 : index
    %31 = vector.load %arg1[%c0_17, %c0_18, %c8] : memref<1x8x96xbf16, #tpu.memory_space<vmem>>, vector<1x8x8xbf16>
    %32 = vector.shape_cast %31 : vector<1x8x8xbf16> to vector<8x8xbf16>
    %c0_19 = arith.constant 0 : index
    %c0_20 = arith.constant 0 : index
    %c40 = arith.constant 40 : index
    %33 = vector.load %arg1[%c0_19, %c0_20, %c40] : memref<1x8x96xbf16, #tpu.memory_space<vmem>>, vector<1x8x8xbf16>
    %34 = vector.shape_cast %33 : vector<1x8x8xbf16> to vector<8x8xbf16>
    %c0_21 = arith.constant 0 : index
    %c0_22 = arith.constant 0 : index
    %c72 = arith.constant 72 : index
    %35 = vector.load %arg1[%c0_21, %c0_22, %c72] : memref<1x8x96xbf16, #tpu.memory_space<vmem>>, vector<1x8x8xbf16>
    %36 = vector.shape_cast %35 : vector<1x8x8xbf16> to vector<8x8xbf16>
    %cst_23 = arith.constant dense<0.000000e+00> : vector<8x8xf32>
    %37 = tpu.matmul %32, %34, %cst_23 {dimension_numbers = #tpu.dot_dimension_numbers<[1], [1], [0], [0], [0, 0, 1, 0], [], []>} : vector<8x8xbf16>, vector<8x8xbf16>, vector<8x8xf32> -> vector<8x8xf32>
    %cst_24 = arith.constant 0.353553385 : f32
    %38 = vector.broadcast %cst_24 : f32 to vector<8x8xf32>
    %39 = arith.mulf %37, %38 : vector<8x8xf32>
    %40 = vector.broadcast %5 : vector<1x8xf32> to vector<8x8xf32>
    %41 = arith.addf %39, %40 : vector<8x8xf32>
    %cst_25 = arith.constant dense<0xFF800000> : vector<8xf32>
    %42 = vector.multi_reduction <maximumf>, %41, %cst_25 [1] : vector<8x8xf32> to vector<8xf32>
    %43 = vector.shape_cast %42 : vector<8xf32> to vector<8x1xf32>
    %44 = vector.broadcast %43 : vector<8x1xf32> to vector<8x8xf32>
    %45 = arith.subf %41, %44 : vector<8x8xf32>
    %46 = math.exp %45 : vector<8x8xf32>
    %cst_26 = arith.constant dense<0.000000e+00> : vector<8xf32>
    %47 = vector.multi_reduction <add>, %46, %cst_26 [1] : vector<8x8xf32> to vector<8xf32>
    %48 = vector.shape_cast %47 : vector<8xf32> to vector<8x1xf32>
    %49 = tpu.reciprocal %48 {approx = true} : vector<8x1xf32> -> vector<8x1xf32>
    %50 = vector.broadcast %49 : vector<8x1xf32> to vector<8x8xf32>
    %51 = arith.mulf %46, %50 : vector<8x8xf32>
    %52 = arith.truncf %51 : vector<8x8xf32> to vector<8x8xbf16>
    %cst_27 = arith.constant dense<0.000000e+00> : vector<8x8xf32>
    %53 = tpu.matmul %52, %36, %cst_27 {dimension_numbers = #tpu.dot_dimension_numbers<[1], [0], [0], [1], [0, 0, 1, 1], [], []>} : vector<8x8xbf16>, vector<8x8xbf16>, vector<8x8xf32> -> vector<8x8xf32>
    %54 = arith.truncf %53 : vector<8x8xf32> to vector<8x8xbf16>
    %c0_28 = arith.constant 0 : index
    %c8_29 = arith.constant 8 : index
    %55 = vector.load %arg6[%c0_28, %c8_29] : memref<8x32xbf16, #tpu.memory_space<vmem>>, vector<8x8xbf16>
    tpu.vector_store %arg6[%c0_28, %c8_29], %54 {strides = array<i32>} : memref<8x32xbf16, #tpu.memory_space<vmem>>, vector<8x8xbf16>,
    %c0_30 = arith.constant 0 : index
    %c0_31 = arith.constant 0 : index
    %c16 = arith.constant 16 : index
    %56 = vector.load %arg1[%c0_30, %c0_31, %c16] : memref<1x8x96xbf16, #tpu.memory_space<vmem>>, vector<1x8x8xbf16>
    %57 = vector.shape_cast %56 : vector<1x8x8xbf16> to vector<8x8xbf16>
    %c0_32 = arith.constant 0 : index
    %c0_33 = arith.constant 0 : index
    %c48 = arith.constant 48 : index
    %58 = vector.load %arg1[%c0_32, %c0_33, %c48] : memref<1x8x96xbf16, #tpu.memory_space<vmem>>, vector<1x8x8xbf16>
    %59 = vector.shape_cast %58 : vector<1x8x8xbf16> to vector<8x8xbf16>
    %c0_34 = arith.constant 0 : index
    %c0_35 = arith.constant 0 : index
    %c80 = arith.constant 80 : index
    %60 = vector.load %arg1[%c0_34, %c0_35, %c80] : memref<1x8x96xbf16, #tpu.memory_space<vmem>>, vector<1x8x8xbf16>
    %61 = vector.shape_cast %60 : vector<1x8x8xbf16> to vector<8x8xbf16>
    %cst_36 = arith.constant dense<0.000000e+00> : vector<8x8xf32>
    %62 = tpu.matmul %57, %59, %cst_36 {dimension_numbers = #tpu.dot_dimension_numbers<[1], [1], [0], [0], [0, 0, 1, 0], [], []>} : vector<8x8xbf16>, vector<8x8xbf16>, vector<8x8xf32> -> vector<8x8xf32>
    %cst_37 = arith.constant 0.353553385 : f32
    %63 = vector.broadcast %cst_37 : f32 to vector<8x8xf32>
    %64 = arith.mulf %62, %63 : vector<8x8xf32>
    %65 = vector.broadcast %5 : vector<1x8xf32> to vector<8x8xf32>
    %66 = arith.addf %64, %65 : vector<8x8xf32>
    %cst_38 = arith.constant dense<0xFF800000> : vector<8xf32>
    %67 = vector.multi_reduction <maximumf>, %66, %cst_38 [1] : vector<8x8xf32> to vector<8xf32>
    %68 = vector.shape_cast %67 : vector<8xf32> to vector<8x1xf32>
    %69 = vector.broadcast %68 : vector<8x1xf32> to vector<8x8xf32>
    %70 = arith.subf %66, %69 : vector<8x8xf32>
    %71 = math.exp %70 : vector<8x8xf32>
    %cst_39 = arith.constant dense<0.000000e+00> : vector<8xf32>
    %72 = vector.multi_reduction <add>, %71, %cst_39 [1] : vector<8x8xf32> to vector<8xf32>
    %73 = vector.shape_cast %72 : vector<8xf32> to vector<8x1xf32>
    %74 = tpu.reciprocal %73 {approx = true} : vector<8x1xf32> -> vector<8x1xf32>
    %75 = vector.broadcast %74 : vector<8x1xf32> to vector<8x8xf32>
    %76 = arith.mulf %71, %75 : vector<8x8xf32>
    %77 = arith.truncf %76 : vector<8x8xf32> to vector<8x8xbf16>
    %cst_40 = arith.constant dense<0.000000e+00> : vector<8x8xf32>
    %78 = tpu.matmul %77, %61, %cst_40 {dimension_numbers = #tpu.dot_dimension_numbers<[1], [0], [0], [1], [0, 0, 1, 1], [], []>} : vector<8x8xbf16>, vector<8x8xbf16>, vector<8x8xf32> -> vector<8x8xf32>
    %79 = arith.truncf %78 : vector<8x8xf32> to vector<8x8xbf16>
    %c0_41 = arith.constant 0 : index
    %c16_42 = arith.constant 16 : index
    %80 = vector.load %arg6[%c0_41, %c16_42] : memref<8x32xbf16, #tpu.memory_space<vmem>>, vector<8x8xbf16>
    tpu.vector_store %arg6[%c0_41, %c16_42], %79 {strides = array<i32>} : memref<8x32xbf16, #tpu.memory_space<vmem>>, vector<8x8xbf16>,
    %c0_43 = arith.constant 0 : index
    %c0_44 = arith.constant 0 : index
    %c24 = arith.constant 24 : index
    %81 = vector.load %arg1[%c0_43, %c0_44, %c24] : memref<1x8x96xbf16, #tpu.memory_space<vmem>>, vector<1x8x8xbf16>
    %82 = vector.shape_cast %81 : vector<1x8x8xbf16> to vector<8x8xbf16>
    %c0_45 = arith.constant 0 : index
    %c0_46 = arith.constant 0 : index
    %c56 = arith.constant 56 : index
    %83 = vector.load %arg1[%c0_45, %c0_46, %c56] : memref<1x8x96xbf16, #tpu.memory_space<vmem>>, vector<1x8x8xbf16>
    %84 = vector.shape_cast %83 : vector<1x8x8xbf16> to vector<8x8xbf16>
    %c0_47 = arith.constant 0 : index
    %c0_48 = arith.constant 0 : index
    %c88 = arith.constant 88 : index
    %85 = vector.load %arg1[%c0_47, %c0_48, %c88] : memref<1x8x96xbf16, #tpu.memory_space<vmem>>, vector<1x8x8xbf16>
    %86 = vector.shape_cast %85 : vector<1x8x8xbf16> to vector<8x8xbf16>
    %cst_49 = arith.constant dense<0.000000e+00> : vector<8x8xf32>
    %87 = tpu.matmul %82, %84, %cst_49 {dimension_numbers = #tpu.dot_dimension_numbers<[1], [1], [0], [0], [0, 0, 1, 0], [], []>} : vector<8x8xbf16>, vector<8x8xbf16>, vector<8x8xf32> -> vector<8x8xf32>
    %cst_50 = arith.constant 0.353553385 : f32
    %88 = vector.broadcast %cst_50 : f32 to vector<8x8xf32>
    %89 = arith.mulf %87, %88 : vector<8x8xf32>
    %90 = vector.broadcast %5 : vector<1x8xf32> to vector<8x8xf32>
    %91 = arith.addf %89, %90 : vector<8x8xf32>
    %cst_51 = arith.constant dense<0xFF800000> : vector<8xf32>
    %92 = vector.multi_reduction <maximumf>, %91, %cst_51 [1] : vector<8x8xf32> to vector<8xf32>
    %93 = vector.shape_cast %92 : vector<8xf32> to vector<8x1xf32>
    %94 = vector.broadcast %93 : vector<8x1xf32> to vector<8x8xf32>
    %95 = arith.subf %91, %94 : vector<8x8xf32>
    %96 = math.exp %95 : vector<8x8xf32>
    %cst_52 = arith.constant dense<0.000000e+00> : vector<8xf32>
    %97 = vector.multi_reduction <add>, %96, %cst_52 [1] : vector<8x8xf32> to vector<8xf32>
    %98 = vector.shape_cast %97 : vector<8xf32> to vector<8x1xf32>
    %99 = tpu.reciprocal %98 {approx = true} : vector<8x1xf32> -> vector<8x1xf32>
    %100 = vector.broadcast %99 : vector<8x1xf32> to vector<8x8xf32>
    %101 = arith.mulf %96, %100 : vector<8x8xf32>
    %102 = arith.truncf %101 : vector<8x8xf32> to vector<8x8xbf16>
    %cst_53 = arith.constant dense<0.000000e+00> : vector<8x8xf32>
    %103 = tpu.matmul %102, %86, %cst_53 {dimension_numbers = #tpu.dot_dimension_numbers<[1], [0], [0], [1], [0, 0, 1, 1], [], []>} : vector<8x8xbf16>, vector<8x8xbf16>, vector<8x8xf32> -> vector<8x8xf32>
    %104 = arith.truncf %103 : vector<8x8xf32> to vector<8x8xbf16>
    %c0_54 = arith.constant 0 : index
    %c24_55 = arith.constant 24 : index
    %105 = vector.load %arg6[%c0_54, %c24_55] : memref<8x32xbf16, #tpu.memory_space<vmem>>, vector<8x8xbf16>
    tpu.vector_store %arg6[%c0_54, %c24_55], %104 {strides = array<i32>} : memref<8x32xbf16, #tpu.memory_space<vmem>>, vector<8x8xbf16>,
    %c0_56 = arith.constant 0 : index
    %c0_57 = arith.constant 0 : index
    %106 = vector.load %arg6[%c0_56, %c0_57] : memref<8x32xbf16, #tpu.memory_space<vmem>>, vector<8x32xbf16>
    %c0_58 = arith.constant 0 : index
    %c0_59 = arith.constant 0 : index
    %107 = vector.load %arg3[%c0_58, %c0_59] : memref<32x32xbf16, #tpu.memory_space<vmem>>, vector<32x32xbf16>
    %cst_60 = arith.constant dense<0.000000e+00> : vector<8x32xf32>
    %108 = tpu.matmul %106, %107, %cst_60 {dimension_numbers = #tpu.dot_dimension_numbers<[1], [0], [0], [1], [0, 0, 1, 1], [], []>} : vector<8x32xbf16>, vector<32x32xbf16>, vector<8x32xf32> -> vector<8x32xf32>
    %c0_61 = arith.constant 0 : index
    %c0_62 = arith.constant 0 : index
    %109 = vector.load %arg4[%c0_61, %c0_62] : memref<1x32xf32, #tpu.memory_space<vmem>>, vector<1x32xf32>
    %110 = vector.broadcast %109 : vector<1x32xf32> to vector<8x32xf32>
    %111 = arith.addf %108, %110 : vector<8x32xf32>
    %112 = arith.truncf %111 : vector<8x32xf32> to vector<8x32xbf16>
    %c0_63 = arith.constant 0 : index
    %c0_64 = arith.constant 0 : index
    %c0_65 = arith.constant 0 : index
    %113 = vector.load %arg5[%c0_63, %c0_64, %c0_65] : memref<1x8x32xbf16, #tpu.memory_space<vmem>>, vector<1x8x32xbf16>
    %114 = vector.shape_cast %113 : vector<1x8x32xbf16> to vector<8x32xbf16>
    %115 = vector.shape_cast %112 : vector<8x32xbf16> to vector<1x8x32xbf16>
    tpu.vector_store %arg5[%c0_63, %c0_64, %c0_65], %115 {strides = array<i32>} : memref<1x8x32xbf16, #tpu.memory_space<vmem>>, vector<1x8x32xbf16>,
    return
  }
  func.func @transform_0(%arg0: i32) -> (i32, i32, i32) {
    %c0_i32 = arith.constant 0 : i32
    %c0_i32_0 = arith.constant 0 : i32
    %c0_i32_1 = arith.constant 0 : i32
    return %arg0, %c0_i32, %c0_i32_0 : i32, i32, i32
  }
  func.func @transform_1(%arg0: i32) -> (i32, i32, i32) {
    %c0_i32 = arith.constant 0 : i32
    %c0_i32_0 = arith.constant 0 : i32
    %c0_i32_1 = arith.constant 0 : i32
    return %arg0, %c0_i32, %c0_i32_0 : i32, i32, i32
  }
  func.func @transform_2(%arg0: i32) -> (i32, i32) {
    %c0_i32 = arith.constant 0 : i32
    %c0_i32_0 = arith.constant 0 : i32
    %c0_i32_1 = arith.constant 0 : i32
    return %c0_i32, %c0_i32_0 : i32, i32
  }
  func.func @transform_3(%arg0: i32) -> (i32, i32) {
    %c0_i32 = arith.constant 0 : i32
    %c0_i32_0 = arith.constant 0 : i32
    %c0_i32_1 = arith.constant 0 : i32
    return %c0_i32, %c0_i32_0 : i32, i32
  }
  func.func @transform_4(%arg0: i32) -> (i32, i32, i32) {
    %c0_i32 = arith.constant 0 : i32
    %c0_i32_0 = arith.constant 0 : i32
    %c0_i32_1 = arith.constant 0 : i32
    return %arg0, %c0_i32, %c0_i32_0 : i32, i32, i32
  }
}

module attributes {stable_mosaic.version = 11 : i64} {
  func.func @_linear_bias_kernel(%arg0: i32, %arg1: i32, %arg2: i32, %arg3: memref<16x32xbf16, #tpu.memory_space<vmem>>, %arg4: memref<32x64xbf16, #tpu.memory_space<vmem>>, %arg5: memref<1x64xf32, #tpu.memory_space<vmem>>, %arg6: memref<16x64xbf16, #tpu.memory_space<vmem>>, %arg7: memref<16x64xf32, #tpu.memory_space<vmem>>) attributes {dimension_semantics = [#tpu.dimension_semantics<parallel>, #tpu.dimension_semantics<parallel>, #tpu.dimension_semantics<arbitrary>], iteration_bounds = array<i64: 1, 1, 1>, scalar_prefetch = 0 : i64, scratch_operands = 1 : i64, tpu.core_type = #tpu.core_type<tc>, window_params = [{transform_indices = @transform_0, window_bounds = array<i64: 16, 32>}, {transform_indices = @transform_1, window_bounds = array<i64: 32, 64>}, {transform_indices = @transform_2, window_bounds = array<i64: 1, 64>}, {transform_indices = @transform_3, window_bounds = array<i64: 16, 64>}]} {
    %c0_i32 = arith.constant 0 : i32
    %0 = arith.cmpi eq, %arg2, %c0_i32 : i32
    %1 = arith.extui %0 : i1 to i32
    %c0_i32_0 = arith.constant 0 : i32
    %2 = arith.cmpi ne, %1, %c0_i32_0 : i32
    scf.if %2 {
      %cst_10 = arith.constant 0.000000e+00 : f32
      %12 = vector.broadcast %cst_10 : f32 to vector<16x64xf32>
      %c0_11 = arith.constant 0 : index
      %c0_12 = arith.constant 0 : index
      %13 = vector.load %arg7[%c0_11, %c0_12] : memref<16x64xf32, #tpu.memory_space<vmem>>, vector<16x64xf32>
      tpu.vector_store %arg7[%c0_11, %c0_12], %12 {strides = array<i32>} : memref<16x64xf32, #tpu.memory_space<vmem>>, vector<16x64xf32>,
    } else {
    }
    %c0 = arith.constant 0 : index
    %c0_1 = arith.constant 0 : index
    %3 = vector.load %arg7[%c0, %c0_1] : memref<16x64xf32, #tpu.memory_space<vmem>>, vector<16x64xf32>
    %c0_2 = arith.constant 0 : index
    %c0_3 = arith.constant 0 : index
    %4 = vector.load %arg3[%c0_2, %c0_3] : memref<16x32xbf16, #tpu.memory_space<vmem>>, vector<16x32xbf16>
    %c0_4 = arith.constant 0 : index
    %c0_5 = arith.constant 0 : index
    %5 = vector.load %arg4[%c0_4, %c0_5] : memref<32x64xbf16, #tpu.memory_space<vmem>>, vector<32x64xbf16>
    %cst = arith.constant dense<0.000000e+00> : vector<16x64xf32>
    %6 = tpu.matmul %4, %5, %cst {dimension_numbers = #tpu.dot_dimension_numbers<[1], [0], [0], [1], [0, 0, 1, 1], [], []>} : vector<16x32xbf16>, vector<32x64xbf16>, vector<16x64xf32> -> vector<16x64xf32>
    %7 = arith.addf %3, %6 : vector<16x64xf32>
    %c0_6 = arith.constant 0 : index
    %c0_7 = arith.constant 0 : index
    %8 = vector.load %arg7[%c0_6, %c0_7] : memref<16x64xf32, #tpu.memory_space<vmem>>, vector<16x64xf32>
    tpu.vector_store %arg7[%c0_6, %c0_7], %7 {strides = array<i32>} : memref<16x64xf32, #tpu.memory_space<vmem>>, vector<16x64xf32>,
    %c0_i32_8 = arith.constant 0 : i32
    %9 = arith.cmpi eq, %arg2, %c0_i32_8 : i32
    %10 = arith.extui %9 : i1 to i32
    %c0_i32_9 = arith.constant 0 : i32
    %11 = arith.cmpi ne, %10, %c0_i32_9 : i32
    scf.if %11 {
      %c0_10 = arith.constant 0 : index
      %c0_11 = arith.constant 0 : index
      %12 = vector.load %arg7[%c0_10, %c0_11] : memref<16x64xf32, #tpu.memory_space<vmem>>, vector<16x64xf32>
      %c0_12 = arith.constant 0 : index
      %c0_13 = arith.constant 0 : index
      %13 = vector.load %arg5[%c0_12, %c0_13] : memref<1x64xf32, #tpu.memory_space<vmem>>, vector<1x64xf32>
      %14 = vector.broadcast %13 : vector<1x64xf32> to vector<16x64xf32>
      %15 = arith.addf %12, %14 : vector<16x64xf32>
      %cst_14 = arith.constant 5.000000e-01 : f32
      %16 = vector.broadcast %cst_14 : f32 to vector<16x64xf32>
      %17 = arith.mulf %16, %15 : vector<16x64xf32>
      %cst_15 = arith.constant 4.471500e-02 : f32
      %18 = vector.broadcast %cst_15 : f32 to vector<16x64xf32>
      %19 = arith.mulf %18, %15 : vector<16x64xf32>
      %20 = arith.mulf %19, %15 : vector<16x64xf32>
      %21 = arith.mulf %20, %15 : vector<16x64xf32>
      %22 = arith.addf %15, %21 : vector<16x64xf32>
      %cst_16 = arith.constant 0.797884583 : f32
      %23 = vector.broadcast %cst_16 : f32 to vector<16x64xf32>
      %24 = arith.mulf %23, %22 : vector<16x64xf32>
      %25 = math.tanh %24 : vector<16x64xf32>
      %cst_17 = arith.constant 1.000000e+00 : f32
      %26 = vector.broadcast %cst_17 : f32 to vector<16x64xf32>
      %27 = arith.addf %26, %25 : vector<16x64xf32>
      %28 = arith.mulf %17, %27 : vector<16x64xf32>
      %29 = arith.truncf %28 : vector<16x64xf32> to vector<16x64xbf16>
      %c0_18 = arith.constant 0 : index
      %c0_19 = arith.constant 0 : index
      %30 = vector.load %arg6[%c0_18, %c0_19] : memref<16x64xbf16, #tpu.memory_space<vmem>>, vector<16x64xbf16>
      tpu.vector_store %arg6[%c0_18, %c0_19], %29 {strides = array<i32>} : memref<16x64xbf16, #tpu.memory_space<vmem>>, vector<16x64xbf16>,
    } else {
    }
    return
  }
  func.func @transform_0(%arg0: i32, %arg1: i32, %arg2: i32) -> (i32, i32) {
    %c0_i32 = arith.constant 0 : i32
    return %arg0, %arg2 : i32, i32
  }
  func.func @transform_1(%arg0: i32, %arg1: i32, %arg2: i32) -> (i32, i32) {
    %c0_i32 = arith.constant 0 : i32
    return %arg2, %arg1 : i32, i32
  }
  func.func @transform_2(%arg0: i32, %arg1: i32, %arg2: i32) -> (i32, i32) {
    %c0_i32 = arith.constant 0 : i32
    %c0_i32_0 = arith.constant 0 : i32
    return %c0_i32, %arg1 : i32, i32
  }
  func.func @transform_3(%arg0: i32, %arg1: i32, %arg2: i32) -> (i32, i32) {
    %c0_i32 = arith.constant 0 : i32
    return %arg0, %arg1 : i32, i32
  }
}

module attributes {stable_mosaic.version = 11 : i64} {
  func.func @_linear_bias_kernel(%arg0: i32, %arg1: i32, %arg2: i32, %arg3: memref<16x64xbf16, #tpu.memory_space<vmem>>, %arg4: memref<64x32xbf16, #tpu.memory_space<vmem>>, %arg5: memref<1x32xf32, #tpu.memory_space<vmem>>, %arg6: memref<16x32xbf16, #tpu.memory_space<vmem>>, %arg7: memref<16x32xf32, #tpu.memory_space<vmem>>) attributes {dimension_semantics = [#tpu.dimension_semantics<parallel>, #tpu.dimension_semantics<parallel>, #tpu.dimension_semantics<arbitrary>], iteration_bounds = array<i64: 1, 1, 1>, scalar_prefetch = 0 : i64, scratch_operands = 1 : i64, tpu.core_type = #tpu.core_type<tc>, window_params = [{transform_indices = @transform_0, window_bounds = array<i64: 16, 64>}, {transform_indices = @transform_1, window_bounds = array<i64: 64, 32>}, {transform_indices = @transform_2, window_bounds = array<i64: 1, 32>}, {transform_indices = @transform_3, window_bounds = array<i64: 16, 32>}]} {
    %c0_i32 = arith.constant 0 : i32
    %0 = arith.cmpi eq, %arg2, %c0_i32 : i32
    %1 = arith.extui %0 : i1 to i32
    %c0_i32_0 = arith.constant 0 : i32
    %2 = arith.cmpi ne, %1, %c0_i32_0 : i32
    scf.if %2 {
      %cst_10 = arith.constant 0.000000e+00 : f32
      %12 = vector.broadcast %cst_10 : f32 to vector<16x32xf32>
      %c0_11 = arith.constant 0 : index
      %c0_12 = arith.constant 0 : index
      %13 = vector.load %arg7[%c0_11, %c0_12] : memref<16x32xf32, #tpu.memory_space<vmem>>, vector<16x32xf32>
      tpu.vector_store %arg7[%c0_11, %c0_12], %12 {strides = array<i32>} : memref<16x32xf32, #tpu.memory_space<vmem>>, vector<16x32xf32>,
    } else {
    }
    %c0 = arith.constant 0 : index
    %c0_1 = arith.constant 0 : index
    %3 = vector.load %arg7[%c0, %c0_1] : memref<16x32xf32, #tpu.memory_space<vmem>>, vector<16x32xf32>
    %c0_2 = arith.constant 0 : index
    %c0_3 = arith.constant 0 : index
    %4 = vector.load %arg3[%c0_2, %c0_3] : memref<16x64xbf16, #tpu.memory_space<vmem>>, vector<16x64xbf16>
    %c0_4 = arith.constant 0 : index
    %c0_5 = arith.constant 0 : index
    %5 = vector.load %arg4[%c0_4, %c0_5] : memref<64x32xbf16, #tpu.memory_space<vmem>>, vector<64x32xbf16>
    %cst = arith.constant dense<0.000000e+00> : vector<16x32xf32>
    %6 = tpu.matmul %4, %5, %cst {dimension_numbers = #tpu.dot_dimension_numbers<[1], [0], [0], [1], [0, 0, 1, 1], [], []>} : vector<16x64xbf16>, vector<64x32xbf16>, vector<16x32xf32> -> vector<16x32xf32>
    %7 = arith.addf %3, %6 : vector<16x32xf32>
    %c0_6 = arith.constant 0 : index
    %c0_7 = arith.constant 0 : index
    %8 = vector.load %arg7[%c0_6, %c0_7] : memref<16x32xf32, #tpu.memory_space<vmem>>, vector<16x32xf32>
    tpu.vector_store %arg7[%c0_6, %c0_7], %7 {strides = array<i32>} : memref<16x32xf32, #tpu.memory_space<vmem>>, vector<16x32xf32>,
    %c0_i32_8 = arith.constant 0 : i32
    %9 = arith.cmpi eq, %arg2, %c0_i32_8 : i32
    %10 = arith.extui %9 : i1 to i32
    %c0_i32_9 = arith.constant 0 : i32
    %11 = arith.cmpi ne, %10, %c0_i32_9 : i32
    scf.if %11 {
      %c0_10 = arith.constant 0 : index
      %c0_11 = arith.constant 0 : index
      %12 = vector.load %arg7[%c0_10, %c0_11] : memref<16x32xf32, #tpu.memory_space<vmem>>, vector<16x32xf32>
      %c0_12 = arith.constant 0 : index
      %c0_13 = arith.constant 0 : index
      %13 = vector.load %arg5[%c0_12, %c0_13] : memref<1x32xf32, #tpu.memory_space<vmem>>, vector<1x32xf32>
      %14 = vector.broadcast %13 : vector<1x32xf32> to vector<16x32xf32>
      %15 = arith.addf %12, %14 : vector<16x32xf32>
      %16 = arith.truncf %15 : vector<16x32xf32> to vector<16x32xbf16>
      %c0_14 = arith.constant 0 : index
      %c0_15 = arith.constant 0 : index
      %17 = vector.load %arg6[%c0_14, %c0_15] : memref<16x32xbf16, #tpu.memory_space<vmem>>, vector<16x32xbf16>
      tpu.vector_store %arg6[%c0_14, %c0_15], %16 {strides = array<i32>} : memref<16x32xbf16, #tpu.memory_space<vmem>>, vector<16x32xbf16>,
    } else {
    }
    return
  }
  func.func @transform_0(%arg0: i32, %arg1: i32, %arg2: i32) -> (i32, i32) {
    %c0_i32 = arith.constant 0 : i32
    return %arg0, %arg2 : i32, i32
  }
  func.func @transform_1(%arg0: i32, %arg1: i32, %arg2: i32) -> (i32, i32) {
    %c0_i32 = arith.constant 0 : i32
    return %arg2, %arg1 : i32, i32
  }
  func.func @transform_2(%arg0: i32, %arg1: i32, %arg2: i32) -> (i32, i32) {
    %c0_i32 = arith.constant 0 : i32
    %c0_i32_0 = arith.constant 0 : i32
    return %c0_i32, %arg1 : i32, i32
  }
  func.func @transform_3(%arg0: i32, %arg1: i32, %arg2: i32) -> (i32, i32) {
    %c0_i32 = arith.constant 0 : i32
    return %arg0, %arg1 : i32, i32
  }
}

module attributes {stable_mosaic.version = 11 : i64} {
  func.func @_linear_bias_kernel(%arg0: i32, %arg1: i32, %arg2: i32, %arg3: memref<6x32xbf16, #tpu.memory_space<vmem>>, %arg4: memref<32x32xbf16, #tpu.memory_space<vmem>>, %arg5: memref<1x32xf32, #tpu.memory_space<vmem>>, %arg6: memref<6x32xbf16, #tpu.memory_space<vmem>>, %arg7: memref<6x32xf32, #tpu.memory_space<vmem>>) attributes {dimension_semantics = [#tpu.dimension_semantics<parallel>, #tpu.dimension_semantics<parallel>, #tpu.dimension_semantics<arbitrary>], iteration_bounds = array<i64: 1, 1, 1>, scalar_prefetch = 0 : i64, scratch_operands = 1 : i64, tpu.core_type = #tpu.core_type<tc>, window_params = [{transform_indices = @transform_0, window_bounds = array<i64: 6, 32>}, {transform_indices = @transform_1, window_bounds = array<i64: 32, 32>}, {transform_indices = @transform_2, window_bounds = array<i64: 1, 32>}, {transform_indices = @transform_3, window_bounds = array<i64: 6, 32>}]} {
    %c0_i32 = arith.constant 0 : i32
    %0 = arith.cmpi eq, %arg2, %c0_i32 : i32
    %1 = arith.extui %0 : i1 to i32
    %c0_i32_0 = arith.constant 0 : i32
    %2 = arith.cmpi ne, %1, %c0_i32_0 : i32
    scf.if %2 {
      %cst_10 = arith.constant 0.000000e+00 : f32
      %12 = vector.broadcast %cst_10 : f32 to vector<6x32xf32>
      %c0_11 = arith.constant 0 : index
      %c0_12 = arith.constant 0 : index
      %13 = vector.load %arg7[%c0_11, %c0_12] : memref<6x32xf32, #tpu.memory_space<vmem>>, vector<6x32xf32>
      tpu.vector_store %arg7[%c0_11, %c0_12], %12 {strides = array<i32>} : memref<6x32xf32, #tpu.memory_space<vmem>>, vector<6x32xf32>,
    } else {
    }
    %c0 = arith.constant 0 : index
    %c0_1 = arith.constant 0 : index
    %3 = vector.load %arg7[%c0, %c0_1] : memref<6x32xf32, #tpu.memory_space<vmem>>, vector<6x32xf32>
    %c0_2 = arith.constant 0 : index
    %c0_3 = arith.constant 0 : index
    %4 = vector.load %arg3[%c0_2, %c0_3] : memref<6x32xbf16, #tpu.memory_space<vmem>>, vector<6x32xbf16>
    %c0_4 = arith.constant 0 : index
    %c0_5 = arith.constant 0 : index
    %5 = vector.load %arg4[%c0_4, %c0_5] : memref<32x32xbf16, #tpu.memory_space<vmem>>, vector<32x32xbf16>
    %cst = arith.constant dense<0.000000e+00> : vector<6x32xf32>
    %6 = tpu.matmul %4, %5, %cst {dimension_numbers = #tpu.dot_dimension_numbers<[1], [0], [0], [1], [0, 0, 1, 1], [], []>} : vector<6x32xbf16>, vector<32x32xbf16>, vector<6x32xf32> -> vector<6x32xf32>
    %7 = arith.addf %3, %6 : vector<6x32xf32>
    %c0_6 = arith.constant 0 : index
    %c0_7 = arith.constant 0 : index
    %8 = vector.load %arg7[%c0_6, %c0_7] : memref<6x32xf32, #tpu.memory_space<vmem>>, vector<6x32xf32>
    tpu.vector_store %arg7[%c0_6, %c0_7], %7 {strides = array<i32>} : memref<6x32xf32, #tpu.memory_space<vmem>>, vector<6x32xf32>,
    %c0_i32_8 = arith.constant 0 : i32
    %9 = arith.cmpi eq, %arg2, %c0_i32_8 : i32
    %10 = arith.extui %9 : i1 to i32
    %c0_i32_9 = arith.constant 0 : i32
    %11 = arith.cmpi ne, %10, %c0_i32_9 : i32
    scf.if %11 {
      %c0_10 = arith.constant 0 : index
      %c0_11 = arith.constant 0 : index
      %12 = vector.load %arg7[%c0_10, %c0_11] : memref<6x32xf32, #tpu.memory_space<vmem>>, vector<6x32xf32>
      %c0_12 = arith.constant 0 : index
      %c0_13 = arith.constant 0 : index
      %13 = vector.load %arg5[%c0_12, %c0_13] : memref<1x32xf32, #tpu.memory_space<vmem>>, vector<1x32xf32>
      %14 = vector.broadcast %13 : vector<1x32xf32> to vector<6x32xf32>
      %15 = arith.addf %12, %14 : vector<6x32xf32>
      %cst_14 = arith.constant 5.000000e-01 : f32
      %16 = vector.broadcast %cst_14 : f32 to vector<6x32xf32>
      %17 = arith.mulf %16, %15 : vector<6x32xf32>
      %cst_15 = arith.constant 4.471500e-02 : f32
      %18 = vector.broadcast %cst_15 : f32 to vector<6x32xf32>
      %19 = arith.mulf %18, %15 : vector<6x32xf32>
      %20 = arith.mulf %19, %15 : vector<6x32xf32>
      %21 = arith.mulf %20, %15 : vector<6x32xf32>
      %22 = arith.addf %15, %21 : vector<6x32xf32>
      %cst_16 = arith.constant 0.797884583 : f32
      %23 = vector.broadcast %cst_16 : f32 to vector<6x32xf32>
      %24 = arith.mulf %23, %22 : vector<6x32xf32>
      %25 = math.tanh %24 : vector<6x32xf32>
      %cst_17 = arith.constant 1.000000e+00 : f32
      %26 = vector.broadcast %cst_17 : f32 to vector<6x32xf32>
      %27 = arith.addf %26, %25 : vector<6x32xf32>
      %28 = arith.mulf %17, %27 : vector<6x32xf32>
      %29 = arith.truncf %28 : vector<6x32xf32> to vector<6x32xbf16>
      %c0_18 = arith.constant 0 : index
      %c0_19 = arith.constant 0 : index
      %30 = vector.load %arg6[%c0_18, %c0_19] : memref<6x32xbf16, #tpu.memory_space<vmem>>, vector<6x32xbf16>
      tpu.vector_store %arg6[%c0_18, %c0_19], %29 {strides = array<i32>} : memref<6x32xbf16, #tpu.memory_space<vmem>>, vector<6x32xbf16>,
    } else {
    }
    return
  }
  func.func @transform_0(%arg0: i32, %arg1: i32, %arg2: i32) -> (i32, i32) {
    %c0_i32 = arith.constant 0 : i32
    return %arg0, %arg2 : i32, i32
  }
  func.func @transform_1(%arg0: i32, %arg1: i32, %arg2: i32) -> (i32, i32) {
    %c0_i32 = arith.constant 0 : i32
    return %arg2, %arg1 : i32, i32
  }
  func.func @transform_2(%arg0: i32, %arg1: i32, %arg2: i32) -> (i32, i32) {
    %c0_i32 = arith.constant 0 : i32
    %c0_i32_0 = arith.constant 0 : i32
    return %c0_i32, %arg1 : i32, i32
  }
  func.func @transform_3(%arg0: i32, %arg1: i32, %arg2: i32) -> (i32, i32) {
    %c0_i32 = arith.constant 0 : i32
    return %arg0, %arg1 : i32, i32
  }
}

module attributes {stable_mosaic.version = 11 : i64} {
  func.func @_layernorm_kernel(%arg0: i32, %arg1: memref<6x32xbf16, #tpu.memory_space<vmem>>, %arg2: memref<1x32xf32, #tpu.memory_space<vmem>>, %arg3: memref<1x32xf32, #tpu.memory_space<vmem>>, %arg4: memref<6x32xbf16, #tpu.memory_space<vmem>>) attributes {dimension_semantics = [#tpu.dimension_semantics<parallel>], iteration_bounds = array<i64: 1>, scalar_prefetch = 0 : i64, scratch_operands = 0 : i64, tpu.core_type = #tpu.core_type<tc>, window_params = [{transform_indices = @transform_0, window_bounds = array<i64: 6, 32>}, {pipeline_mode = #tpu.pipeline_mode<synchronous>, transform_indices = @transform_1, window_bounds = array<i64: 1, 32>}, {pipeline_mode = #tpu.pipeline_mode<synchronous>, transform_indices = @transform_2, window_bounds = array<i64: 1, 32>}, {transform_indices = @transform_3, window_bounds = array<i64: 6, 32>}]} {
    %c0 = arith.constant 0 : index
    %c0_0 = arith.constant 0 : index
    %0 = vector.load %arg1[%c0, %c0_0] : memref<6x32xbf16, #tpu.memory_space<vmem>>, vector<6x32xbf16>
    %1 = arith.extf %0 : vector<6x32xbf16> to vector<6x32xf32>
    %cst = arith.constant dense<0.000000e+00> : vector<6xf32>
    %2 = vector.multi_reduction <add>, %1, %cst [1] : vector<6x32xf32> to vector<6xf32>
    %3 = vector.shape_cast %2 : vector<6xf32> to vector<6x1xf32>
    %cst_1 = arith.constant 3.200000e+01 : f32
    %4 = vector.broadcast %cst_1 : f32 to vector<6x1xf32>
    %5 = arith.divf %3, %4 : vector<6x1xf32>
    %6 = vector.broadcast %5 : vector<6x1xf32> to vector<6x32xf32>
    %7 = arith.subf %1, %6 : vector<6x32xf32>
    %8 = arith.mulf %7, %7 : vector<6x32xf32>
    %cst_2 = arith.constant dense<0.000000e+00> : vector<6xf32>
    %9 = vector.multi_reduction <add>, %8, %cst_2 [1] : vector<6x32xf32> to vector<6xf32>
    %10 = vector.shape_cast %9 : vector<6xf32> to vector<6x1xf32>
    %cst_3 = arith.constant 3.200000e+01 : f32
    %11 = vector.broadcast %cst_3 : f32 to vector<6x1xf32>
    %12 = arith.divf %10, %11 : vector<6x1xf32>
    %13 = vector.broadcast %5 : vector<6x1xf32> to vector<6x32xf32>
    %14 = arith.subf %1, %13 : vector<6x32xf32>
    %cst_4 = arith.constant 9.99999996E-13 : f32
    %15 = vector.broadcast %cst_4 : f32 to vector<6x1xf32>
    %16 = arith.addf %12, %15 : vector<6x1xf32>
    %17 = math.rsqrt %16 : vector<6x1xf32>
    %18 = vector.broadcast %17 : vector<6x1xf32> to vector<6x32xf32>
    %19 = arith.mulf %14, %18 : vector<6x32xf32>
    %c0_5 = arith.constant 0 : index
    %c0_6 = arith.constant 0 : index
    %20 = vector.load %arg2[%c0_5, %c0_6] : memref<1x32xf32, #tpu.memory_space<vmem>>, vector<1x32xf32>
    %21 = vector.broadcast %20 : vector<1x32xf32> to vector<6x32xf32>
    %22 = arith.mulf %19, %21 : vector<6x32xf32>
    %c0_7 = arith.constant 0 : index
    %c0_8 = arith.constant 0 : index
    %23 = vector.load %arg3[%c0_7, %c0_8] : memref<1x32xf32, #tpu.memory_space<vmem>>, vector<1x32xf32>
    %24 = vector.broadcast %23 : vector<1x32xf32> to vector<6x32xf32>
    %25 = arith.addf %22, %24 : vector<6x32xf32>
    %26 = arith.truncf %25 : vector<6x32xf32> to vector<6x32xbf16>
    %c0_9 = arith.constant 0 : index
    %c0_10 = arith.constant 0 : index
    %27 = vector.load %arg4[%c0_9, %c0_10] : memref<6x32xbf16, #tpu.memory_space<vmem>>, vector<6x32xbf16>
    tpu.vector_store %arg4[%c0_9, %c0_10], %26 {strides = array<i32>} : memref<6x32xbf16, #tpu.memory_space<vmem>>, vector<6x32xbf16>,
    return
  }
  func.func @transform_0(%arg0: i32) -> (i32, i32) {
    %c0_i32 = arith.constant 0 : i32
    %c0_i32_0 = arith.constant 0 : i32
    return %arg0, %c0_i32 : i32, i32
  }
  func.func @transform_1(%arg0: i32) -> (i32, i32) {
    %c0_i32 = arith.constant 0 : i32
    %c0_i32_0 = arith.constant 0 : i32
    %c0_i32_1 = arith.constant 0 : i32
    return %c0_i32, %c0_i32_0 : i32, i32
  }
  func.func @transform_2(%arg0: i32) -> (i32, i32) {
    %c0_i32 = arith.constant 0 : i32
    %c0_i32_0 = arith.constant 0 : i32
    %c0_i32_1 = arith.constant 0 : i32
    return %c0_i32, %c0_i32_0 : i32, i32
  }
  func.func @transform_3(%arg0: i32) -> (i32, i32) {
    %c0_i32 = arith.constant 0 : i32
    %c0_i32_0 = arith.constant 0 : i32
    return %arg0, %c0_i32 : i32, i32
  }
}

module attributes {stable_mosaic.version = 11 : i64} {
  func.func @_linear_nobias_kernel(%arg0: i32, %arg1: i32, %arg2: i32, %arg3: memref<6x32xbf16, #tpu.memory_space<vmem>>, %arg4: memref<32x24xbf16, #tpu.memory_space<vmem>>, %arg5: memref<6x24xbf16, #tpu.memory_space<vmem>>, %arg6: memref<6x24xf32, #tpu.memory_space<vmem>>) attributes {dimension_semantics = [#tpu.dimension_semantics<parallel>, #tpu.dimension_semantics<parallel>, #tpu.dimension_semantics<arbitrary>], iteration_bounds = array<i64: 1, 1, 1>, scalar_prefetch = 0 : i64, scratch_operands = 1 : i64, tpu.core_type = #tpu.core_type<tc>, window_params = [{transform_indices = @transform_0, window_bounds = array<i64: 6, 32>}, {transform_indices = @transform_1, window_bounds = array<i64: 32, 24>}, {transform_indices = @transform_2, window_bounds = array<i64: 6, 24>}]} {
    %c0_i32 = arith.constant 0 : i32
    %0 = arith.cmpi eq, %arg2, %c0_i32 : i32
    %1 = arith.extui %0 : i1 to i32
    %c0_i32_0 = arith.constant 0 : i32
    %2 = arith.cmpi ne, %1, %c0_i32_0 : i32
    scf.if %2 {
      %cst_10 = arith.constant 0.000000e+00 : f32
      %12 = vector.broadcast %cst_10 : f32 to vector<6x24xf32>
      %c0_11 = arith.constant 0 : index
      %c0_12 = arith.constant 0 : index
      %13 = vector.load %arg6[%c0_11, %c0_12] : memref<6x24xf32, #tpu.memory_space<vmem>>, vector<6x24xf32>
      tpu.vector_store %arg6[%c0_11, %c0_12], %12 {strides = array<i32>} : memref<6x24xf32, #tpu.memory_space<vmem>>, vector<6x24xf32>,
    } else {
    }
    %c0 = arith.constant 0 : index
    %c0_1 = arith.constant 0 : index
    %3 = vector.load %arg6[%c0, %c0_1] : memref<6x24xf32, #tpu.memory_space<vmem>>, vector<6x24xf32>
    %c0_2 = arith.constant 0 : index
    %c0_3 = arith.constant 0 : index
    %4 = vector.load %arg3[%c0_2, %c0_3] : memref<6x32xbf16, #tpu.memory_space<vmem>>, vector<6x32xbf16>
    %c0_4 = arith.constant 0 : index
    %c0_5 = arith.constant 0 : index
    %5 = vector.load %arg4[%c0_4, %c0_5] : memref<32x24xbf16, #tpu.memory_space<vmem>>, vector<32x24xbf16>
    %cst = arith.constant dense<0.000000e+00> : vector<6x24xf32>
    %6 = tpu.matmul %4, %5, %cst {dimension_numbers = #tpu.dot_dimension_numbers<[1], [0], [0], [1], [0, 0, 1, 1], [], []>} : vector<6x32xbf16>, vector<32x24xbf16>, vector<6x24xf32> -> vector<6x24xf32>
    %7 = arith.addf %3, %6 : vector<6x24xf32>
    %c0_6 = arith.constant 0 : index
    %c0_7 = arith.constant 0 : index
    %8 = vector.load %arg6[%c0_6, %c0_7] : memref<6x24xf32, #tpu.memory_space<vmem>>, vector<6x24xf32>
    tpu.vector_store %arg6[%c0_6, %c0_7], %7 {strides = array<i32>} : memref<6x24xf32, #tpu.memory_space<vmem>>, vector<6x24xf32>,
    %c0_i32_8 = arith.constant 0 : i32
    %9 = arith.cmpi eq, %arg2, %c0_i32_8 : i32
    %10 = arith.extui %9 : i1 to i32
    %c0_i32_9 = arith.constant 0 : i32
    %11 = arith.cmpi ne, %10, %c0_i32_9 : i32
    scf.if %11 {
      %c0_10 = arith.constant 0 : index
      %c0_11 = arith.constant 0 : index
      %12 = vector.load %arg6[%c0_10, %c0_11] : memref<6x24xf32, #tpu.memory_space<vmem>>, vector<6x24xf32>
      %13 = arith.truncf %12 : vector<6x24xf32> to vector<6x24xbf16>
      %c0_12 = arith.constant 0 : index
      %c0_13 = arith.constant 0 : index
      %14 = vector.load %arg5[%c0_12, %c0_13] : memref<6x24xbf16, #tpu.memory_space<vmem>>, vector<6x24xbf16>
      tpu.vector_store %arg5[%c0_12, %c0_13], %13 {strides = array<i32>} : memref<6x24xbf16, #tpu.memory_space<vmem>>, vector<6x24xbf16>,
    } else {
    }
    return
  }
  func.func @transform_0(%arg0: i32, %arg1: i32, %arg2: i32) -> (i32, i32) {
    %c0_i32 = arith.constant 0 : i32
    return %arg0, %arg2 : i32, i32
  }
  func.func @transform_1(%arg0: i32, %arg1: i32, %arg2: i32) -> (i32, i32) {
    %c0_i32 = arith.constant 0 : i32
    return %arg2, %arg1 : i32, i32
  }
  func.func @transform_2(%arg0: i32, %arg1: i32, %arg2: i32) -> (i32, i32) {
    %c0_i32 = arith.constant 0 : i32
    return %arg0, %arg1 : i32, i32
  }
}

module attributes {stable_mosaic.version = 11 : i64} {
  func.func @_linear_bias_kernel(%arg0: i32, %arg1: i32, %arg2: i32, %arg3: memref<6x24xbf16, #tpu.memory_space<vmem>>, %arg4: memref<24x64xbf16, #tpu.memory_space<vmem>>, %arg5: memref<1x64xf32, #tpu.memory_space<vmem>>, %arg6: memref<6x64xf32, #tpu.memory_space<vmem>>, %arg7: memref<6x64xf32, #tpu.memory_space<vmem>>) attributes {dimension_semantics = [#tpu.dimension_semantics<parallel>, #tpu.dimension_semantics<parallel>, #tpu.dimension_semantics<arbitrary>], iteration_bounds = array<i64: 1, 1, 1>, scalar_prefetch = 0 : i64, scratch_operands = 1 : i64, tpu.core_type = #tpu.core_type<tc>, window_params = [{transform_indices = @transform_0, window_bounds = array<i64: 6, 24>}, {transform_indices = @transform_1, window_bounds = array<i64: 24, 64>}, {transform_indices = @transform_2, window_bounds = array<i64: 1, 64>}, {transform_indices = @transform_3, window_bounds = array<i64: 6, 64>}]} {
    %c0_i32 = arith.constant 0 : i32
    %0 = arith.cmpi eq, %arg2, %c0_i32 : i32
    %1 = arith.extui %0 : i1 to i32
    %c0_i32_0 = arith.constant 0 : i32
    %2 = arith.cmpi ne, %1, %c0_i32_0 : i32
    scf.if %2 {
      %cst_10 = arith.constant 0.000000e+00 : f32
      %12 = vector.broadcast %cst_10 : f32 to vector<6x64xf32>
      %c0_11 = arith.constant 0 : index
      %c0_12 = arith.constant 0 : index
      %13 = vector.load %arg7[%c0_11, %c0_12] : memref<6x64xf32, #tpu.memory_space<vmem>>, vector<6x64xf32>
      tpu.vector_store %arg7[%c0_11, %c0_12], %12 {strides = array<i32>} : memref<6x64xf32, #tpu.memory_space<vmem>>, vector<6x64xf32>,
    } else {
    }
    %c0 = arith.constant 0 : index
    %c0_1 = arith.constant 0 : index
    %3 = vector.load %arg7[%c0, %c0_1] : memref<6x64xf32, #tpu.memory_space<vmem>>, vector<6x64xf32>
    %c0_2 = arith.constant 0 : index
    %c0_3 = arith.constant 0 : index
    %4 = vector.load %arg3[%c0_2, %c0_3] : memref<6x24xbf16, #tpu.memory_space<vmem>>, vector<6x24xbf16>
    %c0_4 = arith.constant 0 : index
    %c0_5 = arith.constant 0 : index
    %5 = vector.load %arg4[%c0_4, %c0_5] : memref<24x64xbf16, #tpu.memory_space<vmem>>, vector<24x64xbf16>
    %cst = arith.constant dense<0.000000e+00> : vector<6x64xf32>
    %6 = tpu.matmul %4, %5, %cst {dimension_numbers = #tpu.dot_dimension_numbers<[1], [0], [0], [1], [0, 0, 1, 1], [], []>} : vector<6x24xbf16>, vector<24x64xbf16>, vector<6x64xf32> -> vector<6x64xf32>
    %7 = arith.addf %3, %6 : vector<6x64xf32>
    %c0_6 = arith.constant 0 : index
    %c0_7 = arith.constant 0 : index
    %8 = vector.load %arg7[%c0_6, %c0_7] : memref<6x64xf32, #tpu.memory_space<vmem>>, vector<6x64xf32>
    tpu.vector_store %arg7[%c0_6, %c0_7], %7 {strides = array<i32>} : memref<6x64xf32, #tpu.memory_space<vmem>>, vector<6x64xf32>,
    %c0_i32_8 = arith.constant 0 : i32
    %9 = arith.cmpi eq, %arg2, %c0_i32_8 : i32
    %10 = arith.extui %9 : i1 to i32
    %c0_i32_9 = arith.constant 0 : i32
    %11 = arith.cmpi ne, %10, %c0_i32_9 : i32
    scf.if %11 {
      %c0_10 = arith.constant 0 : index
      %c0_11 = arith.constant 0 : index
      %12 = vector.load %arg7[%c0_10, %c0_11] : memref<6x64xf32, #tpu.memory_space<vmem>>, vector<6x64xf32>
      %c0_12 = arith.constant 0 : index
      %c0_13 = arith.constant 0 : index
      %13 = vector.load %arg5[%c0_12, %c0_13] : memref<1x64xf32, #tpu.memory_space<vmem>>, vector<1x64xf32>
      %14 = vector.broadcast %13 : vector<1x64xf32> to vector<6x64xf32>
      %15 = arith.addf %12, %14 : vector<6x64xf32>
      %c0_14 = arith.constant 0 : index
      %c0_15 = arith.constant 0 : index
      %16 = vector.load %arg6[%c0_14, %c0_15] : memref<6x64xf32, #tpu.memory_space<vmem>>, vector<6x64xf32>
      tpu.vector_store %arg6[%c0_14, %c0_15], %15 {strides = array<i32>} : memref<6x64xf32, #tpu.memory_space<vmem>>, vector<6x64xf32>,
    } else {
    }
    return
  }
  func.func @transform_0(%arg0: i32, %arg1: i32, %arg2: i32) -> (i32, i32) {
    %c0_i32 = arith.constant 0 : i32
    return %arg0, %arg2 : i32, i32
  }
  func.func @transform_1(%arg0: i32, %arg1: i32, %arg2: i32) -> (i32, i32) {
    %c0_i32 = arith.constant 0 : i32
    return %arg2, %arg1 : i32, i32
  }
  func.func @transform_2(%arg0: i32, %arg1: i32, %arg2: i32) -> (i32, i32) {
    %c0_i32 = arith.constant 0 : i32
    %c0_i32_0 = arith.constant 0 : i32
    return %c0_i32, %arg1 : i32, i32
  }
  func.func @transform_3(%arg0: i32, %arg1: i32, %arg2: i32) -> (i32, i32) {
    %c0_i32 = arith.constant 0 : i32
    return %arg0, %arg1 : i32, i32
  }
}

module attributes {stable_mosaic.version = 11 : i64} {
  func.func @_linear_bias_kernel(%arg0: i32, %arg1: i32, %arg2: i32, %arg3: memref<2x32xbf16, #tpu.memory_space<vmem>>, %arg4: memref<32x32xbf16, #tpu.memory_space<vmem>>, %arg5: memref<1x32xf32, #tpu.memory_space<vmem>>, %arg6: memref<2x32xbf16, #tpu.memory_space<vmem>>, %arg7: memref<2x32xf32, #tpu.memory_space<vmem>>) attributes {dimension_semantics = [#tpu.dimension_semantics<parallel>, #tpu.dimension_semantics<parallel>, #tpu.dimension_semantics<arbitrary>], iteration_bounds = array<i64: 1, 1, 1>, scalar_prefetch = 0 : i64, scratch_operands = 1 : i64, tpu.core_type = #tpu.core_type<tc>, window_params = [{transform_indices = @transform_0, window_bounds = array<i64: 2, 32>}, {transform_indices = @transform_1, window_bounds = array<i64: 32, 32>}, {transform_indices = @transform_2, window_bounds = array<i64: 1, 32>}, {transform_indices = @transform_3, window_bounds = array<i64: 2, 32>}]} {
    %c0_i32 = arith.constant 0 : i32
    %0 = arith.cmpi eq, %arg2, %c0_i32 : i32
    %1 = arith.extui %0 : i1 to i32
    %c0_i32_0 = arith.constant 0 : i32
    %2 = arith.cmpi ne, %1, %c0_i32_0 : i32
    scf.if %2 {
      %cst_10 = arith.constant 0.000000e+00 : f32
      %12 = vector.broadcast %cst_10 : f32 to vector<2x32xf32>
      %c0_11 = arith.constant 0 : index
      %c0_12 = arith.constant 0 : index
      %13 = vector.load %arg7[%c0_11, %c0_12] : memref<2x32xf32, #tpu.memory_space<vmem>>, vector<2x32xf32>
      tpu.vector_store %arg7[%c0_11, %c0_12], %12 {strides = array<i32>} : memref<2x32xf32, #tpu.memory_space<vmem>>, vector<2x32xf32>,
    } else {
    }
    %c0 = arith.constant 0 : index
    %c0_1 = arith.constant 0 : index
    %3 = vector.load %arg7[%c0, %c0_1] : memref<2x32xf32, #tpu.memory_space<vmem>>, vector<2x32xf32>
    %c0_2 = arith.constant 0 : index
    %c0_3 = arith.constant 0 : index
    %4 = vector.load %arg3[%c0_2, %c0_3] : memref<2x32xbf16, #tpu.memory_space<vmem>>, vector<2x32xbf16>
    %c0_4 = arith.constant 0 : index
    %c0_5 = arith.constant 0 : index
    %5 = vector.load %arg4[%c0_4, %c0_5] : memref<32x32xbf16, #tpu.memory_space<vmem>>, vector<32x32xbf16>
    %cst = arith.constant dense<0.000000e+00> : vector<2x32xf32>
    %6 = tpu.matmul %4, %5, %cst {dimension_numbers = #tpu.dot_dimension_numbers<[1], [0], [0], [1], [0, 0, 1, 1], [], []>} : vector<2x32xbf16>, vector<32x32xbf16>, vector<2x32xf32> -> vector<2x32xf32>
    %7 = arith.addf %3, %6 : vector<2x32xf32>
    %c0_6 = arith.constant 0 : index
    %c0_7 = arith.constant 0 : index
    %8 = vector.load %arg7[%c0_6, %c0_7] : memref<2x32xf32, #tpu.memory_space<vmem>>, vector<2x32xf32>
    tpu.vector_store %arg7[%c0_6, %c0_7], %7 {strides = array<i32>} : memref<2x32xf32, #tpu.memory_space<vmem>>, vector<2x32xf32>,
    %c0_i32_8 = arith.constant 0 : i32
    %9 = arith.cmpi eq, %arg2, %c0_i32_8 : i32
    %10 = arith.extui %9 : i1 to i32
    %c0_i32_9 = arith.constant 0 : i32
    %11 = arith.cmpi ne, %10, %c0_i32_9 : i32
    scf.if %11 {
      %c0_10 = arith.constant 0 : index
      %c0_11 = arith.constant 0 : index
      %12 = vector.load %arg7[%c0_10, %c0_11] : memref<2x32xf32, #tpu.memory_space<vmem>>, vector<2x32xf32>
      %c0_12 = arith.constant 0 : index
      %c0_13 = arith.constant 0 : index
      %13 = vector.load %arg5[%c0_12, %c0_13] : memref<1x32xf32, #tpu.memory_space<vmem>>, vector<1x32xf32>
      %14 = vector.broadcast %13 : vector<1x32xf32> to vector<2x32xf32>
      %15 = arith.addf %12, %14 : vector<2x32xf32>
      %16 = math.tanh %15 : vector<2x32xf32>
      %17 = arith.truncf %16 : vector<2x32xf32> to vector<2x32xbf16>
      %c0_14 = arith.constant 0 : index
      %c0_15 = arith.constant 0 : index
      %18 = vector.load %arg6[%c0_14, %c0_15] : memref<2x32xbf16, #tpu.memory_space<vmem>>, vector<2x32xbf16>
      tpu.vector_store %arg6[%c0_14, %c0_15], %17 {strides = array<i32>} : memref<2x32xbf16, #tpu.memory_space<vmem>>, vector<2x32xbf16>,
    } else {
    }
    return
  }
  func.func @transform_0(%arg0: i32, %arg1: i32, %arg2: i32) -> (i32, i32) {
    %c0_i32 = arith.constant 0 : i32
    return %arg0, %arg2 : i32, i32
  }
  func.func @transform_1(%arg0: i32, %arg1: i32, %arg2: i32) -> (i32, i32) {
    %c0_i32 = arith.constant 0 : i32
    return %arg2, %arg1 : i32, i32
  }
  func.func @transform_2(%arg0: i32, %arg1: i32, %arg2: i32) -> (i32, i32) {
    %c0_i32 = arith.constant 0 : i32
    %c0_i32_0 = arith.constant 0 : i32
    return %c0_i32, %arg1 : i32, i32
  }
  func.func @transform_3(%arg0: i32, %arg1: i32, %arg2: i32) -> (i32, i32) {
    %c0_i32 = arith.constant 0 : i32
    return %arg0, %arg1 : i32, i32
  }
}

module attributes {stable_mosaic.version = 11 : i64} {
  func.func @_linear_bias_kernel(%arg0: i32, %arg1: i32, %arg2: i32, %arg3: memref<2x32xbf16, #tpu.memory_space<vmem>>, %arg4: memref<32x2xbf16, #tpu.memory_space<vmem>>, %arg5: memref<1x2xf32, #tpu.memory_space<vmem>>, %arg6: memref<2x2xf32, #tpu.memory_space<vmem>>, %arg7: memref<2x2xf32, #tpu.memory_space<vmem>>) attributes {dimension_semantics = [#tpu.dimension_semantics<parallel>, #tpu.dimension_semantics<parallel>, #tpu.dimension_semantics<arbitrary>], iteration_bounds = array<i64: 1, 1, 1>, scalar_prefetch = 0 : i64, scratch_operands = 1 : i64, tpu.core_type = #tpu.core_type<tc>, window_params = [{transform_indices = @transform_0, window_bounds = array<i64: 2, 32>}, {transform_indices = @transform_1, window_bounds = array<i64: 32, 2>}, {transform_indices = @transform_2, window_bounds = array<i64: 1, 2>}, {transform_indices = @transform_3, window_bounds = array<i64: 2, 2>}]} {
    %c0_i32 = arith.constant 0 : i32
    %0 = arith.cmpi eq, %arg2, %c0_i32 : i32
    %1 = arith.extui %0 : i1 to i32
    %c0_i32_0 = arith.constant 0 : i32
    %2 = arith.cmpi ne, %1, %c0_i32_0 : i32
    scf.if %2 {
      %cst_10 = arith.constant 0.000000e+00 : f32
      %12 = vector.broadcast %cst_10 : f32 to vector<2x2xf32>
      %c0_11 = arith.constant 0 : index
      %c0_12 = arith.constant 0 : index
      %13 = vector.load %arg7[%c0_11, %c0_12] : memref<2x2xf32, #tpu.memory_space<vmem>>, vector<2x2xf32>
      tpu.vector_store %arg7[%c0_11, %c0_12], %12 {strides = array<i32>} : memref<2x2xf32, #tpu.memory_space<vmem>>, vector<2x2xf32>,
    } else {
    }
    %c0 = arith.constant 0 : index
    %c0_1 = arith.constant 0 : index
    %3 = vector.load %arg7[%c0, %c0_1] : memref<2x2xf32, #tpu.memory_space<vmem>>, vector<2x2xf32>
    %c0_2 = arith.constant 0 : index
    %c0_3 = arith.constant 0 : index
    %4 = vector.load %arg3[%c0_2, %c0_3] : memref<2x32xbf16, #tpu.memory_space<vmem>>, vector<2x32xbf16>
    %c0_4 = arith.constant 0 : index
    %c0_5 = arith.constant 0 : index
    %5 = vector.load %arg4[%c0_4, %c0_5] : memref<32x2xbf16, #tpu.memory_space<vmem>>, vector<32x2xbf16>
    %cst = arith.constant dense<0.000000e+00> : vector<2x2xf32>
    %6 = tpu.matmul %4, %5, %cst {dimension_numbers = #tpu.dot_dimension_numbers<[1], [0], [0], [1], [0, 0, 1, 1], [], []>} : vector<2x32xbf16>, vector<32x2xbf16>, vector<2x2xf32> -> vector<2x2xf32>
    %7 = arith.addf %3, %6 : vector<2x2xf32>
    %c0_6 = arith.constant 0 : index
    %c0_7 = arith.constant 0 : index
    %8 = vector.load %arg7[%c0_6, %c0_7] : memref<2x2xf32, #tpu.memory_space<vmem>>, vector<2x2xf32>
    tpu.vector_store %arg7[%c0_6, %c0_7], %7 {strides = array<i32>} : memref<2x2xf32, #tpu.memory_space<vmem>>, vector<2x2xf32>,
    %c0_i32_8 = arith.constant 0 : i32
    %9 = arith.cmpi eq, %arg2, %c0_i32_8 : i32
    %10 = arith.extui %9 : i1 to i32
    %c0_i32_9 = arith.constant 0 : i32
    %11 = arith.cmpi ne, %10, %c0_i32_9 : i32
    scf.if %11 {
      %c0_10 = arith.constant 0 : index
      %c0_11 = arith.constant 0 : index
      %12 = vector.load %arg7[%c0_10, %c0_11] : memref<2x2xf32, #tpu.memory_space<vmem>>, vector<2x2xf32>
      %c0_12 = arith.constant 0 : index
      %c0_13 = arith.constant 0 : index
      %13 = vector.load %arg5[%c0_12, %c0_13] : memref<1x2xf32, #tpu.memory_space<vmem>>, vector<1x2xf32>
      %14 = vector.broadcast %13 : vector<1x2xf32> to vector<2x2xf32>
      %15 = arith.addf %12, %14 : vector<2x2xf32>
      %c0_14 = arith.constant 0 : index
      %c0_15 = arith.constant 0 : index
      %16 = vector.load %arg6[%c0_14, %c0_15] : memref<2x2xf32, #tpu.memory_space<vmem>>, vector<2x2xf32>
      tpu.vector_store %arg6[%c0_14, %c0_15], %15 {strides = array<i32>} : memref<2x2xf32, #tpu.memory_space<vmem>>, vector<2x2xf32>,
    } else {
    }
    return
  }
  func.func @transform_0(%arg0: i32, %arg1: i32, %arg2: i32) -> (i32, i32) {
    %c0_i32 = arith.constant 0 : i32
    return %arg0, %arg2 : i32, i32
  }
  func.func @transform_1(%arg0: i32, %arg1: i32, %arg2: i32) -> (i32, i32) {
    %c0_i32 = arith.constant 0 : i32
    return %arg2, %arg1 : i32, i32
  }
  func.func @transform_2(%arg0: i32, %arg1: i32, %arg2: i32) -> (i32, i32) {
    %c0_i32 = arith.constant 0 : i32
    %c0_i32_0 = arith.constant 0 : i32
    return %c0_i32, %arg1 : i32, i32
  }
  func.func @transform_3(%arg0: i32, %arg1: i32, %arg2: i32) -> (i32, i32) {
    %c0_i32 = arith.constant 0 : i32
    return %arg0, %arg1 : i32, i32
  }
}

</mosaic_0001>

<llo_original>
// kernel: _lambda_.20
$region0: #{_lambda_.20}
  #allocation0 [shape = 'u32[]', space=smem, size = 0x4, offset = 0x4, fixed_abs, tag = 'smem constant byte address 0x4 - core index']
  #allocation1 [shape = 'u32[72,128]{1,0:T(1,128)}', space=vmem, size = 0x9000, scoped, tag = 'internal scratch']
  #allocation2 [shape = 'f32[16,32]{1,0:T(8,128)}', space=vmem, size = 0x2000, scoped, tag = 'scratch operand']
  %s0 = inlined_call_operand.vmem [shape: bf16[16,24], index: 0, kind: input, shape index: {}]
  %s1 = inlined_call_operand.vmem [shape: bf16[24,32], index: 1, kind: input, shape index: {}]
  %s2 = inlined_call_operand.vmem [shape: f32[1,32], index: 2, kind: input, shape index: {}]
  %s3 = inlined_call_operand.vmem [shape: bf16[16,32], index: 3, kind: output, shape index: {}]
  %s4 = sld [smem:[#allocation0]]
  $region30: #{_lambda_.20} parent=0
    _
  %s6 = ssub.s32 1, %s4
  %s7 = scalar_select 0, %s6, %s4
  // Predicated region
  $region2: #{_lambda_.20} parent=0 // pred_check
    _
  $region3: #{_lambda_.20} parent=0 // pred_check_branch
    %9 = sbr.rel (0) target = $region5
  $region4: #{_lambda_.20} parent=0 // pred_region
    _
  $region5: #{_lambda_.20} parent=0 // pred_fallthru
    _
  // Predicated region
  $region6: #{_lambda_.20} parent=0 // pred_check
    _
  $region7: #{_lambda_.20} parent=0 // pred_check_branch
    %11 = sbr.rel (0) target = $region9
  $region8: #{_lambda_.20} parent=0 // pred_region
    _
  $region9: #{_lambda_.20} parent=0 // pred_fallthru
    _
  // Predicated region
  $region10: #{_lambda_.20} parent=0 // pred_check
    _
  $region11: #{_lambda_.20} parent=0 // pred_check_branch
    %13 = sbr.rel (0) target = $region13
  $region12: #{_lambda_.20} parent=0 // pred_region
    _
  $region13: #{_lambda_.20} parent=0 // pred_fallthru
    _
  %p15 = scmp.eq.s32.totalorder 0, 0
  // Predicated region
  $region14: #{_lambda_.20} parent=0 // pred_check
    %p16 = pneg %p15
  $region15: #{_lambda_.20} parent=0 // pred_check_branch
    %18 = sbr.rel (%p16) target = $region17
  $region16: #{_lambda_.20} parent=0 // pred_region
    %vm19 = vcmask 261120
    %20 = vst.msk [vmem:[#allocation2] sm:$0xff] %vm19, 0.0
    %21 = vst.msk [vmem:[#allocation2 + $0x8] sm:$0xff] %vm19, 0.0
  $region17: #{_lambda_.20} parent=0 // pred_fallthru
    _
  %v22 = vld [vmem:[#allocation2] sm:$0xff]
  %v23 = vld [vmem:[#allocation2 + $0x8] sm:$0xff]
  %v24 = vld [vmem:[%s0] sm:$0xf]
  %v25 = vld [vmem:[%s0 + $0x4] sm:$0xf]
  %v26 = vld [vmem:[%s1] sm:$0xf]
  %v27 = vld [vmem:[%s1 + $0x4] sm:$0xf]
  %v28 = vld [vmem:[%s1 + $0x8] sm:$0xf]
  %v31 = vunpack.c.l.b16 %v24
  %v32 = vunpack.c.l.b16 %v25
  %v33 = vpack.c.b16 %v32, %v31
  %v37 = vunpack.c.l.b16 %v26
  %v38 = vunpack.c.l.b16 %v27
  %v39 = vunpack.c.l.b16 %v28
  %v40 = vpack.c.b16 %v38, %v37
  %v41 = vpack.c.b16 %v39, %v39
  %vm43 = vcmask 195584
  %v45 = vsel %vm43, %v33, 0
  %vm47 = vcmask 1043456
  %v49 = vsel %vm47, %v41, 0
  %51 = vmatpush.bf16.msra.mxu0 0
  %52 = vmatpush.bf16.msra.mxu0 0
  %53 = vmatpush.bf16.msra.mxu0 0
  %54 = vmatpush.bf16.msra.mxu0 0
  %55 = vmatpush.bf16.msra.mxu0 0
  %56 = vmatpush.bf16.msra.mxu0 0
  %57 = vmatpush.bf16.msra.mxu0 %v49
  %58 = vmatpush.bf16.msra.mxu0 %v40
  %59 = vmatmul.bf16.gmra.mxu0 %v45
  %v60 = vpop.f32.mrf.mxu0
  %v61 = vadd.f32 0.0, %v60
  %v62 = vpop.f32.mrf.mxu0
  %v63 = vadd.f32 0.0, %v62
  %64 = vdwg.mxu0
  %v65 = vadd.f32 %v22, %v61
  %v66 = vadd.f32 %v23, %v63
  %vm67 = vcmask 261120
  %68 = vst.msk [vmem:[#allocation2] sm:$0xff] %vm67, %v65
  %69 = vst.msk [vmem:[#allocation2 + $0x8] sm:$0xff] %vm67, %v66
  // Predicated region
  $region18: #{_lambda_.20} parent=0 // pred_check
    %p70 = pneg %p15
  $region19: #{_lambda_.20} parent=0 // pred_check_branch
    %72 = sbr.rel (%p70) target = $region21
  $region20: #{_lambda_.20} parent=0 // pred_region
    %v73 = vld [vmem:[#allocation2] sm:$0xff]
    %v74 = vld [vmem:[#allocation2 + $0x8] sm:$0xff]
    %v75 = vld [vmem:[%s2] sm:$0x1]
    %v77 = vperm.slane %v75, 0
    %v79 = vadd.f32 %v73, %v77
    %v80 = vadd.f32 %v74, %v77
    %v81 = vpack.c.bf16 %v79, %v79
    %v82 = vpack.c.bf16 %v80, %v80
    %vm83 = vcmask 257024
    %84 = vst.msk [vmem:[%s3] sm:$0xf] %vm83, %v81
    %85 = vst.msk [vmem:[%s3 + $0x4] sm:$0xf] %vm83, %v82
  $region21: #{_lambda_.20} parent=0 // pred_fallthru
    _
  // Predicated region
  $region22: #{_lambda_.20} parent=0 // pred_check
    _
  $region23: #{_lambda_.20} parent=0 // pred_check_branch
    %87 = sbr.rel (0) target = $region25
  $region24: #{_lambda_.20} parent=0 // pred_region
    _
  $region25: #{_lambda_.20} parent=0 // pred_fallthru
    _
  // Predicated region
  $region26: #{_lambda_.20} parent=0 // pred_check
    _
  $region27: #{_lambda_.20} parent=0 // pred_check_branch
    %89 = sbr.rel (0) target = $region29
  $region28: #{_lambda_.20} parent=0 // pred_region
    _
  $region29: #{_lambda_.20} parent=0 // pred_fallthru
    _

// kernel: _lambda_.21
$region0: #{_lambda_.21}
  #allocation0 [shape = 'u32[]', space=smem, size = 0x4, offset = 0x4, fixed_abs, tag = 'smem constant byte address 0x4 - core index']
  #allocation1 [shape = 'u32[72,128]{1,0:T(1,128)}', space=vmem, size = 0x9000, scoped, tag = 'internal scratch']
  %s0 = inlined_call_operand.vmem [shape: bf16[16,32], index: 0, kind: input, shape index: {}]
  %s1 = inlined_call_operand.vmem [shape: bf16[16,32], index: 1, kind: input, shape index: {}]
  %s2 = inlined_call_operand.vmem [shape: f32[1,32], index: 2, kind: input, shape index: {}]
  %s3 = inlined_call_operand.vmem [shape: f32[1,32], index: 3, kind: input, shape index: {}]
  %s4 = inlined_call_operand.vmem [shape: bf16[16,32], index: 4, kind: output, shape index: {}]
  %s5 = sld [smem:[#allocation0]]
  $region26: #{_lambda_.21} parent=0
    _
  %s7 = ssub.s32 1, %s5
  %s8 = scalar_select 0, %s7, %s5
  // Predicated region
  $region2: #{_lambda_.21} parent=0 // pred_check
    _
  $region3: #{_lambda_.21} parent=0 // pred_check_branch
    %10 = sbr.rel (0) target = $region5
  $region4: #{_lambda_.21} parent=0 // pred_region
    _
  $region5: #{_lambda_.21} parent=0 // pred_fallthru
    _
  // Predicated region
  $region6: #{_lambda_.21} parent=0 // pred_check
    _
  $region7: #{_lambda_.21} parent=0 // pred_check_branch
    %12 = sbr.rel (0) target = $region9
  $region8: #{_lambda_.21} parent=0 // pred_region
    _
  $region9: #{_lambda_.21} parent=0 // pred_fallthru
    _
  // Predicated region
  $region10: #{_lambda_.21} parent=0 // pred_check
    _
  $region11: #{_lambda_.21} parent=0 // pred_check_branch
    %14 = sbr.rel (0) target = $region13
  $region12: #{_lambda_.21} parent=0 // pred_region
    _
  $region13: #{_lambda_.21} parent=0 // pred_fallthru
    _
  // Predicated region
  $region14: #{_lambda_.21} parent=0 // pred_check
    _
  $region15: #{_lambda_.21} parent=0 // pred_check_branch
    %16 = sbr.rel (0) target = $region17
  $region16: #{_lambda_.21} parent=0 // pred_region
    _
  $region17: #{_lambda_.21} parent=0 // pred_fallthru
    _
  %v17 = vld [vmem:[%s0] sm:$0xf]
  %v18 = vld [vmem:[%s0 + $0x4] sm:$0xf]
  %v19 = vunpack.c.l.bf16 %v17
  %v20 = vunpack.c.l.bf16 %v18
  %v21 = vld [vmem:[%s1] sm:$0xf]
  %v22 = vld [vmem:[%s1 + $0x4] sm:$0xf]
  %v23 = vunpack.c.l.bf16 %v21
  %v24 = vunpack.c.l.bf16 %v22
  %v25 = vadd.f32 %v19, %v23
  %v26 = vadd.f32 %v20, %v24
  %vm27 = vcmask 261120
  %v28 = vsel %vm27, %v25, 0.0
  %29 = vadd.xlane.f32.xlu0 %v28
  %v30 = vpop.xlane.xlu0 %29
  %v31 = vsel %vm27, %v26, 0.0
  %32 = vadd.xlane.f32.xlu0 %v31
  %v33 = vpop.xlane.xlu0 %32
  %v34 = vrcp.pop 32.0
  %v35 = vmul.f32 32.0, %v34
  %v36 = vsub.f32 1.0, %v35
  %v37 = vmul.f32 %v34, %v36
  %v38 = vadd.f32 %v34, %v37
  %vm39 = vweird.f32 %v34
  %v40 = vsel %vm39, %v34, %v38
  %v41 = vmul.f32 %v30, %v40
  %v42 = vmul.f32 %v33, %v40
  %v43 = vsub.f32 %v25, %v41
  %v44 = vsub.f32 %v26, %v42
  %v45 = vmul.f32 %v43, %v43
  %v46 = vmul.f32 %v44, %v44
  %v47 = vsel %vm27, %v45, 0.0
  %48 = vadd.xlane.f32.xlu0 %v47
  %v49 = vpop.xlane.xlu0 %48
  %v50 = vsel %vm27, %v46, 0.0
  %51 = vadd.xlane.f32.xlu0 %v50
  %v52 = vpop.xlane.xlu0 %51
  %v53 = vmul.f32 %v49, %v40
  %v54 = vmul.f32 %v52, %v40
  %v55 = vadd.f32 %v53, 1e-12
  %v56 = vadd.f32 %v54, 1e-12
  %v57 = vrsqrt.pop %v55
  %v58 = vmul.f32 %v57, %v55
  %v59 = vmul.f32 %v58, %v57
  %v60 = vmul.f32 0.5, %v59
  %v61 = vsub.f32 1.5, %v60
  %v62 = vmul.f32 %v57, %v61
  %vm63 = vweird.f32 %v55
  %vm64 = vweird.f32 %v57
  %vm65 = vmor %vm63, %vm64
  %v66 = vsel %vm65, %v57, %v62
  %v67 = vrsqrt.pop %v56
  %v68 = vmul.f32 %v67, %v56
  %v69 = vmul.f32 %v68, %v67
  %v70 = vmul.f32 0.5, %v69
  %v71 = vsub.f32 1.5, %v70
  %v72 = vmul.f32 %v67, %v71
  %vm73 = vweird.f32 %v56
  %vm74 = vweird.f32 %v67
  %vm75 = vmor %vm73, %vm74
  %v76 = vsel %vm75, %v67, %v72
  %v77 = vmul.f32 %v43, %v66
  %v78 = vmul.f32 %v44, %v76
  %v79 = vld [vmem:[%s2] sm:$0x1]
  %v81 = vperm.slane %v79, 0
  %v83 = vmul.f32 %v77, %v81
  %v84 = vmul.f32 %v78, %v81
  %v85 = vld [vmem:[%s3] sm:$0x1]
  %v87 = vperm.slane %v85, 0
  %v89 = vadd.f32 %v83, %v87
  %v90 = vadd.f32 %v84, %v87
  %v91 = vpack.c.bf16 %v89, %v89
  %v92 = vpack.c.bf16 %v90, %v90
  %vm93 = vcmask 257024
  %94 = vst.msk [vmem:[%s4] sm:$0xf] %vm93, %v91
  %95 = vst.msk [vmem:[%s4 + $0x4] sm:$0xf] %vm93, %v92
  // Predicated region
  $region18: #{_lambda_.21} parent=0 // pred_check
    _
  $region19: #{_lambda_.21} parent=0 // pred_check_branch
    %97 = sbr.rel (0) target = $region21
  $region20: #{_lambda_.21} parent=0 // pred_region
    _
  $region21: #{_lambda_.21} parent=0 // pred_fallthru
    _
  // Predicated region
  $region22: #{_lambda_.21} parent=0 // pred_check
    _
  $region23: #{_lambda_.21} parent=0 // pred_check_branch
    %99 = sbr.rel (0) target = $region25
  $region24: #{_lambda_.21} parent=0 // pred_region
    _
  $region25: #{_lambda_.21} parent=0 // pred_fallthru
    _

// kernel: _lambda_.22
$region0: #{_lambda_.22}
  #allocation0 [shape = 'u32[]', space=smem, size = 0x4, offset = 0x4, fixed_abs, tag = 'smem constant byte address 0x4 - core index']
  #allocation1 [shape = 'u32[72,128]{1,0:T(1,128)}', space=vmem, size = 0x9000, scoped, tag = 'internal scratch']
  #allocation2 [shape = 'f32[16,96]{1,0:T(8,128)}', space=vmem, size = 0x2000, scoped, tag = 'scratch operand']
  %s0 = inlined_call_operand.vmem [shape: bf16[16,32], index: 0, kind: input, shape index: {}]
  %s1 = inlined_call_operand.vmem [shape: bf16[32,96], index: 1, kind: input, shape index: {}]
  %s2 = inlined_call_operand.vmem [shape: f32[1,96], index: 2, kind: input, shape index: {}]
  %s3 = inlined_call_operand.vmem [shape: bf16[16,96], index: 3, kind: output, shape index: {}]
  %s4 = sld [smem:[#allocation0]]
  $region30: #{_lambda_.22} parent=0
    _
  %s6 = ssub.s32 1, %s4
  %s7 = scalar_select 0, %s6, %s4
  // Predicated region
  $region2: #{_lambda_.22} parent=0 // pred_check
    _
  $region3: #{_lambda_.22} parent=0 // pred_check_branch
    %9 = sbr.rel (0) target = $region5
  $region4: #{_lambda_.22} parent=0 // pred_region
    _
  $region5: #{_lambda_.22} parent=0 // pred_fallthru
    _
  // Predicated region
  $region6: #{_lambda_.22} parent=0 // pred_check
    _
  $region7: #{_lambda_.22} parent=0 // pred_check_branch
    %11 = sbr.rel (0) target = $region9
  $region8: #{_lambda_.22} parent=0 // pred_region
    _
  $region9: #{_lambda_.22} parent=0 // pred_fallthru
    _
  // Predicated region
  $region10: #{_lambda_.22} parent=0 // pred_check
    _
  $region11: #{_lambda_.22} parent=0 // pred_check_branch
    %13 = sbr.rel (0) target = $region13
  $region12: #{_lambda_.22} parent=0 // pred_region
    _
  $region13: #{_lambda_.22} parent=0 // pred_fallthru
    _
  %p15 = scmp.eq.s32.totalorder 0, 0
  // Predicated region
  $region14: #{_lambda_.22} parent=0 // pred_check
    %p16 = pneg %p15
  $region15: #{_lambda_.22} parent=0 // pred_check_branch
    %18 = sbr.rel (%p16) target = $region17
  $region16: #{_lambda_.22} parent=0 // pred_region
    %vm19 = vcmask 785408
    %20 = vst.msk [vmem:[#allocation2] sm:$0xff] %vm19, 0.0
    %21 = vst.msk [vmem:[#allocation2 + $0x8] sm:$0xff] %vm19, 0.0
  $region17: #{_lambda_.22} parent=0 // pred_fallthru
    _
  %v22 = vld [vmem:[#allocation2] sm:$0xff]
  %v23 = vld [vmem:[#allocation2 + $0x8] sm:$0xff]
  %v24 = vld [vmem:[%s0] sm:$0xf]
  %v25 = vld [vmem:[%s0 + $0x4] sm:$0xf]
  %v26 = vld [vmem:[%s1] sm:$0xf]
  %v27 = vld [vmem:[%s1 + $0x4] sm:$0xf]
  %v28 = vld [vmem:[%s1 + $0x8] sm:$0xf]
  %v29 = vld [vmem:[%s1 + $0xc] sm:$0xf]
  %v32 = vunpack.c.l.b16 %v24
  %v33 = vunpack.c.l.b16 %v25
  %v34 = vpack.c.b16 %v33, %v32
  %v39 = vunpack.c.l.b16 %v26
  %v40 = vunpack.c.l.b16 %v27
  %v41 = vunpack.c.l.b16 %v28
  %v42 = vunpack.c.l.b16 %v29
  %v43 = vpack.c.b16 %v40, %v39
  %v44 = vpack.c.b16 %v42, %v41
  %vm47 = vcmask 261120
  %v49 = vsel %vm47, %v34, 0
  %51 = vmatpush.bf16.msra.mxu0 0
  %52 = vmatpush.bf16.msra.mxu0 0
  %53 = vmatpush.bf16.msra.mxu0 0
  %54 = vmatpush.bf16.msra.mxu0 0
  %55 = vmatpush.bf16.msra.mxu0 0
  %56 = vmatpush.bf16.msra.mxu0 0
  %57 = vmatpush.bf16.msra.mxu0 %v44
  %58 = vmatpush.bf16.msra.mxu0 %v43
  %59 = vmatmul.bf16.gmra.mxu0 %v49
  %v60 = vpop.f32.mrf.mxu0
  %v61 = vadd.f32 0.0, %v60
  %v62 = vpop.f32.mrf.mxu0
  %v63 = vadd.f32 0.0, %v62
  %64 = vdwg.mxu0
  %v65 = vadd.f32 %v22, %v61
  %v66 = vadd.f32 %v23, %v63
  %vm67 = vcmask 785408
  %68 = vst.msk [vmem:[#allocation2] sm:$0xff] %vm67, %v65
  %69 = vst.msk [vmem:[#allocation2 + $0x8] sm:$0xff] %vm67, %v66
  // Predicated region
  $region18: #{_lambda_.22} parent=0 // pred_check
    %p70 = pneg %p15
  $region19: #{_lambda_.22} parent=0 // pred_check_branch
    %72 = sbr.rel (%p70) target = $region21
  $region20: #{_lambda_.22} parent=0 // pred_region
    %v73 = vld [vmem:[#allocation2] sm:$0xff]
    %v74 = vld [vmem:[#allocation2 + $0x8] sm:$0xff]
    %v75 = vld [vmem:[%s2] sm:$0x1]
    %v77 = vperm.slane %v75, 0
    %v79 = vadd.f32 %v73, %v77
    %v80 = vadd.f32 %v74, %v77
    %v81 = vpack.c.bf16 %v79, %v79
    %v82 = vpack.c.bf16 %v80, %v80
    %vm83 = vcmask 781312
    %84 = vst.msk [vmem:[%s3] sm:$0xf] %vm83, %v81
    %85 = vst.msk [vmem:[%s3 + $0x4] sm:$0xf] %vm83, %v82
  $region21: #{_lambda_.22} parent=0 // pred_fallthru
    _
  // Predicated region
  $region22: #{_lambda_.22} parent=0 // pred_check
    _
  $region23: #{_lambda_.22} parent=0 // pred_check_branch
    %87 = sbr.rel (0) target = $region25
  $region24: #{_lambda_.22} parent=0 // pred_region
    _
  $region25: #{_lambda_.22} parent=0 // pred_fallthru
    _
  // Predicated region
  $region26: #{_lambda_.22} parent=0 // pred_check
    _
  $region27: #{_lambda_.22} parent=0 // pred_check_branch
    %89 = sbr.rel (0) target = $region29
  $region28: #{_lambda_.22} parent=0 // pred_region
    _
  $region29: #{_lambda_.22} parent=0 // pred_fallthru
    _

// kernel: _lambda_.23
$region0: #{_lambda_.23}
  #allocation0 [shape = 'u32[]', space=smem, size = 0x4, offset = 0x4, fixed_abs, tag = 'smem constant byte address 0x4 - core index']
  #allocation1 [shape = 'u32[72,128]{1,0:T(1,128)}', space=vmem, size = 0x9000, scoped, tag = 'internal scratch']
  #allocation2 [shape = 'bf16[8,32]{1,0:T(8,128)(2,1)}', space=vmem, size = 0x800, scoped, tag = 'scratch operand']
  %s0 = inlined_call_operand.vmem [shape: bf16[2,8,96], index: 0, kind: input, shape index: {}]
  %s1 = inlined_call_operand.vmem [shape: f32[2,1,8], index: 1, kind: input, shape index: {}]
  %s2 = inlined_call_operand.vmem [shape: bf16[32,32], index: 2, kind: input, shape index: {}]
  %s3 = inlined_call_operand.vmem [shape: f32[1,32], index: 3, kind: input, shape index: {}]
  %s4 = inlined_call_operand.vmem [shape: bf16[2,8,32], index: 4, kind: output, shape index: {}]
  %s5 = sld [smem:[#allocation0]]
  $region49: #{_lambda_.23} parent=0
    _
  %s7 = ssub.s32 1, %s5
  %s8 = scalar_select 0, %s7, %s5
  loop: start=0, step=1, limit=4
  $region2: #{_lambda_.23} parent=0 // loop_pre_header
    _
  $region3: #{_lambda_.23} parent=0 // loop_header
    %s10 = sphi 0, %s14
    %p11 = scmp.ge.s32.totalorder %s10, 4
    %s20 = sphi 0, %s22
    %s23 = sphi 0, %s20
    %s24 = sphi 0, %s23
    %s40 = sphi 0, %s24
    %s46 = sphi 0, %s48
    %s49 = sphi 0, %s46
    %s50 = sphi 0, %s49
    %s66 = sphi 0, %s50
    %s70 = sphi 0, %s70
    %s72 = sphi 0, %s70
    %s73 = sphi 0, %s72
    %s87 = sphi 0, %s73
    %s91 = sphi 0, %s91
    %s93 = sphi 0, %s91
    %s94 = sphi 0, %s93
    %s108 = sphi 0, %s94
    %s114 = sphi 0, %s116
    %s117 = sphi 0, %s114
    %s118 = sphi 0, %s117
    %s134 = sphi 0, %s118
  $region4: #{_lambda_.23} parent=0 // loop_header_branch
    %13 = sbr.rel (%p11) target = $region8
  $region5: #{_lambda_.23} parent=0 // loop_body
    %s15 = ssub.s32 %s10, 1
    %s16 = ssub.s32 %s10, 2
    %s17 = sadd.s32 %s10, 1
    %s18 = ssub.s32 %s10, %s17
    %p19 = scmp.eq.s32.totalorder %s18, 0
    %s21 = sadd.s32 %s20, 1
    %s22 = scalar_select %p19, %s20, %s21
    %p25 = pneg %p19
    %p26 = scmp.eq.s32.totalorder %s10, 1
    %p27 = por %p25, %p26
    %p28 = scmp.ne.s32.totalorder %s20, %s23
    %p29 = scmp.eq.s32.totalorder %s10, 0
    %p30 = por %p28, %p29
    %p31 = scmp.ne.s32.totalorder %s20, %s23
    %p32 = scmp.eq.s32.totalorder %s15, 1
    %p33 = por %p31, %p32
    %p34 = scmp.ne.s32.totalorder %s23, %s24
    %p35 = scmp.eq.s32.totalorder %s15, 0
    %p36 = por %p34, %p35
    %p37 = scmp.ne.s32.totalorder %s23, %s24
    %p38 = scmp.eq.s32.totalorder %s16, 1
    %p39 = por %p37, %p38
    %p41 = scmp.ne.s32.totalorder %s24, %s40
    %p42 = scmp.eq.s32.totalorder %s16, 0
    %p43 = por %p41, %p42
    %s44 = ssub.s32 %s10, %s17
    %p45 = scmp.eq.s32.totalorder %s44, 0
    %s47 = sadd.s32 %s46, 1
    %s48 = scalar_select %p45, %s46, %s47
    %p51 = pneg %p45
    %p52 = scmp.eq.s32.totalorder %s10, 1
    %p53 = por %p51, %p52
    %p54 = scmp.ne.s32.totalorder %s46, %s49
    %p55 = scmp.eq.s32.totalorder %s10, 0
    %p56 = por %p54, %p55
    %p57 = scmp.ne.s32.totalorder %s46, %s49
    %p58 = scmp.eq.s32.totalorder %s15, 1
    %p59 = por %p57, %p58
    %p60 = scmp.ne.s32.totalorder %s49, %s50
    %p61 = scmp.eq.s32.totalorder %s15, 0
    %p62 = por %p60, %p61
    %p63 = scmp.ne.s32.totalorder %s49, %s50
    %p64 = scmp.eq.s32.totalorder %s16, 1
    %p65 = por %p63, %p64
    %p67 = scmp.ne.s32.totalorder %s50, %s66
    %p68 = scmp.eq.s32.totalorder %s16, 0
    %p69 = por %p67, %p68
    %s71 = sadd.s32 %s70, 1
    %p74 = scmp.eq.s32.totalorder %s10, 1
    %p75 = scmp.ne.s32.totalorder %s70, %s72
    %p76 = scmp.eq.s32.totalorder %s10, 0
    %p77 = por %p75, %p76
    %p78 = scmp.ne.s32.totalorder %s70, %s72
    %p79 = scmp.eq.s32.totalorder %s15, 1
    %p80 = por %p78, %p79
    %p81 = scmp.ne.s32.totalorder %s72, %s73
    %p82 = scmp.eq.s32.totalorder %s15, 0
    %p83 = por %p81, %p82
    %p84 = scmp.ne.s32.totalorder %s72, %s73
    %p85 = scmp.eq.s32.totalorder %s16, 1
    %p86 = por %p84, %p85
    %p88 = scmp.ne.s32.totalorder %s73, %s87
    %p89 = scmp.eq.s32.totalorder %s16, 0
    %p90 = por %p88, %p89
    %s92 = sadd.s32 %s91, 1
    %p95 = scmp.eq.s32.totalorder %s10, 1
    %p96 = scmp.ne.s32.totalorder %s91, %s93
    %p97 = scmp.eq.s32.totalorder %s10, 0
    %p98 = por %p96, %p97
    %p99 = scmp.ne.s32.totalorder %s91, %s93
    %p100 = scmp.eq.s32.totalorder %s15, 1
    %p101 = por %p99, %p100
    %p102 = scmp.ne.s32.totalorder %s93, %s94
    %p103 = scmp.eq.s32.totalorder %s15, 0
    %p104 = por %p102, %p103
    %p105 = scmp.ne.s32.totalorder %s93, %s94
    %p106 = scmp.eq.s32.totalorder %s16, 1
    %p107 = por %p105, %p106
    %p109 = scmp.ne.s32.totalorder %s94, %s108
    %p110 = scmp.eq.s32.totalorder %s16, 0
    %p111 = por %p109, %p110
    %s112 = ssub.s32 %s10, %s17
    %p113 = scmp.eq.s32.totalorder %s112, 0
    %s115 = sadd.s32 %s114, 1
    %s116 = scalar_select %p113, %s114, %s115
    %p119 = pneg %p113
    %p120 = scmp.eq.s32.totalorder %s10, 1
    %p121 = por %p119, %p120
    %p122 = scmp.ne.s32.totalorder %s114, %s117
    %p123 = scmp.eq.s32.totalorder %s10, 0
    %p124 = por %p122, %p123
    %p125 = scmp.ne.s32.totalorder %s114, %s117
    %p126 = scmp.eq.s32.totalorder %s15, 1
    %p127 = por %p125, %p126
    %p128 = scmp.ne.s32.totalorder %s117, %s118
    %p129 = scmp.eq.s32.totalorder %s15, 0
    %p130 = por %p128, %p129
    %p131 = scmp.ne.s32.totalorder %s117, %s118
    %p132 = scmp.eq.s32.totalorder %s16, 1
    %p133 = por %p131, %p132
    %p135 = scmp.ne.s32.totalorder %s118, %s134
    %p136 = scmp.eq.s32.totalorder %s16, 0
    %p137 = por %p135, %p136
    %p138 = scmp.le.s32.totalorder 1, %s10
    %p139 = scmp.lt.s32.totalorder %s10, 3
    %p140 = pnand %p138, %p139
    %p141 = pneg %p140
    // Predicated region
    $region9: #{_lambda_.23} parent=5 // pred_check
      _
    $region10: #{_lambda_.23} parent=5 // pred_check_branch
      %143 = sbr.rel (%p140) target = $region12
    $region11: #{_lambda_.23} parent=5 // pred_region
      %s144 = ssub.s32 %s10, 1
      // Predicated region
      $region13: #{_lambda_.23} parent=11 // pred_check
        %p145 = pneg %p83
      $region14: #{_lambda_.23} parent=11 // pred_check_branch
        %147 = sbr.rel (%p145) target = $region16
      $region15: #{_lambda_.23} parent=11 // pred_region
        _
      $region16: #{_lambda_.23} parent=11 // pred_fallthru
        _
      // Predicated region
      $region17: #{_lambda_.23} parent=11 // pred_check
        %p148 = pneg %p104
      $region18: #{_lambda_.23} parent=11 // pred_check_branch
        %150 = sbr.rel (%p148) target = $region20
      $region19: #{_lambda_.23} parent=11 // pred_region
        _
      $region20: #{_lambda_.23} parent=11 // pred_fallthru
        _
    $region12: #{_lambda_.23} parent=5 // pred_fallthru
      _
    %p151 = scmp.lt.s32.totalorder %s10, 2
    // Predicated region
    $region21: #{_lambda_.23} parent=5 // pred_check
      %p152 = pneg %p151
    $region22: #{_lambda_.23} parent=5 // pred_check_branch
      %154 = sbr.rel (%p152) target = $region24
    $region23: #{_lambda_.23} parent=5 // pred_region
      // Predicated region
      $region25: #{_lambda_.23} parent=23 // pred_check
        %p155 = pneg %p30
      $region26: #{_lambda_.23} parent=23 // pred_check_branch
        %157 = sbr.rel (%p155) target = $region28
      $region27: #{_lambda_.23} parent=23 // pred_region
        %p158 = scmp.lt.s32.totalorder %s10, 1
        %s159 = scalar_select %p158, %s10, 1
        %s160 = smul.addr %s159, 4
        %s161 = scalar_lea.vmem %s0, %s160
      $region28: #{_lambda_.23} parent=23 // pred_fallthru
        _
      // Predicated region
      $region29: #{_lambda_.23} parent=23 // pred_check
        %p162 = pneg %p56
      $region30: #{_lambda_.23} parent=23 // pred_check_branch
        %164 = sbr.rel (%p162) target = $region32
      $region31: #{_lambda_.23} parent=23 // pred_region
        %p165 = scmp.lt.s32.totalorder %s10, 1
        %s166 = scalar_select %p165, %s10, 1
        %s167 = scalar_lea.vmem %s1, %s166
      $region32: #{_lambda_.23} parent=23 // pred_fallthru
        _
    $region24: #{_lambda_.23} parent=5 // pred_fallthru
      _
    %p168 = scmp.le.s32.totalorder 1, %s10
    %p169 = scmp.lt.s32.totalorder %s10, 3
    %p170 = pnand %p168, %p169
    %p171 = pneg %p170
    // Predicated region
    $region33: #{_lambda_.23} parent=5 // pred_check
      _
    $region34: #{_lambda_.23} parent=5 // pred_check_branch
      %173 = sbr.rel (%p170) target = $region36
    $region35: #{_lambda_.23} parent=5 // pred_region
      %s174 = ssub.s32 %s10, 1
      %p175 = scmp.lt.s32.totalorder %s15, 1
      %s176 = scalar_select %p175, %s15, 1
      %s177 = smul.addr %s176, 4
      %s178 = scalar_lea.vmem %s0, %s177
      %p179 = pneg %p36
      %p180 = pneg %p33
      %p181 = scmp.lt.s32.totalorder %s15, 1
      %s182 = scalar_select %p181, %s15, 1
      %s183 = scalar_lea.vmem %s1, %s182
      %p184 = pneg %p62
      %p185 = pneg %p59
      %p186 = pneg %p83
      %p187 = pneg %p80
      %p188 = pneg %p104
      %p189 = pneg %p101
      %p190 = pneg %p130
      %p191 = pneg %p127
      %p192 = scmp.lt.s32.totalorder %s15, 1
      %s193 = scalar_select %p192, %s15, 1
      %s194 = smul.addr %s193, 4
      %s195 = scalar_lea.vmem %s4, %s194
      %p196 = scmp.lt.s32.totalorder %s15, 1
      %s197 = scalar_select %p196, %s15, 1
      %s198 = smul.addr %s197, 4
      %s199 = scalar_lea.vmem %s0, %s198
      %p200 = scmp.lt.s32.totalorder %s15, 1
      %s201 = scalar_select %p200, %s15, 1
      %s202 = scalar_lea.vmem %s1, %s201
      %p203 = scmp.lt.s32.totalorder %s15, 1
      %s204 = scalar_select %p203, %s15, 1
      %s205 = smul.addr %s204, 4
      %s206 = scalar_lea.vmem %s4, %s205
      %v208 = vld [vmem:[%s202] sm:$0x1]
      %v209 = vsub.f32 1.0, %v208
      %v210 = vmul.f32 %v209, -10000.0
      %v211 = vld [vmem:[%s199] sm:$0xf]
      %v213 = vunpack.c.l.b16 %v211
      %v214 = vpack.c.b16 %v213, %v213
      %215 = vrot.lane.b32.xlu0 %v214, 96
      %v216 = vpop.permute.xlu0 %215
      %vm217 = vcmask 64512
      %v219 = vsel %vm217, %v211, 0
      %v222 = vsel %vm217, %v216, 0
      %224 = vmatpush.bf16.xpose.msra.mxu0 0
      %225 = vmatpush.bf16.xpose.msra.mxu0 0
      %226 = vmatpush.bf16.xpose.msra.mxu0 0
      %227 = vmatpush.bf16.xpose.msra.mxu0 0
      %228 = vmatpush.bf16.xpose.msra.mxu0 0
      %229 = vmatpush.bf16.xpose.msra.mxu0 0
      %230 = vmatpush.bf16.xpose.msra.mxu0 0
      %231 = vmatpush.bf16.xpose.msra.mxu0 %v222
      %232 = vmatmul.bf16.gmra.mxu0 %v219
      %v233 = vpop.f32.mrf.mxu0
      %v234 = vadd.f32 0.0, %v233
      %v235 = vpop.f32.mrf.mxu0
      %236 = vdwg.mxu0
      %v237 = vmul.f32 %v234, 0.35355338
      %v239 = vperm.slane %v210, 0
      %v241 = vadd.f32 %v237, %v239
      %v242 = vsel %vm217, %v241, -inf
      %243 = vmax.xlane.f32.xlu0 %v242
      %v244 = vpop.xlane.xlu0 %243
      %v245 = vsub.f32 %v241, %v244
      %v246 = vmul.f32 %v245, 1.442695
      %v247 = vpow.pop %v246
      %v248 = vsel %vm217, %v247, 0.0
      %249 = vadd.xlane.f32.xlu0 %v248
      %v250 = vpop.xlane.xlu0 %249
      %v251 = vrcp.pop %v250
      %v252 = vmul.f32 %v247, %v251
      %v253 = vpack.c.bf16 %v252, %v252
      %254 = vrot.lane.b32.xlu0 %v214, 64
      %v255 = vpop.permute.xlu0 %254
      %v257 = vsel %vm217, %v253, 0
      %vm259 = vcmask 1043456
      %v261 = vsel %vm259, %v255, 0
      %263 = vmatpush.bf16.msra.mxu0 0
      %264 = vmatpush.bf16.msra.mxu0 0
      %265 = vmatpush.bf16.msra.mxu0 0
      %266 = vmatpush.bf16.msra.mxu0 0
      %267 = vmatpush.bf16.msra.mxu0 0
      %268 = vmatpush.bf16.msra.mxu0 0
      %269 = vmatpush.bf16.msra.mxu0 0
      %270 = vmatpush.bf16.msra.mxu0 %v261
      %271 = vmatmul.bf16.gmra.mxu0 %v257
      %v272 = vpop.f32.mrf.mxu0
      %v273 = vadd.f32 0.0, %v272
      %v274 = vpop.f32.mrf.mxu0
      %275 = vdwg.mxu0
      %v276 = vpack.c.bf16 %v273, %v273
      %vm277 = vcmask 60416
      %278 = vst.msk [vmem:[#allocation2] sm:$0xf] %vm277, %v276
      %v279 = vld [vmem:[%s199] sm:$0xf]
      %v281 = vunpack.c.l.b16 %v279
      %v282 = vpack.c.b16 %v281, %v281
      %283 = vrot.lane.b32.xlu0 %v282, 120
      %v284 = vpop.permute.xlu0 %283
      %285 = vrot.lane.b32.xlu0 %v282, 88
      %v286 = vpop.permute.xlu0 %285
      %v288 = vsel %vm217, %v284, 0
      %v291 = vsel %vm217, %v286, 0
      %293 = vmatpush.bf16.xpose.msra.mxu0 0
      %294 = vmatpush.bf16.xpose.msra.mxu0 0
      %295 = vmatpush.bf16.xpose.msra.mxu0 0
      %296 = vmatpush.bf16.xpose.msra.mxu0 0
      %297 = vmatpush.bf16.xpose.msra.mxu0 0
      %298 = vmatpush.bf16.xpose.msra.mxu0 0
      %299 = vmatpush.bf16.xpose.msra.mxu0 0
      %300 = vmatpush.bf16.xpose.msra.mxu0 %v291
      %301 = vmatmul.bf16.gmra.mxu0 %v288
      %v302 = vpop.f32.mrf.mxu0
      %v303 = vadd.f32 0.0, %v302
      %v304 = vpop.f32.mrf.mxu0
      %305 = vdwg.mxu0
      %v306 = vmul.f32 %v303, 0.35355338
      %v307 = vadd.f32 %v306, %v239
      %v308 = vsel %vm217, %v307, -inf
      %309 = vmax.xlane.f32.xlu0 %v308
      %v310 = vpop.xlane.xlu0 %309
      %v311 = vsub.f32 %v307, %v310
      %v312 = vmul.f32 %v311, 1.442695
      %v313 = vpow.pop %v312
      %v314 = vsel %vm217, %v313, 0.0
      %315 = vadd.xlane.f32.xlu0 %v314
      %v316 = vpop.xlane.xlu0 %315
      %v317 = vrcp.pop %v316
      %v318 = vmul.f32 %v313, %v317
      %v319 = vpack.c.bf16 %v318, %v318
      %320 = vrot.lane.b32.xlu0 %v282, 56
      %v321 = vpop.permute.xlu0 %320
      %v323 = vsel %vm217, %v319, 0
      %v326 = vsel %vm259, %v321, 0
      %328 = vmatpush.bf16.msra.mxu0 0
      %329 = vmatpush.bf16.msra.mxu0 0
      %330 = vmatpush.bf16.msra.mxu0 0
      %331 = vmatpush.bf16.msra.mxu0 0
      %332 = vmatpush.bf16.msra.mxu0 0
      %333 = vmatpush.bf16.msra.mxu0 0
      %334 = vmatpush.bf16.msra.mxu0 0
      %335 = vmatpush.bf16.msra.mxu0 %v326
      %336 = vmatmul.bf16.gmra.mxu0 %v323
      %v337 = vpop.f32.mrf.mxu0
      %v338 = vadd.f32 0.0, %v337
      %v339 = vpop.f32.mrf.mxu0
      %340 = vdwg.mxu0
      %v341 = vpack.c.bf16 %v338, %v338
      %343 = vrot.lane.b32.xlu0 %v341, 8
      %v344 = vpop.permute.xlu0 %343
      %vm346 = vcmask 126016
      %347 = vst.msk [vmem:[#allocation2] sm:$0xf] %vm346, %v344
      %v348 = vld [vmem:[%s199] sm:$0xf]
      %v350 = vunpack.c.l.b16 %v348
      %v351 = vpack.c.b16 %v350, %v350
      %352 = vrot.lane.b32.xlu0 %v351, 112
      %v353 = vpop.permute.xlu0 %352
      %354 = vrot.lane.b32.xlu0 %v351, 80
      %v355 = vpop.permute.xlu0 %354
      %v357 = vsel %vm217, %v353, 0
      %v360 = vsel %vm217, %v355, 0
      %362 = vmatpush.bf16.xpose.msra.mxu0 0
      %363 = vmatpush.bf16.xpose.msra.mxu0 0
      %364 = vmatpush.bf16.xpose.msra.mxu0 0
      %365 = vmatpush.bf16.xpose.msra.mxu0 0
      %366 = vmatpush.bf16.xpose.msra.mxu0 0
      %367 = vmatpush.bf16.xpose.msra.mxu0 0
      %368 = vmatpush.bf16.xpose.msra.mxu0 0
      %369 = vmatpush.bf16.xpose.msra.mxu0 %v360
      %370 = vmatmul.bf16.gmra.mxu0 %v357
      %v371 = vpop.f32.mrf.mxu0
      %v372 = vadd.f32 0.0, %v371
      %v373 = vpop.f32.mrf.mxu0
      %374 = vdwg.mxu0
      %v375 = vmul.f32 %v372, 0.35355338
      %v376 = vadd.f32 %v375, %v239
      %v377 = vsel %vm217, %v376, -inf
      %378 = vmax.xlane.f32.xlu0 %v377
      %v379 = vpop.xlane.xlu0 %378
      %v380 = vsub.f32 %v376, %v379
      %v381 = vmul.f32 %v380, 1.442695
      %v382 = vpow.pop %v381
      %v383 = vsel %vm217, %v382, 0.0
      %384 = vadd.xlane.f32.xlu0 %v383
      %v385 = vpop.xlane.xlu0 %384
      %v386 = vrcp.pop %v385
      %v387 = vmul.f32 %v382, %v386
      %v388 = vpack.c.bf16 %v387, %v387
      %389 = vrot.lane.b32.xlu0 %v351, 48
      %v390 = vpop.permute.xlu0 %389
      %v392 = vsel %vm217, %v388, 0
      %v395 = vsel %vm259, %v390, 0
      %397 = vmatpush.bf16.msra.mxu0 0
      %398 = vmatpush.bf16.msra.mxu0 0
      %399 = vmatpush.bf16.msra.mxu0 0
      %400 = vmatpush.bf16.msra.mxu0 0
      %401 = vmatpush.bf16.msra.mxu0 0
      %402 = vmatpush.bf16.msra.mxu0 0
      %403 = vmatpush.bf16.msra.mxu0 0
      %404 = vmatpush.bf16.msra.mxu0 %v395
      %405 = vmatmul.bf16.gmra.mxu0 %v392
      %v406 = vpop.f32.mrf.mxu0
      %v407 = vadd.f32 0.0, %v406
      %v408 = vpop.f32.mrf.mxu0
      %409 = vdwg.mxu0
      %v410 = vpack.c.bf16 %v407, %v407
      %412 = vrot.lane.b32.xlu0 %v410, 16
      %v413 = vpop.permute.xlu0 %412
      %vm415 = vcmask 191616
      %416 = vst.msk [vmem:[#allocation2] sm:$0xf] %vm415, %v413
      %v417 = vld [vmem:[%s199] sm:$0xf]
      %v419 = vunpack.c.l.b16 %v417
      %v420 = vpack.c.b16 %v419, %v419
      %421 = vrot.lane.b32.xlu0 %v420, 104
      %v422 = vpop.permute.xlu0 %421
      %423 = vrot.lane.b32.xlu0 %v420, 72
      %v424 = vpop.permute.xlu0 %423
      %v426 = vsel %vm217, %v422, 0
      %v429 = vsel %vm217, %v424, 0
      %431 = vmatpush.bf16.xpose.msra.mxu0 0
      %432 = vmatpush.bf16.xpose.msra.mxu0 0
      %433 = vmatpush.bf16.xpose.msra.mxu0 0
      %434 = vmatpush.bf16.xpose.msra.mxu0 0
      %435 = vmatpush.bf16.xpose.msra.mxu0 0
      %436 = vmatpush.bf16.xpose.msra.mxu0 0
      %437 = vmatpush.bf16.xpose.msra.mxu0 0
      %438 = vmatpush.bf16.xpose.msra.mxu0 %v429
      %439 = vmatmul.bf16.gmra.mxu0 %v426
      %v440 = vpop.f32.mrf.mxu0
      %v441 = vadd.f32 0.0, %v440
      %v442 = vpop.f32.mrf.mxu0
      %443 = vdwg.mxu0
      %v444 = vmul.f32 %v441, 0.35355338
      %v445 = vadd.f32 %v444, %v239
      %v446 = vsel %vm217, %v445, -inf
      %447 = vmax.xlane.f32.xlu0 %v446
      %v448 = vpop.xlane.xlu0 %447
      %v449 = vsub.f32 %v445, %v448
      %v450 = vmul.f32 %v449, 1.442695
      %v451 = vpow.pop %v450
      %v452 = vsel %vm217, %v451, 0.0
      %453 = vadd.xlane.f32.xlu0 %v452
      %v454 = vpop.xlane.xlu0 %453
      %v455 = vrcp.pop %v454
      %v456 = vmul.f32 %v451, %v455
      %v457 = vpack.c.bf16 %v456, %v456
      %458 = vrot.lane.b32.xlu0 %v420, 40
      %v459 = vpop.permute.xlu0 %458
      %v461 = vsel %vm217, %v457, 0
      %v464 = vsel %vm259, %v459, 0
      %466 = vmatpush.bf16.msra.mxu0 0
      %467 = vmatpush.bf16.msra.mxu0 0
      %468 = vmatpush.bf16.msra.mxu0 0
      %469 = vmatpush.bf16.msra.mxu0 0
      %470 = vmatpush.bf16.msra.mxu0 0
      %471 = vmatpush.bf16.msra.mxu0 0
      %472 = vmatpush.bf16.msra.mxu0 0
      %473 = vmatpush.bf16.msra.mxu0 %v464
      %474 = vmatmul.bf16.gmra.mxu0 %v461
      %v475 = vpop.f32.mrf.mxu0
      %v476 = vadd.f32 0.0, %v475
      %v477 = vpop.f32.mrf.mxu0
      %478 = vdwg.mxu0
      %v479 = vpack.c.bf16 %v476, %v476
      %481 = vrot.lane.b32.xlu0 %v479, 24
      %v482 = vpop.permute.xlu0 %481
      %vm484 = vcmask 257216
      %485 = vst.msk [vmem:[#allocation2] sm:$0xf] %vm484, %v482
      %v486 = vld [vmem:[#allocation2] sm:$0xf]
      %v487 = vld [vmem:[%s2] sm:$0xf]
      %v488 = vld [vmem:[%s2 + $0x4] sm:$0xf]
      %v489 = vld [vmem:[%s2 + $0x8] sm:$0xf]
      %v490 = vld [vmem:[%s2 + $0xc] sm:$0xf]
      %v491 = vld [vmem:[%s3] sm:$0x1]
      %v493 = vperm.slane %v491, 0
      %v499 = vunpack.c.l.b16 %v487
      %v500 = vunpack.c.l.b16 %v488
      %v501 = vunpack.c.l.b16 %v489
      %v502 = vunpack.c.l.b16 %v490
      %v503 = vpack.c.b16 %v500, %v499
      %v504 = vpack.c.b16 %v502, %v501
      %vm507 = vcmask 261120
      %v509 = vsel %vm507, %v486, 0
      %511 = vmatpush.bf16.msra.mxu0 0
      %512 = vmatpush.bf16.msra.mxu0 0
      %513 = vmatpush.bf16.msra.mxu0 0
      %514 = vmatpush.bf16.msra.mxu0 0
      %515 = vmatpush.bf16.msra.mxu0 0
      %516 = vmatpush.bf16.msra.mxu0 0
      %517 = vmatpush.bf16.msra.mxu0 %v504
      %518 = vmatpush.bf16.msra.mxu0 %v503
      %519 = vmatmul.bf16.gmra.mxu0 %v509
      %v520 = vpop.f32.mrf.mxu0
      %v521 = vadd.f32 %v493, %v520
      %v522 = vpop.f32.mrf.mxu0
      %523 = vdwg.mxu0
      %v524 = vpack.c.bf16 %v521, %v521
      %vm525 = vcmask 257024
      %526 = vst.msk [vmem:[%s206] sm:$0xf] %vm525, %v524
      %p527 = scmp.lt.s32.totalorder %s15, 1
      %s528 = scalar_select %p527, %s15, 1
      %s529 = smul.addr %s528, 4
      %s530 = scalar_lea.vmem %s4, %s529
      // Predicated region
      $region37: #{_lambda_.23} parent=35 // pred_check
        %p531 = pneg %p127
      $region38: #{_lambda_.23} parent=35 // pred_check_branch
        %533 = sbr.rel (%p531) target = $region40
      $region39: #{_lambda_.23} parent=35 // pred_region
        _
      $region40: #{_lambda_.23} parent=35 // pred_fallthru
        _
    $region36: #{_lambda_.23} parent=5 // pred_fallthru
      _
    %p534 = scmp.le.s32.totalorder 2, %s10
    // Predicated region
    $region41: #{_lambda_.23} parent=5 // pred_check
      %p535 = pneg %p534
    $region42: #{_lambda_.23} parent=5 // pred_check_branch
      %537 = sbr.rel (%p535) target = $region44
    $region43: #{_lambda_.23} parent=5 // pred_region
      %s538 = ssub.s32 %s10, 2
      // Predicated region
      $region45: #{_lambda_.23} parent=43 // pred_check
        %p539 = pneg %p133
      $region46: #{_lambda_.23} parent=43 // pred_check_branch
        %541 = sbr.rel (%p539) target = $region48
      $region47: #{_lambda_.23} parent=43 // pred_region
        %p542 = scmp.lt.s32.totalorder %s16, 1
        %s543 = scalar_select %p542, %s16, 1
        %s544 = smul.addr %s543, 4
        %s545 = scalar_lea.vmem %s4, %s544
      $region48: #{_lambda_.23} parent=43 // pred_fallthru
        _
    $region44: #{_lambda_.23} parent=5 // pred_fallthru
      _
  $region6: #{_lambda_.23} parent=0 // loop_footer
    %s14 = sadd.s32 1, %s10
  $region7: #{_lambda_.23} parent=0 // loop_footer_branch
    %9 = sbr.rel target = $region3
  $region8: #{_lambda_.23} parent=0 // loop_exit
    _

// kernel: _lambda_.25
$region0: #{_lambda_.25}
  #allocation0 [shape = 'u32[]', space=smem, size = 0x4, offset = 0x4, fixed_abs, tag = 'smem constant byte address 0x4 - core index']
  #allocation1 [shape = 'u32[72,128]{1,0:T(1,128)}', space=vmem, size = 0x9000, scoped, tag = 'internal scratch']
  #allocation2 [shape = 'f32[16,64]{1,0:T(8,128)}', space=vmem, size = 0x2000, scoped, tag = 'scratch operand']
  %s0 = inlined_call_operand.vmem [shape: bf16[16,32], index: 0, kind: input, shape index: {}]
  %s1 = inlined_call_operand.vmem [shape: bf16[32,64], index: 1, kind: input, shape index: {}]
  %s2 = inlined_call_operand.vmem [shape: f32[1,64], index: 2, kind: input, shape index: {}]
  %s3 = inlined_call_operand.vmem [shape: bf16[16,64], index: 3, kind: output, shape index: {}]
  %s4 = sld [smem:[#allocation0]]
  $region30: #{_lambda_.25} parent=0
    _
  %s6 = ssub.s32 1, %s4
  %s7 = scalar_select 0, %s6, %s4
  // Predicated region
  $region2: #{_lambda_.25} parent=0 // pred_check
    _
  $region3: #{_lambda_.25} parent=0 // pred_check_branch
    %9 = sbr.rel (0) target = $region5
  $region4: #{_lambda_.25} parent=0 // pred_region
    _
  $region5: #{_lambda_.25} parent=0 // pred_fallthru
    _
  // Predicated region
  $region6: #{_lambda_.25} parent=0 // pred_check
    _
  $region7: #{_lambda_.25} parent=0 // pred_check_branch
    %11 = sbr.rel (0) target = $region9
  $region8: #{_lambda_.25} parent=0 // pred_region
    _
  $region9: #{_lambda_.25} parent=0 // pred_fallthru
    _
  // Predicated region
  $region10: #{_lambda_.25} parent=0 // pred_check
    _
  $region11: #{_lambda_.25} parent=0 // pred_check_branch
    %13 = sbr.rel (0) target = $region13
  $region12: #{_lambda_.25} parent=0 // pred_region
    _
  $region13: #{_lambda_.25} parent=0 // pred_fallthru
    _
  %p15 = scmp.eq.s32.totalorder 0, 0
  // Predicated region
  $region14: #{_lambda_.25} parent=0 // pred_check
    %p16 = pneg %p15
  $region15: #{_lambda_.25} parent=0 // pred_check_branch
    %18 = sbr.rel (%p16) target = $region17
  $region16: #{_lambda_.25} parent=0 // pred_region
    %vm19 = vcmask 523264
    %20 = vst.msk [vmem:[#allocation2] sm:$0xff] %vm19, 0.0
    %21 = vst.msk [vmem:[#allocation2 + $0x8] sm:$0xff] %vm19, 0.0
  $region17: #{_lambda_.25} parent=0 // pred_fallthru
    _
  %v22 = vld [vmem:[#allocation2] sm:$0xff]
  %v23 = vld [vmem:[#allocation2 + $0x8] sm:$0xff]
  %v24 = vld [vmem:[%s0] sm:$0xf]
  %v25 = vld [vmem:[%s0 + $0x4] sm:$0xf]
  %v26 = vld [vmem:[%s1] sm:$0xf]
  %v27 = vld [vmem:[%s1 + $0x4] sm:$0xf]
  %v28 = vld [vmem:[%s1 + $0x8] sm:$0xf]
  %v29 = vld [vmem:[%s1 + $0xc] sm:$0xf]
  %v32 = vunpack.c.l.b16 %v24
  %v33 = vunpack.c.l.b16 %v25
  %v34 = vpack.c.b16 %v33, %v32
  %v39 = vunpack.c.l.b16 %v26
  %v40 = vunpack.c.l.b16 %v27
  %v41 = vunpack.c.l.b16 %v28
  %v42 = vunpack.c.l.b16 %v29
  %v43 = vpack.c.b16 %v40, %v39
  %v44 = vpack.c.b16 %v42, %v41
  %vm47 = vcmask 261120
  %v49 = vsel %vm47, %v34, 0
  %51 = vmatpush.bf16.msra.mxu0 0
  %52 = vmatpush.bf16.msra.mxu0 0
  %53 = vmatpush.bf16.msra.mxu0 0
  %54 = vmatpush.bf16.msra.mxu0 0
  %55 = vmatpush.bf16.msra.mxu0 0
  %56 = vmatpush.bf16.msra.mxu0 0
  %57 = vmatpush.bf16.msra.mxu0 %v44
  %58 = vmatpush.bf16.msra.mxu0 %v43
  %59 = vmatmul.bf16.gmra.mxu0 %v49
  %v60 = vpop.f32.mrf.mxu0
  %v61 = vadd.f32 0.0, %v60
  %v62 = vpop.f32.mrf.mxu0
  %v63 = vadd.f32 0.0, %v62
  %64 = vdwg.mxu0
  %v65 = vadd.f32 %v22, %v61
  %v66 = vadd.f32 %v23, %v63
  %vm67 = vcmask 523264
  %68 = vst.msk [vmem:[#allocation2] sm:$0xff] %vm67, %v65
  %69 = vst.msk [vmem:[#allocation2 + $0x8] sm:$0xff] %vm67, %v66
  // Predicated region
  $region18: #{_lambda_.25} parent=0 // pred_check
    %p70 = pneg %p15
  $region19: #{_lambda_.25} parent=0 // pred_check_branch
    %72 = sbr.rel (%p70) target = $region21
  $region20: #{_lambda_.25} parent=0 // pred_region
    %v73 = vld [vmem:[#allocation2] sm:$0xff]
    %v74 = vld [vmem:[#allocation2 + $0x8] sm:$0xff]
    %v75 = vld [vmem:[%s2] sm:$0x1]
    %v77 = vperm.slane %v75, 0
    %v79 = vadd.f32 %v73, %v77
    %v80 = vadd.f32 %v74, %v77
    %v81 = vmul.f32 %v79, 0.5
    %v82 = vmul.f32 %v80, 0.5
    %v83 = vmul.f32 %v79, 0.044715
    %v84 = vmul.f32 %v80, 0.044715
    %v85 = vmul.f32 %v83, %v79
    %v86 = vmul.f32 %v84, %v80
    %v87 = vmul.f32 %v85, %v79
    %v88 = vmul.f32 %v86, %v80
    %v89 = vadd.f32 %v79, %v87
    %v90 = vadd.f32 %v80, %v88
    %v91 = vmul.f32 %v89, 0.7978846
    %v92 = vmul.f32 %v90, 0.7978846
    %v93 = vtanh.pop %v91
    %v94 = vtanh.pop %v92
    %v95 = vadd.f32 %v93, 1.0
    %v96 = vadd.f32 %v94, 1.0
    %v97 = vmul.f32 %v81, %v95
    %v98 = vmul.f32 %v82, %v96
    %v99 = vpack.c.bf16 %v97, %v97
    %v100 = vpack.c.bf16 %v98, %v98
    %vm101 = vcmask 519168
    %102 = vst.msk [vmem:[%s3] sm:$0xf] %vm101, %v99
    %103 = vst.msk [vmem:[%s3 + $0x4] sm:$0xf] %vm101, %v100
  $region21: #{_lambda_.25} parent=0 // pred_fallthru
    _
  // Predicated region
  $region22: #{_lambda_.25} parent=0 // pred_check
    _
  $region23: #{_lambda_.25} parent=0 // pred_check_branch
    %105 = sbr.rel (0) target = $region25
  $region24: #{_lambda_.25} parent=0 // pred_region
    _
  $region25: #{_lambda_.25} parent=0 // pred_fallthru
    _
  // Predicated region
  $region26: #{_lambda_.25} parent=0 // pred_check
    _
  $region27: #{_lambda_.25} parent=0 // pred_check_branch
    %107 = sbr.rel (0) target = $region29
  $region28: #{_lambda_.25} parent=0 // pred_region
    _
  $region29: #{_lambda_.25} parent=0 // pred_fallthru
    _

// kernel: _lambda_.26
$region0: #{_lambda_.26}
  #allocation0 [shape = 'u32[]', space=smem, size = 0x4, offset = 0x4, fixed_abs, tag = 'smem constant byte address 0x4 - core index']
  #allocation1 [shape = 'u32[72,128]{1,0:T(1,128)}', space=vmem, size = 0x9000, scoped, tag = 'internal scratch']
  #allocation2 [shape = 'f32[16,32]{1,0:T(8,128)}', space=vmem, size = 0x2000, scoped, tag = 'scratch operand']
  %s0 = inlined_call_operand.vmem [shape: bf16[16,64], index: 0, kind: input, shape index: {}]
  %s1 = inlined_call_operand.vmem [shape: bf16[64,32], index: 1, kind: input, shape index: {}]
  %s2 = inlined_call_operand.vmem [shape: f32[1,32], index: 2, kind: input, shape index: {}]
  %s3 = inlined_call_operand.vmem [shape: bf16[16,32], index: 3, kind: output, shape index: {}]
  %s4 = sld [smem:[#allocation0]]
  $region30: #{_lambda_.26} parent=0
    _
  %s6 = ssub.s32 1, %s4
  %s7 = scalar_select 0, %s6, %s4
  // Predicated region
  $region2: #{_lambda_.26} parent=0 // pred_check
    _
  $region3: #{_lambda_.26} parent=0 // pred_check_branch
    %9 = sbr.rel (0) target = $region5
  $region4: #{_lambda_.26} parent=0 // pred_region
    _
  $region5: #{_lambda_.26} parent=0 // pred_fallthru
    _
  // Predicated region
  $region6: #{_lambda_.26} parent=0 // pred_check
    _
  $region7: #{_lambda_.26} parent=0 // pred_check_branch
    %11 = sbr.rel (0) target = $region9
  $region8: #{_lambda_.26} parent=0 // pred_region
    _
  $region9: #{_lambda_.26} parent=0 // pred_fallthru
    _
  // Predicated region
  $region10: #{_lambda_.26} parent=0 // pred_check
    _
  $region11: #{_lambda_.26} parent=0 // pred_check_branch
    %13 = sbr.rel (0) target = $region13
  $region12: #{_lambda_.26} parent=0 // pred_region
    _
  $region13: #{_lambda_.26} parent=0 // pred_fallthru
    _
  %p15 = scmp.eq.s32.totalorder 0, 0
  // Predicated region
  $region14: #{_lambda_.26} parent=0 // pred_check
    %p16 = pneg %p15
  $region15: #{_lambda_.26} parent=0 // pred_check_branch
    %18 = sbr.rel (%p16) target = $region17
  $region16: #{_lambda_.26} parent=0 // pred_region
    %vm19 = vcmask 261120
    %20 = vst.msk [vmem:[#allocation2] sm:$0xff] %vm19, 0.0
    %21 = vst.msk [vmem:[#allocation2 + $0x8] sm:$0xff] %vm19, 0.0
  $region17: #{_lambda_.26} parent=0 // pred_fallthru
    _
  %v22 = vld [vmem:[#allocation2] sm:$0xff]
  %v23 = vld [vmem:[#allocation2 + $0x8] sm:$0xff]
  %v24 = vld [vmem:[%s0] sm:$0xf]
  %v25 = vld [vmem:[%s0 + $0x4] sm:$0xf]
  %v26 = vld [vmem:[%s1] sm:$0xf]
  %v27 = vld [vmem:[%s1 + $0x4] sm:$0xf]
  %v28 = vld [vmem:[%s1 + $0x8] sm:$0xf]
  %v29 = vld [vmem:[%s1 + $0xc] sm:$0xf]
  %v30 = vld [vmem:[%s1 + $0x10] sm:$0xf]
  %v31 = vld [vmem:[%s1 + $0x14] sm:$0xf]
  %v32 = vld [vmem:[%s1 + $0x18] sm:$0xf]
  %v33 = vld [vmem:[%s1 + $0x1c] sm:$0xf]
  %v36 = vunpack.c.l.b16 %v24
  %v37 = vunpack.c.l.b16 %v25
  %v38 = vpack.c.b16 %v37, %v36
  %v47 = vunpack.c.l.b16 %v26
  %v48 = vunpack.c.l.b16 %v27
  %v49 = vunpack.c.l.b16 %v28
  %v50 = vunpack.c.l.b16 %v29
  %v51 = vunpack.c.l.b16 %v30
  %v52 = vunpack.c.l.b16 %v31
  %v53 = vunpack.c.l.b16 %v32
  %v54 = vunpack.c.l.b16 %v33
  %v55 = vpack.c.b16 %v48, %v47
  %v56 = vpack.c.b16 %v50, %v49
  %v57 = vpack.c.b16 %v52, %v51
  %v58 = vpack.c.b16 %v54, %v53
  %vm63 = vcmask 523264
  %v65 = vsel %vm63, %v38, 0
  %67 = vmatpush.bf16.msra.mxu0 0
  %68 = vmatpush.bf16.msra.mxu0 0
  %69 = vmatpush.bf16.msra.mxu0 0
  %70 = vmatpush.bf16.msra.mxu0 0
  %71 = vmatpush.bf16.msra.mxu0 %v58
  %72 = vmatpush.bf16.msra.mxu0 %v57
  %73 = vmatpush.bf16.msra.mxu0 %v56
  %74 = vmatpush.bf16.msra.mxu0 %v55
  %75 = vmatmul.bf16.gmra.mxu0 %v65
  %v76 = vpop.f32.mrf.mxu0
  %v77 = vadd.f32 0.0, %v76
  %v78 = vpop.f32.mrf.mxu0
  %v79 = vadd.f32 0.0, %v78
  %80 = vdwg.mxu0
  %v81 = vadd.f32 %v22, %v77
  %v82 = vadd.f32 %v23, %v79
  %vm83 = vcmask 261120
  %84 = vst.msk [vmem:[#allocation2] sm:$0xff] %vm83, %v81
  %85 = vst.msk [vmem:[#allocation2 + $0x8] sm:$0xff] %vm83, %v82
  // Predicated region
  $region18: #{_lambda_.26} parent=0 // pred_check
    %p86 = pneg %p15
  $region19: #{_lambda_.26} parent=0 // pred_check_branch
    %88 = sbr.rel (%p86) target = $region21
  $region20: #{_lambda_.26} parent=0 // pred_region
    %v89 = vld [vmem:[#allocation2] sm:$0xff]
    %v90 = vld [vmem:[#allocation2 + $0x8] sm:$0xff]
    %v91 = vld [vmem:[%s2] sm:$0x1]
    %v93 = vperm.slane %v91, 0
    %v95 = vadd.f32 %v89, %v93
    %v96 = vadd.f32 %v90, %v93
    %v97 = vpack.c.bf16 %v95, %v95
    %v98 = vpack.c.bf16 %v96, %v96
    %vm99 = vcmask 257024
    %100 = vst.msk [vmem:[%s3] sm:$0xf] %vm99, %v97
    %101 = vst.msk [vmem:[%s3 + $0x4] sm:$0xf] %vm99, %v98
  $region21: #{_lambda_.26} parent=0 // pred_fallthru
    _
  // Predicated region
  $region22: #{_lambda_.26} parent=0 // pred_check
    _
  $region23: #{_lambda_.26} parent=0 // pred_check_branch
    %103 = sbr.rel (0) target = $region25
  $region24: #{_lambda_.26} parent=0 // pred_region
    _
  $region25: #{_lambda_.26} parent=0 // pred_fallthru
    _
  // Predicated region
  $region26: #{_lambda_.26} parent=0 // pred_check
    _
  $region27: #{_lambda_.26} parent=0 // pred_check_branch
    %105 = sbr.rel (0) target = $region29
  $region28: #{_lambda_.26} parent=0 // pred_region
    _
  $region29: #{_lambda_.26} parent=0 // pred_fallthru
    _

// kernel: _lambda_.35
$region0: #{_lambda_.35}
  #allocation0 [shape = 'u32[]', space=smem, size = 0x4, offset = 0x4, fixed_abs, tag = 'smem constant byte address 0x4 - core index']
  #allocation1 [shape = 'u32[72,128]{1,0:T(1,128)}', space=vmem, size = 0x9000, scoped, tag = 'internal scratch']
  #allocation2 [shape = 'f32[6,32]{1,0:T(8,128)}', space=vmem, size = 0x1000, scoped, tag = 'scratch operand']
  %s0 = inlined_call_operand.vmem [shape: bf16[6,32], index: 0, kind: input, shape index: {}]
  %s1 = inlined_call_operand.vmem [shape: bf16[32,32], index: 1, kind: input, shape index: {}]
  %s2 = inlined_call_operand.vmem [shape: f32[1,32], index: 2, kind: input, shape index: {}]
  %s3 = inlined_call_operand.vmem [shape: bf16[6,32], index: 3, kind: output, shape index: {}]
  %s4 = sld [smem:[#allocation0]]
  $region30: #{_lambda_.35} parent=0
    _
  %s6 = ssub.s32 1, %s4
  %s7 = scalar_select 0, %s6, %s4
  // Predicated region
  $region2: #{_lambda_.35} parent=0 // pred_check
    _
  $region3: #{_lambda_.35} parent=0 // pred_check_branch
    %9 = sbr.rel (0) target = $region5
  $region4: #{_lambda_.35} parent=0 // pred_region
    _
  $region5: #{_lambda_.35} parent=0 // pred_fallthru
    _
  // Predicated region
  $region6: #{_lambda_.35} parent=0 // pred_check
    _
  $region7: #{_lambda_.35} parent=0 // pred_check_branch
    %11 = sbr.rel (0) target = $region9
  $region8: #{_lambda_.35} parent=0 // pred_region
    _
  $region9: #{_lambda_.35} parent=0 // pred_fallthru
    _
  // Predicated region
  $region10: #{_lambda_.35} parent=0 // pred_check
    _
  $region11: #{_lambda_.35} parent=0 // pred_check_branch
    %13 = sbr.rel (0) target = $region13
  $region12: #{_lambda_.35} parent=0 // pred_region
    _
  $region13: #{_lambda_.35} parent=0 // pred_fallthru
    _
  %p15 = scmp.eq.s32.totalorder 0, 0
  // Predicated region
  $region14: #{_lambda_.35} parent=0 // pred_check
    %p16 = pneg %p15
  $region15: #{_lambda_.35} parent=0 // pred_check_branch
    %18 = sbr.rel (%p16) target = $region17
  $region16: #{_lambda_.35} parent=0 // pred_region
    %vm19 = vcmask 259072
    %20 = vst.msk [vmem:[#allocation2] sm:$0x3f] %vm19, 0.0
  $region17: #{_lambda_.35} parent=0 // pred_fallthru
    _
  %v21 = vld [vmem:[#allocation2] sm:$0x3f]
  %v22 = vld [vmem:[%s0] sm:$0x7]
  %v23 = vld [vmem:[%s1] sm:$0xf]
  %v24 = vld [vmem:[%s1 + $0x4] sm:$0xf]
  %v25 = vld [vmem:[%s1 + $0x8] sm:$0xf]
  %v26 = vld [vmem:[%s1 + $0xc] sm:$0xf]
  %v31 = vunpack.c.l.b16 %v23
  %v32 = vunpack.c.l.b16 %v24
  %v33 = vunpack.c.l.b16 %v25
  %v34 = vunpack.c.l.b16 %v26
  %v35 = vpack.c.b16 %v32, %v31
  %v36 = vpack.c.b16 %v34, %v33
  %vm39 = vcmask 261120
  %v41 = vsel %vm39, %v22, 0
  %43 = vmatpush.bf16.msra.mxu0 0
  %44 = vmatpush.bf16.msra.mxu0 0
  %45 = vmatpush.bf16.msra.mxu0 0
  %46 = vmatpush.bf16.msra.mxu0 0
  %47 = vmatpush.bf16.msra.mxu0 0
  %48 = vmatpush.bf16.msra.mxu0 0
  %49 = vmatpush.bf16.msra.mxu0 %v36
  %50 = vmatpush.bf16.msra.mxu0 %v35
  %51 = vmatmul.bf16.gmra.mxu0 %v41
  %v52 = vpop.f32.mrf.mxu0
  %v53 = vadd.f32 0.0, %v52
  %v54 = vpop.f32.mrf.mxu0
  %55 = vdwg.mxu0
  %v56 = vadd.f32 %v21, %v53
  %vm57 = vcmask 259072
  %58 = vst.msk [vmem:[#allocation2] sm:$0x3f] %vm57, %v56
  // Predicated region
  $region18: #{_lambda_.35} parent=0 // pred_check
    %p59 = pneg %p15
  $region19: #{_lambda_.35} parent=0 // pred_check_branch
    %61 = sbr.rel (%p59) target = $region21
  $region20: #{_lambda_.35} parent=0 // pred_region
    %v62 = vld [vmem:[#allocation2] sm:$0x3f]
    %v63 = vld [vmem:[%s2] sm:$0x1]
    %v65 = vperm.slane %v63, 0
    %v67 = vadd.f32 %v62, %v65
    %v68 = vmul.f32 %v67, 0.5
    %v69 = vmul.f32 %v67, 0.044715
    %v70 = vmul.f32 %v69, %v67
    %v71 = vmul.f32 %v70, %v67
    %v72 = vadd.f32 %v67, %v71
    %v73 = vmul.f32 %v72, 0.7978846
    %v74 = vtanh.pop %v73
    %v75 = vadd.f32 %v74, 1.0
    %v76 = vmul.f32 %v68, %v75
    %v77 = vpack.c.bf16 %v76, %v76
    %vm78 = vcmask 256000
    %79 = vst.msk [vmem:[%s3] sm:$0x7] %vm78, %v77
  $region21: #{_lambda_.35} parent=0 // pred_fallthru
    _
  // Predicated region
  $region22: #{_lambda_.35} parent=0 // pred_check
    _
  $region23: #{_lambda_.35} parent=0 // pred_check_branch
    %81 = sbr.rel (0) target = $region25
  $region24: #{_lambda_.35} parent=0 // pred_region
    _
  $region25: #{_lambda_.35} parent=0 // pred_fallthru
    _
  // Predicated region
  $region26: #{_lambda_.35} parent=0 // pred_check
    _
  $region27: #{_lambda_.35} parent=0 // pred_check_branch
    %83 = sbr.rel (0) target = $region29
  $region28: #{_lambda_.35} parent=0 // pred_region
    _
  $region29: #{_lambda_.35} parent=0 // pred_fallthru
    _

// kernel: _lambda_.36
$region0: #{_lambda_.36}
  #allocation0 [shape = 'u32[]', space=smem, size = 0x4, offset = 0x4, fixed_abs, tag = 'smem constant byte address 0x4 - core index']
  #allocation1 [shape = 'u32[72,128]{1,0:T(1,128)}', space=vmem, size = 0x9000, scoped, tag = 'internal scratch']
  %s0 = inlined_call_operand.vmem [shape: bf16[6,32], index: 0, kind: input, shape index: {}]
  %s1 = inlined_call_operand.vmem [shape: f32[1,32], index: 1, kind: input, shape index: {}]
  %s2 = inlined_call_operand.vmem [shape: f32[1,32], index: 2, kind: input, shape index: {}]
  %s3 = inlined_call_operand.vmem [shape: bf16[6,32], index: 3, kind: output, shape index: {}]
  %s4 = sld [smem:[#allocation0]]
  $region22: #{_lambda_.36} parent=0
    _
  %s6 = ssub.s32 1, %s4
  %s7 = scalar_select 0, %s6, %s4
  // Predicated region
  $region2: #{_lambda_.36} parent=0 // pred_check
    _
  $region3: #{_lambda_.36} parent=0 // pred_check_branch
    %9 = sbr.rel (0) target = $region5
  $region4: #{_lambda_.36} parent=0 // pred_region
    _
  $region5: #{_lambda_.36} parent=0 // pred_fallthru
    _
  // Predicated region
  $region6: #{_lambda_.36} parent=0 // pred_check
    _
  $region7: #{_lambda_.36} parent=0 // pred_check_branch
    %11 = sbr.rel (0) target = $region9
  $region8: #{_lambda_.36} parent=0 // pred_region
    _
  $region9: #{_lambda_.36} parent=0 // pred_fallthru
    _
  // Predicated region
  $region10: #{_lambda_.36} parent=0 // pred_check
    _
  $region11: #{_lambda_.36} parent=0 // pred_check_branch
    %13 = sbr.rel (0) target = $region13
  $region12: #{_lambda_.36} parent=0 // pred_region
    _
  $region13: #{_lambda_.36} parent=0 // pred_fallthru
    _
  %v14 = vld [vmem:[%s0] sm:$0x7]
  %v15 = vunpack.c.l.bf16 %v14
  %vm16 = vcmask 259072
  %v17 = vsel %vm16, %v15, 0.0
  %18 = vadd.xlane.f32.xlu0 %v17
  %v19 = vpop.xlane.xlu0 %18
  %v20 = vrcp.pop 32.0
  %v21 = vmul.f32 32.0, %v20
  %v22 = vsub.f32 1.0, %v21
  %v23 = vmul.f32 %v20, %v22
  %v24 = vadd.f32 %v20, %v23
  %vm25 = vweird.f32 %v20
  %v26 = vsel %vm25, %v20, %v24
  %v27 = vmul.f32 %v19, %v26
  %v28 = vsub.f32 %v15, %v27
  %v29 = vmul.f32 %v28, %v28
  %v30 = vsel %vm16, %v29, 0.0
  %31 = vadd.xlane.f32.xlu0 %v30
  %v32 = vpop.xlane.xlu0 %31
  %v33 = vmul.f32 %v32, %v26
  %v34 = vadd.f32 %v33, 1e-12
  %v35 = vrsqrt.pop %v34
  %v36 = vmul.f32 %v35, %v34
  %v37 = vmul.f32 %v36, %v35
  %v38 = vmul.f32 0.5, %v37
  %v39 = vsub.f32 1.5, %v38
  %v40 = vmul.f32 %v35, %v39
  %vm41 = vweird.f32 %v34
  %vm42 = vweird.f32 %v35
  %vm43 = vmor %vm41, %vm42
  %v44 = vsel %vm43, %v35, %v40
  %v45 = vmul.f32 %v28, %v44
  %v46 = vld [vmem:[%s1] sm:$0x1]
  %v48 = vperm.slane %v46, 0
  %v50 = vmul.f32 %v45, %v48
  %v51 = vld [vmem:[%s2] sm:$0x1]
  %v53 = vperm.slane %v51, 0
  %v55 = vadd.f32 %v50, %v53
  %v56 = vpack.c.bf16 %v55, %v55
  %vm57 = vcmask 256000
  %58 = vst.msk [vmem:[%s3] sm:$0x7] %vm57, %v56
  // Predicated region
  $region14: #{_lambda_.36} parent=0 // pred_check
    _
  $region15: #{_lambda_.36} parent=0 // pred_check_branch
    %60 = sbr.rel (0) target = $region17
  $region16: #{_lambda_.36} parent=0 // pred_region
    _
  $region17: #{_lambda_.36} parent=0 // pred_fallthru
    _
  // Predicated region
  $region18: #{_lambda_.36} parent=0 // pred_check
    _
  $region19: #{_lambda_.36} parent=0 // pred_check_branch
    %62 = sbr.rel (0) target = $region21
  $region20: #{_lambda_.36} parent=0 // pred_region
    _
  $region21: #{_lambda_.36} parent=0 // pred_fallthru
    _

// kernel: _lambda_.37
$region0: #{_lambda_.37}
  #allocation0 [shape = 'u32[]', space=smem, size = 0x4, offset = 0x4, fixed_abs, tag = 'smem constant byte address 0x4 - core index']
  #allocation1 [shape = 'u32[72,128]{1,0:T(1,128)}', space=vmem, size = 0x9000, scoped, tag = 'internal scratch']
  #allocation2 [shape = 'f32[6,24]{1,0:T(8,128)}', space=vmem, size = 0x1000, scoped, tag = 'scratch operand']
  %s0 = inlined_call_operand.vmem [shape: bf16[6,32], index: 0, kind: input, shape index: {}]
  %s1 = inlined_call_operand.vmem [shape: bf16[32,24], index: 1, kind: input, shape index: {}]
  %s2 = inlined_call_operand.vmem [shape: bf16[6,24], index: 2, kind: output, shape index: {}]
  %s3 = sld [smem:[#allocation0]]
  $region26: #{_lambda_.37} parent=0
    _
  %s5 = ssub.s32 1, %s3
  %s6 = scalar_select 0, %s5, %s3
  // Predicated region
  $region2: #{_lambda_.37} parent=0 // pred_check
    _
  $region3: #{_lambda_.37} parent=0 // pred_check_branch
    %8 = sbr.rel (0) target = $region5
  $region4: #{_lambda_.37} parent=0 // pred_region
    _
  $region5: #{_lambda_.37} parent=0 // pred_fallthru
    _
  // Predicated region
  $region6: #{_lambda_.37} parent=0 // pred_check
    _
  $region7: #{_lambda_.37} parent=0 // pred_check_branch
    %10 = sbr.rel (0) target = $region9
  $region8: #{_lambda_.37} parent=0 // pred_region
    _
  $region9: #{_lambda_.37} parent=0 // pred_fallthru
    _
  %p12 = scmp.eq.s32.totalorder 0, 0
  // Predicated region
  $region10: #{_lambda_.37} parent=0 // pred_check
    %p13 = pneg %p12
  $region11: #{_lambda_.37} parent=0 // pred_check_branch
    %15 = sbr.rel (%p13) target = $region13
  $region12: #{_lambda_.37} parent=0 // pred_region
    %vm16 = vcmask 193536
    %17 = vst.msk [vmem:[#allocation2] sm:$0x3f] %vm16, 0.0
  $region13: #{_lambda_.37} parent=0 // pred_fallthru
    _
  %v18 = vld [vmem:[#allocation2] sm:$0x3f]
  %v19 = vld [vmem:[%s0] sm:$0x7]
  %v20 = vld [vmem:[%s1] sm:$0xf]
  %v21 = vld [vmem:[%s1 + $0x4] sm:$0xf]
  %v22 = vld [vmem:[%s1 + $0x8] sm:$0xf]
  %v23 = vld [vmem:[%s1 + $0xc] sm:$0xf]
  %v28 = vunpack.c.l.b16 %v20
  %v29 = vunpack.c.l.b16 %v21
  %v30 = vunpack.c.l.b16 %v22
  %v31 = vunpack.c.l.b16 %v23
  %v32 = vpack.c.b16 %v29, %v28
  %v33 = vpack.c.b16 %v31, %v30
  %vm36 = vcmask 261120
  %v38 = vsel %vm36, %v19, 0
  %40 = vmatpush.bf16.msra.mxu0 0
  %41 = vmatpush.bf16.msra.mxu0 0
  %42 = vmatpush.bf16.msra.mxu0 0
  %43 = vmatpush.bf16.msra.mxu0 0
  %44 = vmatpush.bf16.msra.mxu0 0
  %45 = vmatpush.bf16.msra.mxu0 0
  %46 = vmatpush.bf16.msra.mxu0 %v33
  %47 = vmatpush.bf16.msra.mxu0 %v32
  %48 = vmatmul.bf16.gmra.mxu0 %v38
  %v49 = vpop.f32.mrf.mxu0
  %v50 = vadd.f32 0.0, %v49
  %v51 = vpop.f32.mrf.mxu0
  %52 = vdwg.mxu0
  %v53 = vadd.f32 %v18, %v50
  %vm54 = vcmask 193536
  %55 = vst.msk [vmem:[#allocation2] sm:$0x3f] %vm54, %v53
  // Predicated region
  $region14: #{_lambda_.37} parent=0 // pred_check
    %p56 = pneg %p12
  $region15: #{_lambda_.37} parent=0 // pred_check_branch
    %58 = sbr.rel (%p56) target = $region17
  $region16: #{_lambda_.37} parent=0 // pred_region
    %v59 = vld [vmem:[#allocation2] sm:$0x3f]
    %v60 = vpack.c.bf16 %v59, %v59
    %vm61 = vcmask 190464
    %62 = vst.msk [vmem:[%s2] sm:$0x7] %vm61, %v60
  $region17: #{_lambda_.37} parent=0 // pred_fallthru
    _
  // Predicated region
  $region18: #{_lambda_.37} parent=0 // pred_check
    _
  $region19: #{_lambda_.37} parent=0 // pred_check_branch
    %64 = sbr.rel (0) target = $region21
  $region20: #{_lambda_.37} parent=0 // pred_region
    _
  $region21: #{_lambda_.37} parent=0 // pred_fallthru
    _
  // Predicated region
  $region22: #{_lambda_.37} parent=0 // pred_check
    _
  $region23: #{_lambda_.37} parent=0 // pred_check_branch
    %66 = sbr.rel (0) target = $region25
  $region24: #{_lambda_.37} parent=0 // pred_region
    _
  $region25: #{_lambda_.37} parent=0 // pred_fallthru
    _

// kernel: _lambda_.38
$region0: #{_lambda_.38}
  #allocation0 [shape = 'u32[]', space=smem, size = 0x4, offset = 0x4, fixed_abs, tag = 'smem constant byte address 0x4 - core index']
  #allocation1 [shape = 'u32[72,128]{1,0:T(1,128)}', space=vmem, size = 0x9000, scoped, tag = 'internal scratch']
  #allocation2 [shape = 'f32[6,64]{1,0:T(8,128)}', space=vmem, size = 0x1000, scoped, tag = 'scratch operand']
  %s0 = inlined_call_operand.vmem [shape: bf16[6,24], index: 0, kind: input, shape index: {}]
  %s1 = inlined_call_operand.vmem [shape: bf16[24,64], index: 1, kind: input, shape index: {}]
  %s2 = inlined_call_operand.vmem [shape: f32[1,64], index: 2, kind: input, shape index: {}]
  %s3 = inlined_call_operand.vmem [shape: f32[6,64], index: 3, kind: output, shape index: {}]
  %s4 = sld [smem:[#allocation0]]
  $region30: #{_lambda_.38} parent=0
    _
  %s6 = ssub.s32 1, %s4
  %s7 = scalar_select 0, %s6, %s4
  // Predicated region
  $region2: #{_lambda_.38} parent=0 // pred_check
    _
  $region3: #{_lambda_.38} parent=0 // pred_check_branch
    %9 = sbr.rel (0) target = $region5
  $region4: #{_lambda_.38} parent=0 // pred_region
    _
  $region5: #{_lambda_.38} parent=0 // pred_fallthru
    _
  // Predicated region
  $region6: #{_lambda_.38} parent=0 // pred_check
    _
  $region7: #{_lambda_.38} parent=0 // pred_check_branch
    %11 = sbr.rel (0) target = $region9
  $region8: #{_lambda_.38} parent=0 // pred_region
    _
  $region9: #{_lambda_.38} parent=0 // pred_fallthru
    _
  // Predicated region
  $region10: #{_lambda_.38} parent=0 // pred_check
    _
  $region11: #{_lambda_.38} parent=0 // pred_check_branch
    %13 = sbr.rel (0) target = $region13
  $region12: #{_lambda_.38} parent=0 // pred_region
    _
  $region13: #{_lambda_.38} parent=0 // pred_fallthru
    _
  %p15 = scmp.eq.s32.totalorder 0, 0
  // Predicated region
  $region14: #{_lambda_.38} parent=0 // pred_check
    %p16 = pneg %p15
  $region15: #{_lambda_.38} parent=0 // pred_check_branch
    %18 = sbr.rel (%p16) target = $region17
  $region16: #{_lambda_.38} parent=0 // pred_region
    %vm19 = vcmask 521216
    %20 = vst.msk [vmem:[#allocation2] sm:$0x3f] %vm19, 0.0
  $region17: #{_lambda_.38} parent=0 // pred_fallthru
    _
  %v21 = vld [vmem:[#allocation2] sm:$0x3f]
  %v22 = vld [vmem:[%s0] sm:$0x7]
  %v23 = vld [vmem:[%s1] sm:$0xf]
  %v24 = vld [vmem:[%s1 + $0x4] sm:$0xf]
  %v25 = vld [vmem:[%s1 + $0x8] sm:$0xf]
  %v29 = vunpack.c.l.b16 %v23
  %v30 = vunpack.c.l.b16 %v24
  %v31 = vunpack.c.l.b16 %v25
  %v32 = vpack.c.b16 %v30, %v29
  %v33 = vpack.c.b16 %v31, %v31
  %vm35 = vcmask 195584
  %v37 = vsel %vm35, %v22, 0
  %vm39 = vcmask 1043456
  %v41 = vsel %vm39, %v33, 0
  %43 = vmatpush.bf16.msra.mxu0 0
  %44 = vmatpush.bf16.msra.mxu0 0
  %45 = vmatpush.bf16.msra.mxu0 0
  %46 = vmatpush.bf16.msra.mxu0 0
  %47 = vmatpush.bf16.msra.mxu0 0
  %48 = vmatpush.bf16.msra.mxu0 0
  %49 = vmatpush.bf16.msra.mxu0 %v41
  %50 = vmatpush.bf16.msra.mxu0 %v32
  %51 = vmatmul.bf16.gmra.mxu0 %v37
  %v52 = vpop.f32.mrf.mxu0
  %v53 = vadd.f32 0.0, %v52
  %v54 = vpop.f32.mrf.mxu0
  %55 = vdwg.mxu0
  %v56 = vadd.f32 %v21, %v53
  %vm57 = vcmask 521216
  %58 = vst.msk [vmem:[#allocation2] sm:$0x3f] %vm57, %v56
  // Predicated region
  $region18: #{_lambda_.38} parent=0 // pred_check
    %p59 = pneg %p15
  $region19: #{_lambda_.38} parent=0 // pred_check_branch
    %61 = sbr.rel (%p59) target = $region21
  $region20: #{_lambda_.38} parent=0 // pred_region
    %v62 = vld [vmem:[#allocation2] sm:$0x3f]
    %v63 = vld [vmem:[%s2] sm:$0x1]
    %v65 = vperm.slane %v63, 0
    %v67 = vadd.f32 %v62, %v65
    %68 = vst.msk [vmem:[%s3] sm:$0x3f] %vm57, %v67
  $region21: #{_lambda_.38} parent=0 // pred_fallthru
    _
  // Predicated region
  $region22: #{_lambda_.38} parent=0 // pred_check
    _
  $region23: #{_lambda_.38} parent=0 // pred_check_branch
    %70 = sbr.rel (0) target = $region25
  $region24: #{_lambda_.38} parent=0 // pred_region
    _
  $region25: #{_lambda_.38} parent=0 // pred_fallthru
    _
  // Predicated region
  $region26: #{_lambda_.38} parent=0 // pred_check
    _
  $region27: #{_lambda_.38} parent=0 // pred_check_branch
    %72 = sbr.rel (0) target = $region29
  $region28: #{_lambda_.38} parent=0 // pred_region
    _
  $region29: #{_lambda_.38} parent=0 // pred_fallthru
    _

// kernel: _lambda_.34
$region0: #{_lambda_.34}
  #allocation0 [shape = 'u32[]', space=smem, size = 0x4, offset = 0x4, fixed_abs, tag = 'smem constant byte address 0x4 - core index']
  #allocation1 [shape = 'u32[72,128]{1,0:T(1,128)}', space=vmem, size = 0x9000, scoped, tag = 'internal scratch']
  #allocation2 [shape = 'f32[2,32]{1,0:T(2,128)}', space=vmem, size = 0x400, scoped, tag = 'scratch operand']
  %s0 = inlined_call_operand.vmem [shape: bf16[2,32], index: 0, kind: input, shape index: {}]
  %s1 = inlined_call_operand.vmem [shape: bf16[32,32], index: 1, kind: input, shape index: {}]
  %s2 = inlined_call_operand.vmem [shape: f32[1,32], index: 2, kind: input, shape index: {}]
  %s3 = inlined_call_operand.vmem [shape: bf16[2,32], index: 3, kind: output, shape index: {}]
  %s4 = sld [smem:[#allocation0]]
  $region30: #{_lambda_.34} parent=0
    _
  %s6 = ssub.s32 1, %s4
  %s7 = scalar_select 0, %s6, %s4
  // Predicated region
  $region2: #{_lambda_.34} parent=0 // pred_check
    _
  $region3: #{_lambda_.34} parent=0 // pred_check_branch
    %9 = sbr.rel (0) target = $region5
  $region4: #{_lambda_.34} parent=0 // pred_region
    _
  $region5: #{_lambda_.34} parent=0 // pred_fallthru
    _
  // Predicated region
  $region6: #{_lambda_.34} parent=0 // pred_check
    _
  $region7: #{_lambda_.34} parent=0 // pred_check_branch
    %11 = sbr.rel (0) target = $region9
  $region8: #{_lambda_.34} parent=0 // pred_region
    _
  $region9: #{_lambda_.34} parent=0 // pred_fallthru
    _
  // Predicated region
  $region10: #{_lambda_.34} parent=0 // pred_check
    _
  $region11: #{_lambda_.34} parent=0 // pred_check_branch
    %13 = sbr.rel (0) target = $region13
  $region12: #{_lambda_.34} parent=0 // pred_region
    _
  $region13: #{_lambda_.34} parent=0 // pred_fallthru
    _
  %p15 = scmp.eq.s32.totalorder 0, 0
  // Predicated region
  $region14: #{_lambda_.34} parent=0 // pred_check
    %p16 = pneg %p15
  $region15: #{_lambda_.34} parent=0 // pred_check_branch
    %18 = sbr.rel (%p16) target = $region17
  $region16: #{_lambda_.34} parent=0 // pred_region
    %vm19 = vcmask 254976
    %20 = vst.msk [vmem:[#allocation2] sm:$0x3] %vm19, 0.0
  $region17: #{_lambda_.34} parent=0 // pred_fallthru
    _
  %v21 = vld [vmem:[#allocation2] sm:$0x3]
  %v22 = vld [vmem:[%s0] sm:$0x1]
  %v23 = vld [vmem:[%s1] sm:$0xf]
  %v24 = vld [vmem:[%s1 + $0x4] sm:$0xf]
  %v25 = vld [vmem:[%s1 + $0x8] sm:$0xf]
  %v26 = vld [vmem:[%s1 + $0xc] sm:$0xf]
  %v31 = vunpack.c.l.b16 %v23
  %v32 = vunpack.c.l.b16 %v24
  %v33 = vunpack.c.l.b16 %v25
  %v34 = vunpack.c.l.b16 %v26
  %v35 = vpack.c.b16 %v32, %v31
  %v36 = vpack.c.b16 %v34, %v33
  %vm39 = vcmask 261120
  %v41 = vsel %vm39, %v22, 0
  %43 = vmatpush.bf16.msra.mxu0 0
  %44 = vmatpush.bf16.msra.mxu0 0
  %45 = vmatpush.bf16.msra.mxu0 0
  %46 = vmatpush.bf16.msra.mxu0 0
  %47 = vmatpush.bf16.msra.mxu0 0
  %48 = vmatpush.bf16.msra.mxu0 0
  %49 = vmatpush.bf16.msra.mxu0 %v36
  %50 = vmatpush.bf16.msra.mxu0 %v35
  %51 = vmatmul.bf16.gmra.mxu0 %v41
  %v52 = vpop.f32.mrf.mxu0
  %v53 = vadd.f32 0.0, %v52
  %v54 = vpop.f32.mrf.mxu0
  %55 = vdwg.mxu0
  %v56 = vadd.f32 %v21, %v53
  %vm57 = vcmask 254976
  %58 = vst.msk [vmem:[#allocation2] sm:$0x3] %vm57, %v56
  // Predicated region
  $region18: #{_lambda_.34} parent=0 // pred_check
    %p59 = pneg %p15
  $region19: #{_lambda_.34} parent=0 // pred_check_branch
    %61 = sbr.rel (%p59) target = $region21
  $region20: #{_lambda_.34} parent=0 // pred_region
    %v62 = vld [vmem:[#allocation2] sm:$0x3]
    %v63 = vld [vmem:[%s2] sm:$0x1]
    %v65 = vperm.slane %v63, 0
    %v67 = vadd.f32 %v62, %v65
    %v68 = vtanh.pop %v67
    %v69 = vpack.c.bf16 %v68, %v68
    %vm70 = vcmask 253952
    %71 = vst.msk [vmem:[%s3] sm:$0x1] %vm70, %v69
  $region21: #{_lambda_.34} parent=0 // pred_fallthru
    _
  // Predicated region
  $region22: #{_lambda_.34} parent=0 // pred_check
    _
  $region23: #{_lambda_.34} parent=0 // pred_check_branch
    %73 = sbr.rel (0) target = $region25
  $region24: #{_lambda_.34} parent=0 // pred_region
    _
  $region25: #{_lambda_.34} parent=0 // pred_fallthru
    _
  // Predicated region
  $region26: #{_lambda_.34} parent=0 // pred_check
    _
  $region27: #{_lambda_.34} parent=0 // pred_check_branch
    %75 = sbr.rel (0) target = $region29
  $region28: #{_lambda_.34} parent=0 // pred_region
    _
  $region29: #{_lambda_.34} parent=0 // pred_fallthru
    _

// kernel: _lambda_.39
$region0: #{_lambda_.39}
  #allocation0 [shape = 'u32[]', space=smem, size = 0x4, offset = 0x4, fixed_abs, tag = 'smem constant byte address 0x4 - core index']
  #allocation1 [shape = 'u32[72,128]{1,0:T(1,128)}', space=vmem, size = 0x9000, scoped, tag = 'internal scratch']
  #allocation2 [shape = 'f32[2,2]{1,0:T(2,128)}', space=vmem, size = 0x400, scoped, tag = 'scratch operand']
  %s0 = inlined_call_operand.vmem [shape: bf16[2,32], index: 0, kind: input, shape index: {}]
  %s1 = inlined_call_operand.vmem [shape: bf16[32,2], index: 1, kind: input, shape index: {}]
  %s2 = inlined_call_operand.vmem [shape: f32[1,2], index: 2, kind: input, shape index: {}]
  %s3 = inlined_call_operand.hbm [shape: f32[2,2], index: 3, kind: output, shape index: {}]
  %s4 = sld [smem:[#allocation0]]
  $region30: #{_lambda_.39} parent=0
    _
  %s6 = ssub.s32 1, %s4
  %s7 = scalar_select 0, %s6, %s4
  $region1: #{_lambda_.39} parent=0
    #allocation3 [shape = 'u8[1024]{0}', space=vmem, size = 0x400, scoped, tag = 'output window, operand 0, single buffered']
    #allocation4 [shape = 's32[1]{0}', space=sflag, size = 0x4, scoped, tag = 'scoped memory for _lambda_.39']
    %8 = vsyncpa [#allocation4], 0
    // Predicated region
    $region2: #{_lambda_.39} parent=1 // pred_check
      _
    $region3: #{_lambda_.39} parent=1 // pred_check_branch
      %10 = sbr.rel (0) target = $region5
    $region4: #{_lambda_.39} parent=1 // pred_region
      _
    $region5: #{_lambda_.39} parent=1 // pred_fallthru
      _
    // Predicated region
    $region6: #{_lambda_.39} parent=1 // pred_check
      _
    $region7: #{_lambda_.39} parent=1 // pred_check_branch
      %12 = sbr.rel (0) target = $region9
    $region8: #{_lambda_.39} parent=1 // pred_region
      _
    $region9: #{_lambda_.39} parent=1 // pred_fallthru
      _
    // Predicated region
    $region10: #{_lambda_.39} parent=1 // pred_check
      _
    $region11: #{_lambda_.39} parent=1 // pred_check_branch
      %14 = sbr.rel (0) target = $region13
    $region12: #{_lambda_.39} parent=1 // pred_region
      _
    $region13: #{_lambda_.39} parent=1 // pred_fallthru
      _
    %p16 = scmp.eq.s32.totalorder 0, 0
    // Predicated region
    $region14: #{_lambda_.39} parent=1 // pred_check
      %p17 = pneg %p16
    $region15: #{_lambda_.39} parent=1 // pred_check_branch
      %19 = sbr.rel (%p17) target = $region17
    $region16: #{_lambda_.39} parent=1 // pred_region
      %vm20 = vcmask 9216
      %21 = vst.msk [vmem:[#allocation2] sm:$0x3] %vm20, 0.0
    $region17: #{_lambda_.39} parent=1 // pred_fallthru
      _
    %v22 = vld [vmem:[#allocation2] sm:$0x3]
    %v23 = vld [vmem:[%s0] sm:$0x1]
    %v24 = vld [vmem:[%s1] sm:$0xf]
    %v25 = vld [vmem:[%s1 + $0x4] sm:$0xf]
    %v26 = vld [vmem:[%s1 + $0x8] sm:$0xf]
    %v27 = vld [vmem:[%s1 + $0xc] sm:$0xf]
    %v32 = vunpack.c.l.b16 %v24
    %v33 = vunpack.c.l.b16 %v25
    %v34 = vunpack.c.l.b16 %v26
    %v35 = vunpack.c.l.b16 %v27
    %v36 = vpack.c.b16 %v33, %v32
    %v37 = vpack.c.b16 %v35, %v34
    %vm40 = vcmask 261120
    %v42 = vsel %vm40, %v23, 0
    %44 = vmatpush.bf16.msra.mxu0 0
    %45 = vmatpush.bf16.msra.mxu0 0
    %46 = vmatpush.bf16.msra.mxu0 0
    %47 = vmatpush.bf16.msra.mxu0 0
    %48 = vmatpush.bf16.msra.mxu0 0
    %49 = vmatpush.bf16.msra.mxu0 0
    %50 = vmatpush.bf16.msra.mxu0 %v37
    %51 = vmatpush.bf16.msra.mxu0 %v36
    %52 = vmatmul.bf16.gmra.mxu0 %v42
    %v53 = vpop.f32.mrf.mxu0
    %v54 = vadd.f32 0.0, %v53
    %v55 = vpop.f32.mrf.mxu0
    %56 = vdwg.mxu0
    %v57 = vadd.f32 %v22, %v54
    %vm58 = vcmask 9216
    %59 = vst.msk [vmem:[#allocation2] sm:$0x3] %vm58, %v57
    // Predicated region
    $region18: #{_lambda_.39} parent=1 // pred_check
      %p60 = pneg %p16
    $region19: #{_lambda_.39} parent=1 // pred_check_branch
      %62 = sbr.rel (%p60) target = $region21
    $region20: #{_lambda_.39} parent=1 // pred_region
      %v63 = vld [vmem:[#allocation2] sm:$0x3]
      %v64 = vld [vmem:[%s2] sm:$0x1]
      %v66 = vperm.slane %v64, 0
      %v68 = vadd.f32 %v63, %v66
      %69 = vst.msk [vmem:[#allocation3] sm:$0x3] %vm58, %v68
    $region21: #{_lambda_.39} parent=1 // pred_fallthru
      _
    // Predicated region
    $region22: #{_lambda_.39} parent=1 // pred_check
      _
    $region23: #{_lambda_.39} parent=1 // pred_check_branch
      %71 = sbr.rel (0) target = $region25
    $region24: #{_lambda_.39} parent=1 // pred_region
      %73 = vsyncadd [#allocation4], 0
      %s75 = sshll.u32 [#allocation3], 4
      %s76 = int_to_ptr.vmem [resolvable:$true] %s75
      %s77 = sshll.u32 %s3, 4
      %s78 = int_to_ptr.hbm [resolvable:$true] %s77
      %80 = dma.vmem_to_hbm [thread:$0]  %s76, 32, %s78, [#allocation4]
    $region25: #{_lambda_.39} parent=1 // pred_fallthru
      _
    // Predicated region
    $region26: #{_lambda_.39} parent=1 // pred_check
      _
    $region27: #{_lambda_.39} parent=1 // pred_check_branch
      %82 = sbr.rel (0) target = $region29
    $region28: #{_lambda_.39} parent=1 // pred_region
      %84 = dma.done [#allocation4], 32
    $region29: #{_lambda_.39} parent=1 // pred_fallthru
      _
    %85 = vsyncpa [#allocation4], 1

</llo_original>
